<compile_context>
chip_gen: v5e
topology: v5e:2x2
jax: 0.10.0
libtpu: 0.0.40
codegen_flags: <defaults>
</compile_context>

<pallas_src>
import functools

import jax
import jax.numpy as jnp
from jax.experimental import pallas as pl
from jax.experimental.pallas import tpu as pltpu


def _conv_out(size, k, s):
    return (size - k) // s + 1


def _im2col_slab(src_ref, w_in, oh, ow, kh, kw, stride):
    """Build an (oh*ow, kh*kw*C) im2col slab from a row-major (h_in*w_in, C) ref.

    Uses only (strided) pl.ds sublane reads and jnp.concatenate: no scalar ref
    indexing, no value-level strided slicing, no dim-merging reshapes.
    Row ordering of the slab is output-row-major: m = r*ow + c.
    Column ordering is (i, j, cin), matching the flattened weight layout.
    """
    tap_blocks = []
    for i in range(kh):
        for j in range(kw):
            rows = []
            for r in range(oh):
                start = (stride * r + i) * w_in + j
                if stride == 1:
                    piece = src_ref[pl.ds(start, ow), :]
                else:
                    piece = src_ref[pl.ds(start, ow, stride), :]   # strided sublane read
                rows.append(piece)                                 # (ow, C)
            block = rows[0] if len(rows) == 1 else jnp.concatenate(rows, axis=0)
            tap_blocks.append(block)                               # (oh*ow, C)
    return jnp.concatenate(tap_blocks, axis=-1)                    # (oh*ow, kh*kw*C)


def _pnet_kernel(x_ref, w1_ref, b1_ref, w2_ref, b2_ref, w3_ref, b3_ref,
                 w4_ref, b4_ref, wh_ref, bh_ref, o_ref,
                 a1_ref, a2_ref, a3_ref, *, geom, n_sig):
    (W0, H1, W1, H2, W2, H3, W3, H4, W4) = geom

    def conv_layer(src_ref, dst_ref, w_ref, b_ref, w_in, oh, ow, kh, kw, stride):
        slab = _im2col_slab(src_ref, w_in, oh, ow, kh, kw, stride)
        y = jnp.dot(slab.astype(jnp.bfloat16), w_ref[...],
                    preferred_element_type=jnp.float32)            # (oh*ow, Cout) f32
        dst_ref[...] = jnp.maximum(y + b_ref[...], 0.0)

    # basenet: three stride-2 3x3 convs, intermediates stay in VMEM scratch.
    conv_layer(x_ref, a1_ref, w1_ref, b1_ref, W0, H1, W1, 3, 3, 2)   # 3  -> 16
    conv_layer(a1_ref, a2_ref, w2_ref, b2_ref, W1, H2, W2, 3, 3, 2)  # 16 -> 32
    conv_layer(a2_ref, a3_ref, w3_ref, b3_ref, W2, H3, W3, 3, 3, 2)  # 32 -> 64

    # conv4 (2x2, stride 1, 64 -> 128) + ReLU + the three fused 1x1 heads.
    # The 128-channel feature map never leaves registers/VMEM.
    slab4 = _im2col_slab(a3_ref, W3, H4, W4, 2, 2, 1)                # (H4*W4, 256)
    feat = jnp.maximum(
        jnp.dot(slab4.astype(jnp.bfloat16), w4_ref[...],
                preferred_element_type=jnp.float32) + b4_ref[...], 0.0)
    heads = jnp.dot(feat.astype(jnp.bfloat16), wh_ref[...],
                    preferred_element_type=jnp.float32) + bh_ref[...]   # (H4*W4, 6)
    col = jax.lax.broadcasted_iota(jnp.int32, heads.shape, 1)
    sig = 1.0 / (1.0 + jnp.exp(-heads))                              # exp lands on EUP
    o_ref[...] = jnp.where(col < n_sig, sig, heads).astype(o_ref.dtype)


def pnet_pallas(x_nchw, params):
    N, C, H, W = x_nchw.shape
    assert C == 3
    H1, W1 = _conv_out(H, 3, 2), _conv_out(W, 3, 2)
    H2, W2 = _conv_out(H1, 3, 2), _conv_out(W1, 3, 2)
    H3, W3 = _conv_out(H2, 3, 2), _conv_out(W2, 3, 2)
    H4, W4 = _conv_out(H3, 2, 1), _conv_out(W3, 2, 1)
    geom = (W, H1, W1, H2, W2, H3, W3, H4, W4)

    # Row-major (H*W, C) layout per image so the kernel's flattened-row index
    # math (strided pl.ds reads) applies uniformly to input and scratch.
    x2d = jnp.transpose(x_nchw, (0, 2, 3, 1)).reshape(N, H * W, 3).astype(jnp.float32)

    kernel = functools.partial(_pnet_kernel, geom=geom, n_sig=2)

    flops = 2 * N * (H1 * W1 * 27 * 16 + H2 * W2 * 144 * 32
                     + H3 * W3 * 288 * 64 + H4 * W4 * (256 * 128 + 128 * 6))
    bytes_accessed = (4 * (N * H * W * 3 + N * H4 * W4 * 6 + 16 + 32 + 64 + 128 + 6)
                      + 2 * (27 * 16 + 144 * 32 + 288 * 64 + 256 * 128 + 128 * 6))

    heads = pl.pallas_call(
        kernel,
        out_shape=jax.ShapeDtypeStruct((N, H4 * W4, 6), jnp.float32),
        grid=(N,),
        in_specs=[
            pl.BlockSpec((None, H * W, 3), lambda n: (n, 0, 0)),   # image
            pl.BlockSpec((27, 16), lambda n: (0, 0)),              # w1 (fetched once)
            pl.BlockSpec((1, 16), lambda n: (0, 0)),               # b1
            pl.BlockSpec((144, 32), lambda n: (0, 0)),             # w2
            pl.BlockSpec((1, 32), lambda n: (0, 0)),               # b2
            pl.BlockSpec((288, 64), lambda n: (0, 0)),             # w3
            pl.BlockSpec((1, 64), lambda n: (0, 0)),               # b3
            pl.BlockSpec((256, 128), lambda n: (0, 0)),            # w4
            pl.BlockSpec((1, 128), lambda n: (0, 0)),              # b4
            pl.BlockSpec((128, 6), lambda n: (0, 0)),              # fc5|fc6|bbox weights
            pl.BlockSpec((1, 6), lambda n: (0, 0)),                # head biases
        ],
        out_specs=pl.BlockSpec((None, H4 * W4, 6), lambda n: (n, 0, 0)),
        scratch_shapes=[
            pltpu.VMEM((H1 * W1, 16), jnp.float32),                # conv1 out
            pltpu.VMEM((H2 * W2, 32), jnp.float32),                # conv2 out
            pltpu.VMEM((H3 * W3, 64), jnp.float32),                # conv3 out
        ],
        compiler_params=pltpu.CompilerParams(
            dimension_semantics=("parallel",),
            vmem_limit_bytes=32 * 1024 * 1024),
        cost_estimate=pl.CostEstimate(flops=int(flops),
                                      transcendentals=int(N * H4 * W4 * 6),
                                      bytes_accessed=int(bytes_accessed)),
    )(x2d, params["w1"], params["b1"], params["w2"], params["b2"],
      params["w3"], params["b3"], params["w4"], params["b4"],
      params["w_heads"], params["b_heads"])

    heads = heads.reshape(N, H4, W4, 6)
    fc5 = jnp.transpose(heads[..., 0:1], (0, 3, 1, 2))              # (N, 1, H4, W4)
    fc6 = jnp.transpose(heads[..., 1:2], (0, 3, 1, 2))              # (N, 1, H4, W4)
    bbox_reg = jnp.transpose(heads[..., 2:6], (0, 3, 1, 2))         # (N, 4, H4, W4)
    return fc5, fc6, bbox_reg


pnet_forward = jax.jit(pnet_pallas)


# ----------------------------------------------------------------------------
# Parameter init (deterministic, PyTorch-default-like uniform bounds).
# Weights stored directly in kernel layout: rows ordered (i, j, cin), i.e.
# (kh*kw*cin, cout) bf16; biases as (1, cout) f32.  Head weights pre-concatenated.
# ----------------------------------------------------------------------------
def _init_conv_flat(key, cout, cin, kh, kw):
    fan_in = cin * kh * kw
    bound = 1.0 / (fan_in ** 0.5)
    k1, k2 = jax.random.split(key)
    w = jax.random.uniform(k1, (cout, cin, kh, kw), jnp.float32, -bound, bound)
    b = jax.random.uniform(k2, (cout,), jnp.float32, -bound, bound)
    w_flat = jnp.transpose(w, (2, 3, 1, 0)).reshape(kh * kw * cin, cout)
    return w_flat.astype(jnp.bfloat16), b.reshape(1, cout)


def init_params(key):
    ks = jax.random.split(key, 7)
    p = {}
    p["w1"], p["b1"] = _init_conv_flat(ks[0], 16, 3, 3, 3)
    p["w2"], p["b2"] = _init_conv_flat(ks[1], 32, 16, 3, 3)
    p["w3"], p["b3"] = _init_conv_flat(ks[2], 64, 32, 3, 3)
    p["w4"], p["b4"] = _init_conv_flat(ks[3], 128, 64, 2, 2)
    w5, b5 = _init_conv_flat(ks[4], 1, 128, 1, 1)     # fc5_1
    w6, b6 = _init_conv_flat(ks[5], 1, 128, 1, 1)     # fc6_1
    wb, bb = _init_conv_flat(ks[6], 4, 128, 1, 1)     # bbox_reg_1
    p["w_heads"] = jnp.concatenate([w5, w6, wb], axis=1)   # (128, 6) bf16
    p["b_heads"] = jnp.concatenate([b5, b6, bb], axis=1)   # (1, 6)   f32
    return p


# ----------------------------------------------------------------------------
# Pure-JAX reference (f32) for correctness checking (same bf16-quantized
# weights; only in-kernel activation rounding differs).
# ----------------------------------------------------------------------------
def pnet_reference(x_nchw, params):
    x = jnp.transpose(x_nchw, (0, 2, 3, 1)).astype(jnp.float32)

    def conv(h, w_flat, b, cin, kh, kw, stride):
        w = w_flat.astype(jnp.float32).reshape(kh, kw, cin, -1)    # HWIO
        y = jax.lax.conv_general_dilated(
            h, w, window_strides=(stride, stride), padding="VALID",
            dimension_numbers=("NHWC", "HWIO", "NHWC"),
            precision=jax.lax.Precision.HIGHEST)
        return y + b.reshape(1, 1, 1, -1)

    h = jax.nn.relu(conv(x, params["w1"], params["b1"], 3, 3, 3, 2))
    h = jax.nn.relu(conv(h, params["w2"], params["b2"], 16, 3, 3, 2))
    h = jax.nn.relu(conv(h, params["w3"], params["b3"], 32, 3, 3, 2))
    h = jax.nn.relu(conv(h, params["w4"], params["b4"], 64, 2, 2, 1))
    heads = jnp.einsum("nhwc,cd->nhwd", h, params["w_heads"].astype(jnp.float32),
                       precision=jax.lax.Precision.HIGHEST) + params["b_heads"].reshape(1, 1, 1, -1)
    fc5 = jax.nn.sigmoid(heads[..., 0:1])
    fc6 = jax.nn.sigmoid(heads[..., 1:2])
    bbox = heads[..., 2:6]
    return (jnp.transpose(fc5, (0, 3, 1, 2)),
            jnp.transpose(fc6, (0, 3, 1, 2)),
            jnp.transpose(bbox, (0, 3, 1, 2)))


if __name__ == "__main__":
    key = jax.random.PRNGKey(0)
    k_x, k_p = jax.random.split(key)

    # 24x24 input -> 1x1 spatial output, the canonical Pnet geometry.
    x = jax.random.normal(k_x, (2, 3, 24, 24), dtype=jnp.float32)
    params = init_params(k_p)

    fc5, fc6, bbox_reg = pnet_forward(x, params)
    jax.block_until_ready((fc5, fc6, bbox_reg))

    assert fc5.shape == (2, 1, 1, 1)
    assert fc6.shape == (2, 1, 1, 1)
    assert bbox_reg.shape == (2, 4, 1, 1)
    assert bool(jnp.all((fc5 >= 0.0) & (fc5 <= 1.0)))
    assert bool(jnp.all((fc6 >= 0.0) & (fc6 <= 1.0)))
    assert bool(jnp.all(jnp.isfinite(bbox_reg)))

    # Numerical check against a pure-JAX f32 reference (only difference is
    # bf16 rounding of the matmul operands inside the Pallas kernel).
    ref_fc5, ref_fc6, ref_bbox = pnet_reference(x, params)
    for got, want in zip((fc5, fc6, bbox_reg), (ref_fc5, ref_fc6, ref_bbox)):
        err = float(jnp.max(jnp.abs(got - want)))
        assert jnp.allclose(got, want, atol=3e-2, rtol=3e-2), f"max abs err {err}"

    print("KERNEL_OK")
</pallas_src>

<mosaic_0001>
module attributes {stable_mosaic.version = 11 : i64} {
  func.func @_pnet_kernel(%arg0: i32, %arg1: memref<1x576x3xf32, #tpu.memory_space<vmem>>, %arg2: memref<27x16xbf16, #tpu.memory_space<vmem>>, %arg3: memref<1x16xf32, #tpu.memory_space<vmem>>, %arg4: memref<144x32xbf16, #tpu.memory_space<vmem>>, %arg5: memref<1x32xf32, #tpu.memory_space<vmem>>, %arg6: memref<288x64xbf16, #tpu.memory_space<vmem>>, %arg7: memref<1x64xf32, #tpu.memory_space<vmem>>, %arg8: memref<256x128xbf16, #tpu.memory_space<vmem>>, %arg9: memref<1x128xf32, #tpu.memory_space<vmem>>, %arg10: memref<128x6xbf16, #tpu.memory_space<vmem>>, %arg11: memref<1x6xf32, #tpu.memory_space<vmem>>, %arg12: memref<1x1x6xf32, #tpu.memory_space<vmem>>, %arg13: memref<121x16xf32, #tpu.memory_space<vmem>>, %arg14: memref<25x32xf32, #tpu.memory_space<vmem>>, %arg15: memref<4x64xf32, #tpu.memory_space<vmem>>) attributes {dimension_semantics = [#tpu.dimension_semantics<parallel>], iteration_bounds = array<i64: 2>, scalar_prefetch = 0 : i64, scratch_operands = 3 : i64, tpu.core_type = #tpu.core_type<tc>, window_params = [{transform_indices = @transform_0, window_bounds = array<i64: 1, 576, 3>}, {pipeline_mode = #tpu.pipeline_mode<synchronous>, transform_indices = @transform_1, window_bounds = array<i64: 27, 16>}, {pipeline_mode = #tpu.pipeline_mode<synchronous>, transform_indices = @transform_2, window_bounds = array<i64: 1, 16>}, {pipeline_mode = #tpu.pipeline_mode<synchronous>, transform_indices = @transform_3, window_bounds = array<i64: 144, 32>}, {pipeline_mode = #tpu.pipeline_mode<synchronous>, transform_indices = @transform_4, window_bounds = array<i64: 1, 32>}, {pipeline_mode = #tpu.pipeline_mode<synchronous>, transform_indices = @transform_5, window_bounds = array<i64: 288, 64>}, {pipeline_mode = #tpu.pipeline_mode<synchronous>, transform_indices = @transform_6, window_bounds = array<i64: 1, 64>}, {pipeline_mode = #tpu.pipeline_mode<synchronous>, transform_indices = @transform_7, window_bounds = array<i64: 256, 128>}, {pipeline_mode = #tpu.pipeline_mode<synchronous>, transform_indices = @transform_8, window_bounds = array<i64: 1, 128>}, {pipeline_mode = #tpu.pipeline_mode<synchronous>, transform_indices = @transform_9, window_bounds = array<i64: 128, 6>}, {pipeline_mode = #tpu.pipeline_mode<synchronous>, transform_indices = @transform_10, window_bounds = array<i64: 1, 6>}, {transform_indices = @transform_11, window_bounds = array<i64: 1, 1, 6>}]} {
    %c0 = arith.constant 0 : index
    %c0_0 = arith.constant 0 : index
    %c0_1 = arith.constant 0 : index
    %0 = tpu.strided_load %arg1[%c0, %c0_0, %c0_1] {strides = array<i32: 1, 2, 1>} : memref<1x576x3xf32, #tpu.memory_space<vmem>>, vector<1x11x3xf32>
    %1 = vector.shape_cast %0 : vector<1x11x3xf32> to vector<11x3xf32>
    %c0_2 = arith.constant 0 : index
    %c48 = arith.constant 48 : index
    %c0_3 = arith.constant 0 : index
    %2 = tpu.strided_load %arg1[%c0_2, %c48, %c0_3] {strides = array<i32: 1, 2, 1>} : memref<1x576x3xf32, #tpu.memory_space<vmem>>, vector<1x11x3xf32>
    %3 = vector.shape_cast %2 : vector<1x11x3xf32> to vector<11x3xf32>
    %c0_4 = arith.constant 0 : index
    %c96 = arith.constant 96 : index
    %c0_5 = arith.constant 0 : index
    %4 = tpu.strided_load %arg1[%c0_4, %c96, %c0_5] {strides = array<i32: 1, 2, 1>} : memref<1x576x3xf32, #tpu.memory_space<vmem>>, vector<1x11x3xf32>
    %5 = vector.shape_cast %4 : vector<1x11x3xf32> to vector<11x3xf32>
    %c0_6 = arith.constant 0 : index
    %c144 = arith.constant 144 : index
    %c0_7 = arith.constant 0 : index
    %6 = tpu.strided_load %arg1[%c0_6, %c144, %c0_7] {strides = array<i32: 1, 2, 1>} : memref<1x576x3xf32, #tpu.memory_space<vmem>>, vector<1x11x3xf32>
    %7 = vector.shape_cast %6 : vector<1x11x3xf32> to vector<11x3xf32>
    %c0_8 = arith.constant 0 : index
    %c192 = arith.constant 192 : index
    %c0_9 = arith.constant 0 : index
    %8 = tpu.strided_load %arg1[%c0_8, %c192, %c0_9] {strides = array<i32: 1, 2, 1>} : memref<1x576x3xf32, #tpu.memory_space<vmem>>, vector<1x11x3xf32>
    %9 = vector.shape_cast %8 : vector<1x11x3xf32> to vector<11x3xf32>
    %c0_10 = arith.constant 0 : index
    %c240 = arith.constant 240 : index
    %c0_11 = arith.constant 0 : index
    %10 = tpu.strided_load %arg1[%c0_10, %c240, %c0_11] {strides = array<i32: 1, 2, 1>} : memref<1x576x3xf32, #tpu.memory_space<vmem>>, vector<1x11x3xf32>
    %11 = vector.shape_cast %10 : vector<1x11x3xf32> to vector<11x3xf32>
    %c0_12 = arith.constant 0 : index
    %c288 = arith.constant 288 : index
    %c0_13 = arith.constant 0 : index
    %12 = tpu.strided_load %arg1[%c0_12, %c288, %c0_13] {strides = array<i32: 1, 2, 1>} : memref<1x576x3xf32, #tpu.memory_space<vmem>>, vector<1x11x3xf32>
    %13 = vector.shape_cast %12 : vector<1x11x3xf32> to vector<11x3xf32>
    %c0_14 = arith.constant 0 : index
    %c336 = arith.constant 336 : index
    %c0_15 = arith.constant 0 : index
    %14 = tpu.strided_load %arg1[%c0_14, %c336, %c0_15] {strides = array<i32: 1, 2, 1>} : memref<1x576x3xf32, #tpu.memory_space<vmem>>, vector<1x11x3xf32>
    %15 = vector.shape_cast %14 : vector<1x11x3xf32> to vector<11x3xf32>
    %c0_16 = arith.constant 0 : index
    %c384 = arith.constant 384 : index
    %c0_17 = arith.constant 0 : index
    %16 = tpu.strided_load %arg1[%c0_16, %c384, %c0_17] {strides = array<i32: 1, 2, 1>} : memref<1x576x3xf32, #tpu.memory_space<vmem>>, vector<1x11x3xf32>
    %17 = vector.shape_cast %16 : vector<1x11x3xf32> to vector<11x3xf32>
    %c0_18 = arith.constant 0 : index
    %c432 = arith.constant 432 : index
    %c0_19 = arith.constant 0 : index
    %18 = tpu.strided_load %arg1[%c0_18, %c432, %c0_19] {strides = array<i32: 1, 2, 1>} : memref<1x576x3xf32, #tpu.memory_space<vmem>>, vector<1x11x3xf32>
    %19 = vector.shape_cast %18 : vector<1x11x3xf32> to vector<11x3xf32>
    %c0_20 = arith.constant 0 : index
    %c480 = arith.constant 480 : index
    %c0_21 = arith.constant 0 : index
    %20 = tpu.strided_load %arg1[%c0_20, %c480, %c0_21] {strides = array<i32: 1, 2, 1>} : memref<1x576x3xf32, #tpu.memory_space<vmem>>, vector<1x11x3xf32>
    %21 = vector.shape_cast %20 : vector<1x11x3xf32> to vector<11x3xf32>
    %22 = tpu.concatenate %1, %3, %5, %7, %9, %11, %13, %15, %17, %19, %21 in 0 : vector<11x3xf32>, vector<11x3xf32>, vector<11x3xf32>, vector<11x3xf32>, vector<11x3xf32>, vector<11x3xf32>, vector<11x3xf32>, vector<11x3xf32>, vector<11x3xf32>, vector<11x3xf32>, vector<11x3xf32> -> vector<121x3xf32>
    %c0_22 = arith.constant 0 : index
    %c1 = arith.constant 1 : index
    %c0_23 = arith.constant 0 : index
    %23 = tpu.strided_load %arg1[%c0_22, %c1, %c0_23] {strides = array<i32: 1, 2, 1>} : memref<1x576x3xf32, #tpu.memory_space<vmem>>, vector<1x11x3xf32>
    %24 = vector.shape_cast %23 : vector<1x11x3xf32> to vector<11x3xf32>
    %c0_24 = arith.constant 0 : index
    %c49 = arith.constant 49 : index
    %c0_25 = arith.constant 0 : index
    %25 = tpu.strided_load %arg1[%c0_24, %c49, %c0_25] {strides = array<i32: 1, 2, 1>} : memref<1x576x3xf32, #tpu.memory_space<vmem>>, vector<1x11x3xf32>
    %26 = vector.shape_cast %25 : vector<1x11x3xf32> to vector<11x3xf32>
    %c0_26 = arith.constant 0 : index
    %c97 = arith.constant 97 : index
    %c0_27 = arith.constant 0 : index
    %27 = tpu.strided_load %arg1[%c0_26, %c97, %c0_27] {strides = array<i32: 1, 2, 1>} : memref<1x576x3xf32, #tpu.memory_space<vmem>>, vector<1x11x3xf32>
    %28 = vector.shape_cast %27 : vector<1x11x3xf32> to vector<11x3xf32>
    %c0_28 = arith.constant 0 : index
    %c145 = arith.constant 145 : index
    %c0_29 = arith.constant 0 : index
    %29 = tpu.strided_load %arg1[%c0_28, %c145, %c0_29] {strides = array<i32: 1, 2, 1>} : memref<1x576x3xf32, #tpu.memory_space<vmem>>, vector<1x11x3xf32>
    %30 = vector.shape_cast %29 : vector<1x11x3xf32> to vector<11x3xf32>
    %c0_30 = arith.constant 0 : index
    %c193 = arith.constant 193 : index
    %c0_31 = arith.constant 0 : index
    %31 = tpu.strided_load %arg1[%c0_30, %c193, %c0_31] {strides = array<i32: 1, 2, 1>} : memref<1x576x3xf32, #tpu.memory_space<vmem>>, vector<1x11x3xf32>
    %32 = vector.shape_cast %31 : vector<1x11x3xf32> to vector<11x3xf32>
    %c0_32 = arith.constant 0 : index
    %c241 = arith.constant 241 : index
    %c0_33 = arith.constant 0 : index
    %33 = tpu.strided_load %arg1[%c0_32, %c241, %c0_33] {strides = array<i32: 1, 2, 1>} : memref<1x576x3xf32, #tpu.memory_space<vmem>>, vector<1x11x3xf32>
    %34 = vector.shape_cast %33 : vector<1x11x3xf32> to vector<11x3xf32>
    %c0_34 = arith.constant 0 : index
    %c289 = arith.constant 289 : index
    %c0_35 = arith.constant 0 : index
    %35 = tpu.strided_load %arg1[%c0_34, %c289, %c0_35] {strides = array<i32: 1, 2, 1>} : memref<1x576x3xf32, #tpu.memory_space<vmem>>, vector<1x11x3xf32>
    %36 = vector.shape_cast %35 : vector<1x11x3xf32> to vector<11x3xf32>
    %c0_36 = arith.constant 0 : index
    %c337 = arith.constant 337 : index
    %c0_37 = arith.constant 0 : index
    %37 = tpu.strided_load %arg1[%c0_36, %c337, %c0_37] {strides = array<i32: 1, 2, 1>} : memref<1x576x3xf32, #tpu.memory_space<vmem>>, vector<1x11x3xf32>
    %38 = vector.shape_cast %37 : vector<1x11x3xf32> to vector<11x3xf32>
    %c0_38 = arith.constant 0 : index
    %c385 = arith.constant 385 : index
    %c0_39 = arith.constant 0 : index
    %39 = tpu.strided_load %arg1[%c0_38, %c385, %c0_39] {strides = array<i32: 1, 2, 1>} : memref<1x576x3xf32, #tpu.memory_space<vmem>>, vector<1x11x3xf32>
    %40 = vector.shape_cast %39 : vector<1x11x3xf32> to vector<11x3xf32>
    %c0_40 = arith.constant 0 : index
    %c433 = arith.constant 433 : index
    %c0_41 = arith.constant 0 : index
    %41 = tpu.strided_load %arg1[%c0_40, %c433, %c0_41] {strides = array<i32: 1, 2, 1>} : memref<1x576x3xf32, #tpu.memory_space<vmem>>, vector<1x11x3xf32>
    %42 = vector.shape_cast %41 : vector<1x11x3xf32> to vector<11x3xf32>
    %c0_42 = arith.constant 0 : index
    %c481 = arith.constant 481 : index
    %c0_43 = arith.constant 0 : index
    %43 = tpu.strided_load %arg1[%c0_42, %c481, %c0_43] {strides = array<i32: 1, 2, 1>} : memref<1x576x3xf32, #tpu.memory_space<vmem>>, vector<1x11x3xf32>
    %44 = vector.shape_cast %43 : vector<1x11x3xf32> to vector<11x3xf32>
    %45 = tpu.concatenate %24, %26, %28, %30, %32, %34, %36, %38, %40, %42, %44 in 0 : vector<11x3xf32>, vector<11x3xf32>, vector<11x3xf32>, vector<11x3xf32>, vector<11x3xf32>, vector<11x3xf32>, vector<11x3xf32>, vector<11x3xf32>, vector<11x3xf32>, vector<11x3xf32>, vector<11x3xf32> -> vector<121x3xf32>
    %c0_44 = arith.constant 0 : index
    %c2 = arith.constant 2 : index
    %c0_45 = arith.constant 0 : index
    %46 = tpu.strided_load %arg1[%c0_44, %c2, %c0_45] {strides = array<i32: 1, 2, 1>} : memref<1x576x3xf32, #tpu.memory_space<vmem>>, vector<1x11x3xf32>
    %47 = vector.shape_cast %46 : vector<1x11x3xf32> to vector<11x3xf32>
    %c0_46 = arith.constant 0 : index
    %c50 = arith.constant 50 : index
    %c0_47 = arith.constant 0 : index
    %48 = tpu.strided_load %arg1[%c0_46, %c50, %c0_47] {strides = array<i32: 1, 2, 1>} : memref<1x576x3xf32, #tpu.memory_space<vmem>>, vector<1x11x3xf32>
    %49 = vector.shape_cast %48 : vector<1x11x3xf32> to vector<11x3xf32>
    %c0_48 = arith.constant 0 : index
    %c98 = arith.constant 98 : index
    %c0_49 = arith.constant 0 : index
    %50 = tpu.strided_load %arg1[%c0_48, %c98, %c0_49] {strides = array<i32: 1, 2, 1>} : memref<1x576x3xf32, #tpu.memory_space<vmem>>, vector<1x11x3xf32>
    %51 = vector.shape_cast %50 : vector<1x11x3xf32> to vector<11x3xf32>
    %c0_50 = arith.constant 0 : index
    %c146 = arith.constant 146 : index
    %c0_51 = arith.constant 0 : index
    %52 = tpu.strided_load %arg1[%c0_50, %c146, %c0_51] {strides = array<i32: 1, 2, 1>} : memref<1x576x3xf32, #tpu.memory_space<vmem>>, vector<1x11x3xf32>
    %53 = vector.shape_cast %52 : vector<1x11x3xf32> to vector<11x3xf32>
    %c0_52 = arith.constant 0 : index
    %c194 = arith.constant 194 : index
    %c0_53 = arith.constant 0 : index
    %54 = tpu.strided_load %arg1[%c0_52, %c194, %c0_53] {strides = array<i32: 1, 2, 1>} : memref<1x576x3xf32, #tpu.memory_space<vmem>>, vector<1x11x3xf32>
    %55 = vector.shape_cast %54 : vector<1x11x3xf32> to vector<11x3xf32>
    %c0_54 = arith.constant 0 : index
    %c242 = arith.constant 242 : index
    %c0_55 = arith.constant 0 : index
    %56 = tpu.strided_load %arg1[%c0_54, %c242, %c0_55] {strides = array<i32: 1, 2, 1>} : memref<1x576x3xf32, #tpu.memory_space<vmem>>, vector<1x11x3xf32>
    %57 = vector.shape_cast %56 : vector<1x11x3xf32> to vector<11x3xf32>
    %c0_56 = arith.constant 0 : index
    %c290 = arith.constant 290 : index
    %c0_57 = arith.constant 0 : index
    %58 = tpu.strided_load %arg1[%c0_56, %c290, %c0_57] {strides = array<i32: 1, 2, 1>} : memref<1x576x3xf32, #tpu.memory_space<vmem>>, vector<1x11x3xf32>
    %59 = vector.shape_cast %58 : vector<1x11x3xf32> to vector<11x3xf32>
    %c0_58 = arith.constant 0 : index
    %c338 = arith.constant 338 : index
    %c0_59 = arith.constant 0 : index
    %60 = tpu.strided_load %arg1[%c0_58, %c338, %c0_59] {strides = array<i32: 1, 2, 1>} : memref<1x576x3xf32, #tpu.memory_space<vmem>>, vector<1x11x3xf32>
    %61 = vector.shape_cast %60 : vector<1x11x3xf32> to vector<11x3xf32>
    %c0_60 = arith.constant 0 : index
    %c386 = arith.constant 386 : index
    %c0_61 = arith.constant 0 : index
    %62 = tpu.strided_load %arg1[%c0_60, %c386, %c0_61] {strides = array<i32: 1, 2, 1>} : memref<1x576x3xf32, #tpu.memory_space<vmem>>, vector<1x11x3xf32>
    %63 = vector.shape_cast %62 : vector<1x11x3xf32> to vector<11x3xf32>
    %c0_62 = arith.constant 0 : index
    %c434 = arith.constant 434 : index
    %c0_63 = arith.constant 0 : index
    %64 = tpu.strided_load %arg1[%c0_62, %c434, %c0_63] {strides = array<i32: 1, 2, 1>} : memref<1x576x3xf32, #tpu.memory_space<vmem>>, vector<1x11x3xf32>
    %65 = vector.shape_cast %64 : vector<1x11x3xf32> to vector<11x3xf32>
    %c0_64 = arith.constant 0 : index
    %c482 = arith.constant 482 : index
    %c0_65 = arith.constant 0 : index
    %66 = tpu.strided_load %arg1[%c0_64, %c482, %c0_65] {strides = array<i32: 1, 2, 1>} : memref<1x576x3xf32, #tpu.memory_space<vmem>>, vector<1x11x3xf32>
    %67 = vector.shape_cast %66 : vector<1x11x3xf32> to vector<11x3xf32>
    %68 = tpu.concatenate %47, %49, %51, %53, %55, %57, %59, %61, %63, %65, %67 in 0 : vector<11x3xf32>, vector<11x3xf32>, vector<11x3xf32>, vector<11x3xf32>, vector<11x3xf32>, vector<11x3xf32>, vector<11x3xf32>, vector<11x3xf32>, vector<11x3xf32>, vector<11x3xf32>, vector<11x3xf32> -> vector<121x3xf32>
    %c0_66 = arith.constant 0 : index
    %c24 = arith.constant 24 : index
    %c0_67 = arith.constant 0 : index
    %69 = tpu.strided_load %arg1[%c0_66, %c24, %c0_67] {strides = array<i32: 1, 2, 1>} : memref<1x576x3xf32, #tpu.memory_space<vmem>>, vector<1x11x3xf32>
    %70 = vector.shape_cast %69 : vector<1x11x3xf32> to vector<11x3xf32>
    %c0_68 = arith.constant 0 : index
    %c72 = arith.constant 72 : index
    %c0_69 = arith.constant 0 : index
    %71 = tpu.strided_load %arg1[%c0_68, %c72, %c0_69] {strides = array<i32: 1, 2, 1>} : memref<1x576x3xf32, #tpu.memory_space<vmem>>, vector<1x11x3xf32>
    %72 = vector.shape_cast %71 : vector<1x11x3xf32> to vector<11x3xf32>
    %c0_70 = arith.constant 0 : index
    %c120 = arith.constant 120 : index
    %c0_71 = arith.constant 0 : index
    %73 = tpu.strided_load %arg1[%c0_70, %c120, %c0_71] {strides = array<i32: 1, 2, 1>} : memref<1x576x3xf32, #tpu.memory_space<vmem>>, vector<1x11x3xf32>
    %74 = vector.shape_cast %73 : vector<1x11x3xf32> to vector<11x3xf32>
    %c0_72 = arith.constant 0 : index
    %c168 = arith.constant 168 : index
    %c0_73 = arith.constant 0 : index
    %75 = tpu.strided_load %arg1[%c0_72, %c168, %c0_73] {strides = array<i32: 1, 2, 1>} : memref<1x576x3xf32, #tpu.memory_space<vmem>>, vector<1x11x3xf32>
    %76 = vector.shape_cast %75 : vector<1x11x3xf32> to vector<11x3xf32>
    %c0_74 = arith.constant 0 : index
    %c216 = arith.constant 216 : index
    %c0_75 = arith.constant 0 : index
    %77 = tpu.strided_load %arg1[%c0_74, %c216, %c0_75] {strides = array<i32: 1, 2, 1>} : memref<1x576x3xf32, #tpu.memory_space<vmem>>, vector<1x11x3xf32>
    %78 = vector.shape_cast %77 : vector<1x11x3xf32> to vector<11x3xf32>
    %c0_76 = arith.constant 0 : index
    %c264 = arith.constant 264 : index
    %c0_77 = arith.constant 0 : index
    %79 = tpu.strided_load %arg1[%c0_76, %c264, %c0_77] {strides = array<i32: 1, 2, 1>} : memref<1x576x3xf32, #tpu.memory_space<vmem>>, vector<1x11x3xf32>
    %80 = vector.shape_cast %79 : vector<1x11x3xf32> to vector<11x3xf32>
    %c0_78 = arith.constant 0 : index
    %c312 = arith.constant 312 : index
    %c0_79 = arith.constant 0 : index
    %81 = tpu.strided_load %arg1[%c0_78, %c312, %c0_79] {strides = array<i32: 1, 2, 1>} : memref<1x576x3xf32, #tpu.memory_space<vmem>>, vector<1x11x3xf32>
    %82 = vector.shape_cast %81 : vector<1x11x3xf32> to vector<11x3xf32>
    %c0_80 = arith.constant 0 : index
    %c360 = arith.constant 360 : index
    %c0_81 = arith.constant 0 : index
    %83 = tpu.strided_load %arg1[%c0_80, %c360, %c0_81] {strides = array<i32: 1, 2, 1>} : memref<1x576x3xf32, #tpu.memory_space<vmem>>, vector<1x11x3xf32>
    %84 = vector.shape_cast %83 : vector<1x11x3xf32> to vector<11x3xf32>
    %c0_82 = arith.constant 0 : index
    %c408 = arith.constant 408 : index
    %c0_83 = arith.constant 0 : index
    %85 = tpu.strided_load %arg1[%c0_82, %c408, %c0_83] {strides = array<i32: 1, 2, 1>} : memref<1x576x3xf32, #tpu.memory_space<vmem>>, vector<1x11x3xf32>
    %86 = vector.shape_cast %85 : vector<1x11x3xf32> to vector<11x3xf32>
    %c0_84 = arith.constant 0 : index
    %c456 = arith.constant 456 : index
    %c0_85 = arith.constant 0 : index
    %87 = tpu.strided_load %arg1[%c0_84, %c456, %c0_85] {strides = array<i32: 1, 2, 1>} : memref<1x576x3xf32, #tpu.memory_space<vmem>>, vector<1x11x3xf32>
    %88 = vector.shape_cast %87 : vector<1x11x3xf32> to vector<11x3xf32>
    %c0_86 = arith.constant 0 : index
    %c504 = arith.constant 504 : index
    %c0_87 = arith.constant 0 : index
    %89 = tpu.strided_load %arg1[%c0_86, %c504, %c0_87] {strides = array<i32: 1, 2, 1>} : memref<1x576x3xf32, #tpu.memory_space<vmem>>, vector<1x11x3xf32>
    %90 = vector.shape_cast %89 : vector<1x11x3xf32> to vector<11x3xf32>
    %91 = tpu.concatenate %70, %72, %74, %76, %78, %80, %82, %84, %86, %88, %90 in 0 : vector<11x3xf32>, vector<11x3xf32>, vector<11x3xf32>, vector<11x3xf32>, vector<11x3xf32>, vector<11x3xf32>, vector<11x3xf32>, vector<11x3xf32>, vector<11x3xf32>, vector<11x3xf32>, vector<11x3xf32> -> vector<121x3xf32>
    %c0_88 = arith.constant 0 : index
    %c25 = arith.constant 25 : index
    %c0_89 = arith.constant 0 : index
    %92 = tpu.strided_load %arg1[%c0_88, %c25, %c0_89] {strides = array<i32: 1, 2, 1>} : memref<1x576x3xf32, #tpu.memory_space<vmem>>, vector<1x11x3xf32>
    %93 = vector.shape_cast %92 : vector<1x11x3xf32> to vector<11x3xf32>
    %c0_90 = arith.constant 0 : index
    %c73 = arith.constant 73 : index
    %c0_91 = arith.constant 0 : index
    %94 = tpu.strided_load %arg1[%c0_90, %c73, %c0_91] {strides = array<i32: 1, 2, 1>} : memref<1x576x3xf32, #tpu.memory_space<vmem>>, vector<1x11x3xf32>
    %95 = vector.shape_cast %94 : vector<1x11x3xf32> to vector<11x3xf32>
    %c0_92 = arith.constant 0 : index
    %c121 = arith.constant 121 : index
    %c0_93 = arith.constant 0 : index
    %96 = tpu.strided_load %arg1[%c0_92, %c121, %c0_93] {strides = array<i32: 1, 2, 1>} : memref<1x576x3xf32, #tpu.memory_space<vmem>>, vector<1x11x3xf32>
    %97 = vector.shape_cast %96 : vector<1x11x3xf32> to vector<11x3xf32>
    %c0_94 = arith.constant 0 : index
    %c169 = arith.constant 169 : index
    %c0_95 = arith.constant 0 : index
    %98 = tpu.strided_load %arg1[%c0_94, %c169, %c0_95] {strides = array<i32: 1, 2, 1>} : memref<1x576x3xf32, #tpu.memory_space<vmem>>, vector<1x11x3xf32>
    %99 = vector.shape_cast %98 : vector<1x11x3xf32> to vector<11x3xf32>
    %c0_96 = arith.constant 0 : index
    %c217 = arith.constant 217 : index
    %c0_97 = arith.constant 0 : index
    %100 = tpu.strided_load %arg1[%c0_96, %c217, %c0_97] {strides = array<i32: 1, 2, 1>} : memref<1x576x3xf32, #tpu.memory_space<vmem>>, vector<1x11x3xf32>
    %101 = vector.shape_cast %100 : vector<1x11x3xf32> to vector<11x3xf32>
    %c0_98 = arith.constant 0 : index
    %c265 = arith.constant 265 : index
    %c0_99 = arith.constant 0 : index
    %102 = tpu.strided_load %arg1[%c0_98, %c265, %c0_99] {strides = array<i32: 1, 2, 1>} : memref<1x576x3xf32, #tpu.memory_space<vmem>>, vector<1x11x3xf32>
    %103 = vector.shape_cast %102 : vector<1x11x3xf32> to vector<11x3xf32>
    %c0_100 = arith.constant 0 : index
    %c313 = arith.constant 313 : index
    %c0_101 = arith.constant 0 : index
    %104 = tpu.strided_load %arg1[%c0_100, %c313, %c0_101] {strides = array<i32: 1, 2, 1>} : memref<1x576x3xf32, #tpu.memory_space<vmem>>, vector<1x11x3xf32>
    %105 = vector.shape_cast %104 : vector<1x11x3xf32> to vector<11x3xf32>
    %c0_102 = arith.constant 0 : index
    %c361 = arith.constant 361 : index
    %c0_103 = arith.constant 0 : index
    %106 = tpu.strided_load %arg1[%c0_102, %c361, %c0_103] {strides = array<i32: 1, 2, 1>} : memref<1x576x3xf32, #tpu.memory_space<vmem>>, vector<1x11x3xf32>
    %107 = vector.shape_cast %106 : vector<1x11x3xf32> to vector<11x3xf32>
    %c0_104 = arith.constant 0 : index
    %c409 = arith.constant 409 : index
    %c0_105 = arith.constant 0 : index
    %108 = tpu.strided_load %arg1[%c0_104, %c409, %c0_105] {strides = array<i32: 1, 2, 1>} : memref<1x576x3xf32, #tpu.memory_space<vmem>>, vector<1x11x3xf32>
    %109 = vector.shape_cast %108 : vector<1x11x3xf32> to vector<11x3xf32>
    %c0_106 = arith.constant 0 : index
    %c457 = arith.constant 457 : index
    %c0_107 = arith.constant 0 : index
    %110 = tpu.strided_load %arg1[%c0_106, %c457, %c0_107] {strides = array<i32: 1, 2, 1>} : memref<1x576x3xf32, #tpu.memory_space<vmem>>, vector<1x11x3xf32>
    %111 = vector.shape_cast %110 : vector<1x11x3xf32> to vector<11x3xf32>
    %c0_108 = arith.constant 0 : index
    %c505 = arith.constant 505 : index
    %c0_109 = arith.constant 0 : index
    %112 = tpu.strided_load %arg1[%c0_108, %c505, %c0_109] {strides = array<i32: 1, 2, 1>} : memref<1x576x3xf32, #tpu.memory_space<vmem>>, vector<1x11x3xf32>
    %113 = vector.shape_cast %112 : vector<1x11x3xf32> to vector<11x3xf32>
    %114 = tpu.concatenate %93, %95, %97, %99, %101, %103, %105, %107, %109, %111, %113 in 0 : vector<11x3xf32>, vector<11x3xf32>, vector<11x3xf32>, vector<11x3xf32>, vector<11x3xf32>, vector<11x3xf32>, vector<11x3xf32>, vector<11x3xf32>, vector<11x3xf32>, vector<11x3xf32>, vector<11x3xf32> -> vector<121x3xf32>
    %c0_110 = arith.constant 0 : index
    %c26 = arith.constant 26 : index
    %c0_111 = arith.constant 0 : index
    %115 = tpu.strided_load %arg1[%c0_110, %c26, %c0_111] {strides = array<i32: 1, 2, 1>} : memref<1x576x3xf32, #tpu.memory_space<vmem>>, vector<1x11x3xf32>
    %116 = vector.shape_cast %115 : vector<1x11x3xf32> to vector<11x3xf32>
    %c0_112 = arith.constant 0 : index
    %c74 = arith.constant 74 : index
    %c0_113 = arith.constant 0 : index
    %117 = tpu.strided_load %arg1[%c0_112, %c74, %c0_113] {strides = array<i32: 1, 2, 1>} : memref<1x576x3xf32, #tpu.memory_space<vmem>>, vector<1x11x3xf32>
    %118 = vector.shape_cast %117 : vector<1x11x3xf32> to vector<11x3xf32>
    %c0_114 = arith.constant 0 : index
    %c122 = arith.constant 122 : index
    %c0_115 = arith.constant 0 : index
    %119 = tpu.strided_load %arg1[%c0_114, %c122, %c0_115] {strides = array<i32: 1, 2, 1>} : memref<1x576x3xf32, #tpu.memory_space<vmem>>, vector<1x11x3xf32>
    %120 = vector.shape_cast %119 : vector<1x11x3xf32> to vector<11x3xf32>
    %c0_116 = arith.constant 0 : index
    %c170 = arith.constant 170 : index
    %c0_117 = arith.constant 0 : index
    %121 = tpu.strided_load %arg1[%c0_116, %c170, %c0_117] {strides = array<i32: 1, 2, 1>} : memref<1x576x3xf32, #tpu.memory_space<vmem>>, vector<1x11x3xf32>
    %122 = vector.shape_cast %121 : vector<1x11x3xf32> to vector<11x3xf32>
    %c0_118 = arith.constant 0 : index
    %c218 = arith.constant 218 : index
    %c0_119 = arith.constant 0 : index
    %123 = tpu.strided_load %arg1[%c0_118, %c218, %c0_119] {strides = array<i32: 1, 2, 1>} : memref<1x576x3xf32, #tpu.memory_space<vmem>>, vector<1x11x3xf32>
    %124 = vector.shape_cast %123 : vector<1x11x3xf32> to vector<11x3xf32>
    %c0_120 = arith.constant 0 : index
    %c266 = arith.constant 266 : index
    %c0_121 = arith.constant 0 : index
    %125 = tpu.strided_load %arg1[%c0_120, %c266, %c0_121] {strides = array<i32: 1, 2, 1>} : memref<1x576x3xf32, #tpu.memory_space<vmem>>, vector<1x11x3xf32>
    %126 = vector.shape_cast %125 : vector<1x11x3xf32> to vector<11x3xf32>
    %c0_122 = arith.constant 0 : index
    %c314 = arith.constant 314 : index
    %c0_123 = arith.constant 0 : index
    %127 = tpu.strided_load %arg1[%c0_122, %c314, %c0_123] {strides = array<i32: 1, 2, 1>} : memref<1x576x3xf32, #tpu.memory_space<vmem>>, vector<1x11x3xf32>
    %128 = vector.shape_cast %127 : vector<1x11x3xf32> to vector<11x3xf32>
    %c0_124 = arith.constant 0 : index
    %c362 = arith.constant 362 : index
    %c0_125 = arith.constant 0 : index
    %129 = tpu.strided_load %arg1[%c0_124, %c362, %c0_125] {strides = array<i32: 1, 2, 1>} : memref<1x576x3xf32, #tpu.memory_space<vmem>>, vector<1x11x3xf32>
    %130 = vector.shape_cast %129 : vector<1x11x3xf32> to vector<11x3xf32>
    %c0_126 = arith.constant 0 : index
    %c410 = arith.constant 410 : index
    %c0_127 = arith.constant 0 : index
    %131 = tpu.strided_load %arg1[%c0_126, %c410, %c0_127] {strides = array<i32: 1, 2, 1>} : memref<1x576x3xf32, #tpu.memory_space<vmem>>, vector<1x11x3xf32>
    %132 = vector.shape_cast %131 : vector<1x11x3xf32> to vector<11x3xf32>
    %c0_128 = arith.constant 0 : index
    %c458 = arith.constant 458 : index
    %c0_129 = arith.constant 0 : index
    %133 = tpu.strided_load %arg1[%c0_128, %c458, %c0_129] {strides = array<i32: 1, 2, 1>} : memref<1x576x3xf32, #tpu.memory_space<vmem>>, vector<1x11x3xf32>
    %134 = vector.shape_cast %133 : vector<1x11x3xf32> to vector<11x3xf32>
    %c0_130 = arith.constant 0 : index
    %c506 = arith.constant 506 : index
    %c0_131 = arith.constant 0 : index
    %135 = tpu.strided_load %arg1[%c0_130, %c506, %c0_131] {strides = array<i32: 1, 2, 1>} : memref<1x576x3xf32, #tpu.memory_space<vmem>>, vector<1x11x3xf32>
    %136 = vector.shape_cast %135 : vector<1x11x3xf32> to vector<11x3xf32>
    %137 = tpu.concatenate %116, %118, %120, %122, %124, %126, %128, %130, %132, %134, %136 in 0 : vector<11x3xf32>, vector<11x3xf32>, vector<11x3xf32>, vector<11x3xf32>, vector<11x3xf32>, vector<11x3xf32>, vector<11x3xf32>, vector<11x3xf32>, vector<11x3xf32>, vector<11x3xf32>, vector<11x3xf32> -> vector<121x3xf32>
    %c0_132 = arith.constant 0 : index
    %c48_133 = arith.constant 48 : index
    %c0_134 = arith.constant 0 : index
    %138 = tpu.strided_load %arg1[%c0_132, %c48_133, %c0_134] {strides = array<i32: 1, 2, 1>} : memref<1x576x3xf32, #tpu.memory_space<vmem>>, vector<1x11x3xf32>
    %139 = vector.shape_cast %138 : vector<1x11x3xf32> to vector<11x3xf32>
    %c0_135 = arith.constant 0 : index
    %c96_136 = arith.constant 96 : index
    %c0_137 = arith.constant 0 : index
    %140 = tpu.strided_load %arg1[%c0_135, %c96_136, %c0_137] {strides = array<i32: 1, 2, 1>} : memref<1x576x3xf32, #tpu.memory_space<vmem>>, vector<1x11x3xf32>
    %141 = vector.shape_cast %140 : vector<1x11x3xf32> to vector<11x3xf32>
    %c0_138 = arith.constant 0 : index
    %c144_139 = arith.constant 144 : index
    %c0_140 = arith.constant 0 : index
    %142 = tpu.strided_load %arg1[%c0_138, %c144_139, %c0_140] {strides = array<i32: 1, 2, 1>} : memref<1x576x3xf32, #tpu.memory_space<vmem>>, vector<1x11x3xf32>
    %143 = vector.shape_cast %142 : vector<1x11x3xf32> to vector<11x3xf32>
    %c0_141 = arith.constant 0 : index
    %c192_142 = arith.constant 192 : index
    %c0_143 = arith.constant 0 : index
    %144 = tpu.strided_load %arg1[%c0_141, %c192_142, %c0_143] {strides = array<i32: 1, 2, 1>} : memref<1x576x3xf32, #tpu.memory_space<vmem>>, vector<1x11x3xf32>
    %145 = vector.shape_cast %144 : vector<1x11x3xf32> to vector<11x3xf32>
    %c0_144 = arith.constant 0 : index
    %c240_145 = arith.constant 240 : index
    %c0_146 = arith.constant 0 : index
    %146 = tpu.strided_load %arg1[%c0_144, %c240_145, %c0_146] {strides = array<i32: 1, 2, 1>} : memref<1x576x3xf32, #tpu.memory_space<vmem>>, vector<1x11x3xf32>
    %147 = vector.shape_cast %146 : vector<1x11x3xf32> to vector<11x3xf32>
    %c0_147 = arith.constant 0 : index
    %c288_148 = arith.constant 288 : index
    %c0_149 = arith.constant 0 : index
    %148 = tpu.strided_load %arg1[%c0_147, %c288_148, %c0_149] {strides = array<i32: 1, 2, 1>} : memref<1x576x3xf32, #tpu.memory_space<vmem>>, vector<1x11x3xf32>
    %149 = vector.shape_cast %148 : vector<1x11x3xf32> to vector<11x3xf32>
    %c0_150 = arith.constant 0 : index
    %c336_151 = arith.constant 336 : index
    %c0_152 = arith.constant 0 : index
    %150 = tpu.strided_load %arg1[%c0_150, %c336_151, %c0_152] {strides = array<i32: 1, 2, 1>} : memref<1x576x3xf32, #tpu.memory_space<vmem>>, vector<1x11x3xf32>
    %151 = vector.shape_cast %150 : vector<1x11x3xf32> to vector<11x3xf32>
    %c0_153 = arith.constant 0 : index
    %c384_154 = arith.constant 384 : index
    %c0_155 = arith.constant 0 : index
    %152 = tpu.strided_load %arg1[%c0_153, %c384_154, %c0_155] {strides = array<i32: 1, 2, 1>} : memref<1x576x3xf32, #tpu.memory_space<vmem>>, vector<1x11x3xf32>
    %153 = vector.shape_cast %152 : vector<1x11x3xf32> to vector<11x3xf32>
    %c0_156 = arith.constant 0 : index
    %c432_157 = arith.constant 432 : index
    %c0_158 = arith.constant 0 : index
    %154 = tpu.strided_load %arg1[%c0_156, %c432_157, %c0_158] {strides = array<i32: 1, 2, 1>} : memref<1x576x3xf32, #tpu.memory_space<vmem>>, vector<1x11x3xf32>
    %155 = vector.shape_cast %154 : vector<1x11x3xf32> to vector<11x3xf32>
    %c0_159 = arith.constant 0 : index
    %c480_160 = arith.constant 480 : index
    %c0_161 = arith.constant 0 : index
    %156 = tpu.strided_load %arg1[%c0_159, %c480_160, %c0_161] {strides = array<i32: 1, 2, 1>} : memref<1x576x3xf32, #tpu.memory_space<vmem>>, vector<1x11x3xf32>
    %157 = vector.shape_cast %156 : vector<1x11x3xf32> to vector<11x3xf32>
    %c0_162 = arith.constant 0 : index
    %c528 = arith.constant 528 : index
    %c0_163 = arith.constant 0 : index
    %158 = tpu.strided_load %arg1[%c0_162, %c528, %c0_163] {strides = array<i32: 1, 2, 1>} : memref<1x576x3xf32, #tpu.memory_space<vmem>>, vector<1x11x3xf32>
    %159 = vector.shape_cast %158 : vector<1x11x3xf32> to vector<11x3xf32>
    %160 = tpu.concatenate %139, %141, %143, %145, %147, %149, %151, %153, %155, %157, %159 in 0 : vector<11x3xf32>, vector<11x3xf32>, vector<11x3xf32>, vector<11x3xf32>, vector<11x3xf32>, vector<11x3xf32>, vector<11x3xf32>, vector<11x3xf32>, vector<11x3xf32>, vector<11x3xf32>, vector<11x3xf32> -> vector<121x3xf32>
    %c0_164 = arith.constant 0 : index
    %c49_165 = arith.constant 49 : index
    %c0_166 = arith.constant 0 : index
    %161 = tpu.strided_load %arg1[%c0_164, %c49_165, %c0_166] {strides = array<i32: 1, 2, 1>} : memref<1x576x3xf32, #tpu.memory_space<vmem>>, vector<1x11x3xf32>
    %162 = vector.shape_cast %161 : vector<1x11x3xf32> to vector<11x3xf32>
    %c0_167 = arith.constant 0 : index
    %c97_168 = arith.constant 97 : index
    %c0_169 = arith.constant 0 : index
    %163 = tpu.strided_load %arg1[%c0_167, %c97_168, %c0_169] {strides = array<i32: 1, 2, 1>} : memref<1x576x3xf32, #tpu.memory_space<vmem>>, vector<1x11x3xf32>
    %164 = vector.shape_cast %163 : vector<1x11x3xf32> to vector<11x3xf32>
    %c0_170 = arith.constant 0 : index
    %c145_171 = arith.constant 145 : index
    %c0_172 = arith.constant 0 : index
    %165 = tpu.strided_load %arg1[%c0_170, %c145_171, %c0_172] {strides = array<i32: 1, 2, 1>} : memref<1x576x3xf32, #tpu.memory_space<vmem>>, vector<1x11x3xf32>
    %166 = vector.shape_cast %165 : vector<1x11x3xf32> to vector<11x3xf32>
    %c0_173 = arith.constant 0 : index
    %c193_174 = arith.constant 193 : index
    %c0_175 = arith.constant 0 : index
    %167 = tpu.strided_load %arg1[%c0_173, %c193_174, %c0_175] {strides = array<i32: 1, 2, 1>} : memref<1x576x3xf32, #tpu.memory_space<vmem>>, vector<1x11x3xf32>
    %168 = vector.shape_cast %167 : vector<1x11x3xf32> to vector<11x3xf32>
    %c0_176 = arith.constant 0 : index
    %c241_177 = arith.constant 241 : index
    %c0_178 = arith.constant 0 : index
    %169 = tpu.strided_load %arg1[%c0_176, %c241_177, %c0_178] {strides = array<i32: 1, 2, 1>} : memref<1x576x3xf32, #tpu.memory_space<vmem>>, vector<1x11x3xf32>
    %170 = vector.shape_cast %169 : vector<1x11x3xf32> to vector<11x3xf32>
    %c0_179 = arith.constant 0 : index
    %c289_180 = arith.constant 289 : index
    %c0_181 = arith.constant 0 : index
    %171 = tpu.strided_load %arg1[%c0_179, %c289_180, %c0_181] {strides = array<i32: 1, 2, 1>} : memref<1x576x3xf32, #tpu.memory_space<vmem>>, vector<1x11x3xf32>
    %172 = vector.shape_cast %171 : vector<1x11x3xf32> to vector<11x3xf32>
    %c0_182 = arith.constant 0 : index
    %c337_183 = arith.constant 337 : index
    %c0_184 = arith.constant 0 : index
    %173 = tpu.strided_load %arg1[%c0_182, %c337_183, %c0_184] {strides = array<i32: 1, 2, 1>} : memref<1x576x3xf32, #tpu.memory_space<vmem>>, vector<1x11x3xf32>
    %174 = vector.shape_cast %173 : vector<1x11x3xf32> to vector<11x3xf32>
    %c0_185 = arith.constant 0 : index
    %c385_186 = arith.constant 385 : index
    %c0_187 = arith.constant 0 : index
    %175 = tpu.strided_load %arg1[%c0_185, %c385_186, %c0_187] {strides = array<i32: 1, 2, 1>} : memref<1x576x3xf32, #tpu.memory_space<vmem>>, vector<1x11x3xf32>
    %176 = vector.shape_cast %175 : vector<1x11x3xf32> to vector<11x3xf32>
    %c0_188 = arith.constant 0 : index
    %c433_189 = arith.constant 433 : index
    %c0_190 = arith.constant 0 : index
    %177 = tpu.strided_load %arg1[%c0_188, %c433_189, %c0_190] {strides = array<i32: 1, 2, 1>} : memref<1x576x3xf32, #tpu.memory_space<vmem>>, vector<1x11x3xf32>
    %178 = vector.shape_cast %177 : vector<1x11x3xf32> to vector<11x3xf32>
    %c0_191 = arith.constant 0 : index
    %c481_192 = arith.constant 481 : index
    %c0_193 = arith.constant 0 : index
    %179 = tpu.strided_load %arg1[%c0_191, %c481_192, %c0_193] {strides = array<i32: 1, 2, 1>} : memref<1x576x3xf32, #tpu.memory_space<vmem>>, vector<1x11x3xf32>
    %180 = vector.shape_cast %179 : vector<1x11x3xf32> to vector<11x3xf32>
    %c0_194 = arith.constant 0 : index
    %c529 = arith.constant 529 : index
    %c0_195 = arith.constant 0 : index
    %181 = tpu.strided_load %arg1[%c0_194, %c529, %c0_195] {strides = array<i32: 1, 2, 1>} : memref<1x576x3xf32, #tpu.memory_space<vmem>>, vector<1x11x3xf32>
    %182 = vector.shape_cast %181 : vector<1x11x3xf32> to vector<11x3xf32>
    %183 = tpu.concatenate %162, %164, %166, %168, %170, %172, %174, %176, %178, %180, %182 in 0 : vector<11x3xf32>, vector<11x3xf32>, vector<11x3xf32>, vector<11x3xf32>, vector<11x3xf32>, vector<11x3xf32>, vector<11x3xf32>, vector<11x3xf32>, vector<11x3xf32>, vector<11x3xf32>, vector<11x3xf32> -> vector<121x3xf32>
    %c0_196 = arith.constant 0 : index
    %c50_197 = arith.constant 50 : index
    %c0_198 = arith.constant 0 : index
    %184 = tpu.strided_load %arg1[%c0_196, %c50_197, %c0_198] {strides = array<i32: 1, 2, 1>} : memref<1x576x3xf32, #tpu.memory_space<vmem>>, vector<1x11x3xf32>
    %185 = vector.shape_cast %184 : vector<1x11x3xf32> to vector<11x3xf32>
    %c0_199 = arith.constant 0 : index
    %c98_200 = arith.constant 98 : index
    %c0_201 = arith.constant 0 : index
    %186 = tpu.strided_load %arg1[%c0_199, %c98_200, %c0_201] {strides = array<i32: 1, 2, 1>} : memref<1x576x3xf32, #tpu.memory_space<vmem>>, vector<1x11x3xf32>
    %187 = vector.shape_cast %186 : vector<1x11x3xf32> to vector<11x3xf32>
    %c0_202 = arith.constant 0 : index
    %c146_203 = arith.constant 146 : index
    %c0_204 = arith.constant 0 : index
    %188 = tpu.strided_load %arg1[%c0_202, %c146_203, %c0_204] {strides = array<i32: 1, 2, 1>} : memref<1x576x3xf32, #tpu.memory_space<vmem>>, vector<1x11x3xf32>
    %189 = vector.shape_cast %188 : vector<1x11x3xf32> to vector<11x3xf32>
    %c0_205 = arith.constant 0 : index
    %c194_206 = arith.constant 194 : index
    %c0_207 = arith.constant 0 : index
    %190 = tpu.strided_load %arg1[%c0_205, %c194_206, %c0_207] {strides = array<i32: 1, 2, 1>} : memref<1x576x3xf32, #tpu.memory_space<vmem>>, vector<1x11x3xf32>
    %191 = vector.shape_cast %190 : vector<1x11x3xf32> to vector<11x3xf32>
    %c0_208 = arith.constant 0 : index
    %c242_209 = arith.constant 242 : index
    %c0_210 = arith.constant 0 : index
    %192 = tpu.strided_load %arg1[%c0_208, %c242_209, %c0_210] {strides = array<i32: 1, 2, 1>} : memref<1x576x3xf32, #tpu.memory_space<vmem>>, vector<1x11x3xf32>
    %193 = vector.shape_cast %192 : vector<1x11x3xf32> to vector<11x3xf32>
    %c0_211 = arith.constant 0 : index
    %c290_212 = arith.constant 290 : index
    %c0_213 = arith.constant 0 : index
    %194 = tpu.strided_load %arg1[%c0_211, %c290_212, %c0_213] {strides = array<i32: 1, 2, 1>} : memref<1x576x3xf32, #tpu.memory_space<vmem>>, vector<1x11x3xf32>
    %195 = vector.shape_cast %194 : vector<1x11x3xf32> to vector<11x3xf32>
    %c0_214 = arith.constant 0 : index
    %c338_215 = arith.constant 338 : index
    %c0_216 = arith.constant 0 : index
    %196 = tpu.strided_load %arg1[%c0_214, %c338_215, %c0_216] {strides = array<i32: 1, 2, 1>} : memref<1x576x3xf32, #tpu.memory_space<vmem>>, vector<1x11x3xf32>
    %197 = vector.shape_cast %196 : vector<1x11x3xf32> to vector<11x3xf32>
    %c0_217 = arith.constant 0 : index
    %c386_218 = arith.constant 386 : index
    %c0_219 = arith.constant 0 : index
    %198 = tpu.strided_load %arg1[%c0_217, %c386_218, %c0_219] {strides = array<i32: 1, 2, 1>} : memref<1x576x3xf32, #tpu.memory_space<vmem>>, vector<1x11x3xf32>
    %199 = vector.shape_cast %198 : vector<1x11x3xf32> to vector<11x3xf32>
    %c0_220 = arith.constant 0 : index
    %c434_221 = arith.constant 434 : index
    %c0_222 = arith.constant 0 : index
    %200 = tpu.strided_load %arg1[%c0_220, %c434_221, %c0_222] {strides = array<i32: 1, 2, 1>} : memref<1x576x3xf32, #tpu.memory_space<vmem>>, vector<1x11x3xf32>
    %201 = vector.shape_cast %200 : vector<1x11x3xf32> to vector<11x3xf32>
    %c0_223 = arith.constant 0 : index
    %c482_224 = arith.constant 482 : index
    %c0_225 = arith.constant 0 : index
    %202 = tpu.strided_load %arg1[%c0_223, %c482_224, %c0_225] {strides = array<i32: 1, 2, 1>} : memref<1x576x3xf32, #tpu.memory_space<vmem>>, vector<1x11x3xf32>
    %203 = vector.shape_cast %202 : vector<1x11x3xf32> to vector<11x3xf32>
    %c0_226 = arith.constant 0 : index
    %c530 = arith.constant 530 : index
    %c0_227 = arith.constant 0 : index
    %204 = tpu.strided_load %arg1[%c0_226, %c530, %c0_227] {strides = array<i32: 1, 2, 1>} : memref<1x576x3xf32, #tpu.memory_space<vmem>>, vector<1x11x3xf32>
    %205 = vector.shape_cast %204 : vector<1x11x3xf32> to vector<11x3xf32>
    %206 = tpu.concatenate %185, %187, %189, %191, %193, %195, %197, %199, %201, %203, %205 in 0 : vector<11x3xf32>, vector<11x3xf32>, vector<11x3xf32>, vector<11x3xf32>, vector<11x3xf32>, vector<11x3xf32>, vector<11x3xf32>, vector<11x3xf32>, vector<11x3xf32>, vector<11x3xf32>, vector<11x3xf32> -> vector<121x3xf32>
    %207 = tpu.concatenate %22, %45, %68, %91, %114, %137, %160, %183, %206 in 1 : vector<121x3xf32>, vector<121x3xf32>, vector<121x3xf32>, vector<121x3xf32>, vector<121x3xf32>, vector<121x3xf32>, vector<121x3xf32>, vector<121x3xf32>, vector<121x3xf32> -> vector<121x27xf32>
    %208 = arith.truncf %207 : vector<121x27xf32> to vector<121x27xbf16>
    %c0_228 = arith.constant 0 : index
    %c0_229 = arith.constant 0 : index
    %209 = vector.load %arg2[%c0_228, %c0_229] : memref<27x16xbf16, #tpu.memory_space<vmem>>, vector<27x16xbf16>
    %cst = arith.constant dense<0.000000e+00> : vector<121x16xf32>
    %210 = tpu.matmul %208, %209, %cst {dimension_numbers = #tpu.dot_dimension_numbers<[1], [0], [0], [1], [0, 0, 1, 1], [], []>} : vector<121x27xbf16>, vector<27x16xbf16>, vector<121x16xf32> -> vector<121x16xf32>
    %c0_230 = arith.constant 0 : index
    %c0_231 = arith.constant 0 : index
    %211 = vector.load %arg3[%c0_230, %c0_231] : memref<1x16xf32, #tpu.memory_space<vmem>>, vector<1x16xf32>
    %212 = vector.broadcast %211 : vector<1x16xf32> to vector<121x16xf32>
    %213 = arith.addf %210, %212 : vector<121x16xf32>
    %cst_232 = arith.constant 0.000000e+00 : f32
    %214 = vector.broadcast %cst_232 : f32 to vector<121x16xf32>
    %215 = arith.maximumf %213, %214 : vector<121x16xf32>
    %c0_233 = arith.constant 0 : index
    %c0_234 = arith.constant 0 : index
    %216 = vector.load %arg13[%c0_233, %c0_234] : memref<121x16xf32, #tpu.memory_space<vmem>>, vector<121x16xf32>
    tpu.vector_store %arg13[%c0_233, %c0_234], %215 {strides = array<i32>} : memref<121x16xf32, #tpu.memory_space<vmem>>, vector<121x16xf32>,
    %c0_235 = arith.constant 0 : index
    %c0_236 = arith.constant 0 : index
    %217 = tpu.strided_load %arg13[%c0_235, %c0_236] {strides = array<i32: 2, 1>} : memref<121x16xf32, #tpu.memory_space<vmem>>, vector<5x16xf32>
    %c22 = arith.constant 22 : index
    %c0_237 = arith.constant 0 : index
    %218 = tpu.strided_load %arg13[%c22, %c0_237] {strides = array<i32: 2, 1>} : memref<121x16xf32, #tpu.memory_space<vmem>>, vector<5x16xf32>
    %c44 = arith.constant 44 : index
    %c0_238 = arith.constant 0 : index
    %219 = tpu.strided_load %arg13[%c44, %c0_238] {strides = array<i32: 2, 1>} : memref<121x16xf32, #tpu.memory_space<vmem>>, vector<5x16xf32>
    %c66 = arith.constant 66 : index
    %c0_239 = arith.constant 0 : index
    %220 = tpu.strided_load %arg13[%c66, %c0_239] {strides = array<i32: 2, 1>} : memref<121x16xf32, #tpu.memory_space<vmem>>, vector<5x16xf32>
    %c88 = arith.constant 88 : index
    %c0_240 = arith.constant 0 : index
    %221 = tpu.strided_load %arg13[%c88, %c0_240] {strides = array<i32: 2, 1>} : memref<121x16xf32, #tpu.memory_space<vmem>>, vector<5x16xf32>
    %222 = tpu.concatenate %217, %218, %219, %220, %221 in 0 : vector<5x16xf32>, vector<5x16xf32>, vector<5x16xf32>, vector<5x16xf32>, vector<5x16xf32> -> vector<25x16xf32>
    %c1_241 = arith.constant 1 : index
    %c0_242 = arith.constant 0 : index
    %223 = tpu.strided_load %arg13[%c1_241, %c0_242] {strides = array<i32: 2, 1>} : memref<121x16xf32, #tpu.memory_space<vmem>>, vector<5x16xf32>
    %c23 = arith.constant 23 : index
    %c0_243 = arith.constant 0 : index
    %224 = tpu.strided_load %arg13[%c23, %c0_243] {strides = array<i32: 2, 1>} : memref<121x16xf32, #tpu.memory_space<vmem>>, vector<5x16xf32>
    %c45 = arith.constant 45 : index
    %c0_244 = arith.constant 0 : index
    %225 = tpu.strided_load %arg13[%c45, %c0_244] {strides = array<i32: 2, 1>} : memref<121x16xf32, #tpu.memory_space<vmem>>, vector<5x16xf32>
    %c67 = arith.constant 67 : index
    %c0_245 = arith.constant 0 : index
    %226 = tpu.strided_load %arg13[%c67, %c0_245] {strides = array<i32: 2, 1>} : memref<121x16xf32, #tpu.memory_space<vmem>>, vector<5x16xf32>
    %c89 = arith.constant 89 : index
    %c0_246 = arith.constant 0 : index
    %227 = tpu.strided_load %arg13[%c89, %c0_246] {strides = array<i32: 2, 1>} : memref<121x16xf32, #tpu.memory_space<vmem>>, vector<5x16xf32>
    %228 = tpu.concatenate %223, %224, %225, %226, %227 in 0 : vector<5x16xf32>, vector<5x16xf32>, vector<5x16xf32>, vector<5x16xf32>, vector<5x16xf32> -> vector<25x16xf32>
    %c2_247 = arith.constant 2 : index
    %c0_248 = arith.constant 0 : index
    %229 = tpu.strided_load %arg13[%c2_247, %c0_248] {strides = array<i32: 2, 1>} : memref<121x16xf32, #tpu.memory_space<vmem>>, vector<5x16xf32>
    %c24_249 = arith.constant 24 : index
    %c0_250 = arith.constant 0 : index
    %230 = tpu.strided_load %arg13[%c24_249, %c0_250] {strides = array<i32: 2, 1>} : memref<121x16xf32, #tpu.memory_space<vmem>>, vector<5x16xf32>
    %c46 = arith.constant 46 : index
    %c0_251 = arith.constant 0 : index
    %231 = tpu.strided_load %arg13[%c46, %c0_251] {strides = array<i32: 2, 1>} : memref<121x16xf32, #tpu.memory_space<vmem>>, vector<5x16xf32>
    %c68 = arith.constant 68 : index
    %c0_252 = arith.constant 0 : index
    %232 = tpu.strided_load %arg13[%c68, %c0_252] {strides = array<i32: 2, 1>} : memref<121x16xf32, #tpu.memory_space<vmem>>, vector<5x16xf32>
    %c90 = arith.constant 90 : index
    %c0_253 = arith.constant 0 : index
    %233 = tpu.strided_load %arg13[%c90, %c0_253] {strides = array<i32: 2, 1>} : memref<121x16xf32, #tpu.memory_space<vmem>>, vector<5x16xf32>
    %234 = tpu.concatenate %229, %230, %231, %232, %233 in 0 : vector<5x16xf32>, vector<5x16xf32>, vector<5x16xf32>, vector<5x16xf32>, vector<5x16xf32> -> vector<25x16xf32>
    %c11 = arith.constant 11 : index
    %c0_254 = arith.constant 0 : index
    %235 = tpu.strided_load %arg13[%c11, %c0_254] {strides = array<i32: 2, 1>} : memref<121x16xf32, #tpu.memory_space<vmem>>, vector<5x16xf32>
    %c33 = arith.constant 33 : index
    %c0_255 = arith.constant 0 : index
    %236 = tpu.strided_load %arg13[%c33, %c0_255] {strides = array<i32: 2, 1>} : memref<121x16xf32, #tpu.memory_space<vmem>>, vector<5x16xf32>
    %c55 = arith.constant 55 : index
    %c0_256 = arith.constant 0 : index
    %237 = tpu.strided_load %arg13[%c55, %c0_256] {strides = array<i32: 2, 1>} : memref<121x16xf32, #tpu.memory_space<vmem>>, vector<5x16xf32>
    %c77 = arith.constant 77 : index
    %c0_257 = arith.constant 0 : index
    %238 = tpu.strided_load %arg13[%c77, %c0_257] {strides = array<i32: 2, 1>} : memref<121x16xf32, #tpu.memory_space<vmem>>, vector<5x16xf32>
    %c99 = arith.constant 99 : index
    %c0_258 = arith.constant 0 : index
    %239 = tpu.strided_load %arg13[%c99, %c0_258] {strides = array<i32: 2, 1>} : memref<121x16xf32, #tpu.memory_space<vmem>>, vector<5x16xf32>
    %240 = tpu.concatenate %235, %236, %237, %238, %239 in 0 : vector<5x16xf32>, vector<5x16xf32>, vector<5x16xf32>, vector<5x16xf32>, vector<5x16xf32> -> vector<25x16xf32>
    %c12 = arith.constant 12 : index
    %c0_259 = arith.constant 0 : index
    %241 = tpu.strided_load %arg13[%c12, %c0_259] {strides = array<i32: 2, 1>} : memref<121x16xf32, #tpu.memory_space<vmem>>, vector<5x16xf32>
    %c34 = arith.constant 34 : index
    %c0_260 = arith.constant 0 : index
    %242 = tpu.strided_load %arg13[%c34, %c0_260] {strides = array<i32: 2, 1>} : memref<121x16xf32, #tpu.memory_space<vmem>>, vector<5x16xf32>
    %c56 = arith.constant 56 : index
    %c0_261 = arith.constant 0 : index
    %243 = tpu.strided_load %arg13[%c56, %c0_261] {strides = array<i32: 2, 1>} : memref<121x16xf32, #tpu.memory_space<vmem>>, vector<5x16xf32>
    %c78 = arith.constant 78 : index
    %c0_262 = arith.constant 0 : index
    %244 = tpu.strided_load %arg13[%c78, %c0_262] {strides = array<i32: 2, 1>} : memref<121x16xf32, #tpu.memory_space<vmem>>, vector<5x16xf32>
    %c100 = arith.constant 100 : index
    %c0_263 = arith.constant 0 : index
    %245 = tpu.strided_load %arg13[%c100, %c0_263] {strides = array<i32: 2, 1>} : memref<121x16xf32, #tpu.memory_space<vmem>>, vector<5x16xf32>
    %246 = tpu.concatenate %241, %242, %243, %244, %245 in 0 : vector<5x16xf32>, vector<5x16xf32>, vector<5x16xf32>, vector<5x16xf32>, vector<5x16xf32> -> vector<25x16xf32>
    %c13 = arith.constant 13 : index
    %c0_264 = arith.constant 0 : index
    %247 = tpu.strided_load %arg13[%c13, %c0_264] {strides = array<i32: 2, 1>} : memref<121x16xf32, #tpu.memory_space<vmem>>, vector<5x16xf32>
    %c35 = arith.constant 35 : index
    %c0_265 = arith.constant 0 : index
    %248 = tpu.strided_load %arg13[%c35, %c0_265] {strides = array<i32: 2, 1>} : memref<121x16xf32, #tpu.memory_space<vmem>>, vector<5x16xf32>
    %c57 = arith.constant 57 : index
    %c0_266 = arith.constant 0 : index
    %249 = tpu.strided_load %arg13[%c57, %c0_266] {strides = array<i32: 2, 1>} : memref<121x16xf32, #tpu.memory_space<vmem>>, vector<5x16xf32>
    %c79 = arith.constant 79 : index
    %c0_267 = arith.constant 0 : index
    %250 = tpu.strided_load %arg13[%c79, %c0_267] {strides = array<i32: 2, 1>} : memref<121x16xf32, #tpu.memory_space<vmem>>, vector<5x16xf32>
    %c101 = arith.constant 101 : index
    %c0_268 = arith.constant 0 : index
    %251 = tpu.strided_load %arg13[%c101, %c0_268] {strides = array<i32: 2, 1>} : memref<121x16xf32, #tpu.memory_space<vmem>>, vector<5x16xf32>
    %252 = tpu.concatenate %247, %248, %249, %250, %251 in 0 : vector<5x16xf32>, vector<5x16xf32>, vector<5x16xf32>, vector<5x16xf32>, vector<5x16xf32> -> vector<25x16xf32>
    %c22_269 = arith.constant 22 : index
    %c0_270 = arith.constant 0 : index
    %253 = tpu.strided_load %arg13[%c22_269, %c0_270] {strides = array<i32: 2, 1>} : memref<121x16xf32, #tpu.memory_space<vmem>>, vector<5x16xf32>
    %c44_271 = arith.constant 44 : index
    %c0_272 = arith.constant 0 : index
    %254 = tpu.strided_load %arg13[%c44_271, %c0_272] {strides = array<i32: 2, 1>} : memref<121x16xf32, #tpu.memory_space<vmem>>, vector<5x16xf32>
    %c66_273 = arith.constant 66 : index
    %c0_274 = arith.constant 0 : index
    %255 = tpu.strided_load %arg13[%c66_273, %c0_274] {strides = array<i32: 2, 1>} : memref<121x16xf32, #tpu.memory_space<vmem>>, vector<5x16xf32>
    %c88_275 = arith.constant 88 : index
    %c0_276 = arith.constant 0 : index
    %256 = tpu.strided_load %arg13[%c88_275, %c0_276] {strides = array<i32: 2, 1>} : memref<121x16xf32, #tpu.memory_space<vmem>>, vector<5x16xf32>
    %c110 = arith.constant 110 : index
    %c0_277 = arith.constant 0 : index
    %257 = tpu.strided_load %arg13[%c110, %c0_277] {strides = array<i32: 2, 1>} : memref<121x16xf32, #tpu.memory_space<vmem>>, vector<5x16xf32>
    %258 = tpu.concatenate %253, %254, %255, %256, %257 in 0 : vector<5x16xf32>, vector<5x16xf32>, vector<5x16xf32>, vector<5x16xf32>, vector<5x16xf32> -> vector<25x16xf32>
    %c23_278 = arith.constant 23 : index
    %c0_279 = arith.constant 0 : index
    %259 = tpu.strided_load %arg13[%c23_278, %c0_279] {strides = array<i32: 2, 1>} : memref<121x16xf32, #tpu.memory_space<vmem>>, vector<5x16xf32>
    %c45_280 = arith.constant 45 : index
    %c0_281 = arith.constant 0 : index
    %260 = tpu.strided_load %arg13[%c45_280, %c0_281] {strides = array<i32: 2, 1>} : memref<121x16xf32, #tpu.memory_space<vmem>>, vector<5x16xf32>
    %c67_282 = arith.constant 67 : index
    %c0_283 = arith.constant 0 : index
    %261 = tpu.strided_load %arg13[%c67_282, %c0_283] {strides = array<i32: 2, 1>} : memref<121x16xf32, #tpu.memory_space<vmem>>, vector<5x16xf32>
    %c89_284 = arith.constant 89 : index
    %c0_285 = arith.constant 0 : index
    %262 = tpu.strided_load %arg13[%c89_284, %c0_285] {strides = array<i32: 2, 1>} : memref<121x16xf32, #tpu.memory_space<vmem>>, vector<5x16xf32>
    %c111 = arith.constant 111 : index
    %c0_286 = arith.constant 0 : index
    %263 = tpu.strided_load %arg13[%c111, %c0_286] {strides = array<i32: 2, 1>} : memref<121x16xf32, #tpu.memory_space<vmem>>, vector<5x16xf32>
    %264 = tpu.concatenate %259, %260, %261, %262, %263 in 0 : vector<5x16xf32>, vector<5x16xf32>, vector<5x16xf32>, vector<5x16xf32>, vector<5x16xf32> -> vector<25x16xf32>
    %c24_287 = arith.constant 24 : index
    %c0_288 = arith.constant 0 : index
    %265 = tpu.strided_load %arg13[%c24_287, %c0_288] {strides = array<i32: 2, 1>} : memref<121x16xf32, #tpu.memory_space<vmem>>, vector<5x16xf32>
    %c46_289 = arith.constant 46 : index
    %c0_290 = arith.constant 0 : index
    %266 = tpu.strided_load %arg13[%c46_289, %c0_290] {strides = array<i32: 2, 1>} : memref<121x16xf32, #tpu.memory_space<vmem>>, vector<5x16xf32>
    %c68_291 = arith.constant 68 : index
    %c0_292 = arith.constant 0 : index
    %267 = tpu.strided_load %arg13[%c68_291, %c0_292] {strides = array<i32: 2, 1>} : memref<121x16xf32, #tpu.memory_space<vmem>>, vector<5x16xf32>
    %c90_293 = arith.constant 90 : index
    %c0_294 = arith.constant 0 : index
    %268 = tpu.strided_load %arg13[%c90_293, %c0_294] {strides = array<i32: 2, 1>} : memref<121x16xf32, #tpu.memory_space<vmem>>, vector<5x16xf32>
    %c112 = arith.constant 112 : index
    %c0_295 = arith.constant 0 : index
    %269 = tpu.strided_load %arg13[%c112, %c0_295] {strides = array<i32: 2, 1>} : memref<121x16xf32, #tpu.memory_space<vmem>>, vector<5x16xf32>
    %270 = tpu.concatenate %265, %266, %267, %268, %269 in 0 : vector<5x16xf32>, vector<5x16xf32>, vector<5x16xf32>, vector<5x16xf32>, vector<5x16xf32> -> vector<25x16xf32>
    %271 = tpu.concatenate %222, %228, %234, %240, %246, %252, %258, %264, %270 in 1 : vector<25x16xf32>, vector<25x16xf32>, vector<25x16xf32>, vector<25x16xf32>, vector<25x16xf32>, vector<25x16xf32>, vector<25x16xf32>, vector<25x16xf32>, vector<25x16xf32> -> vector<25x144xf32>
    %272 = arith.truncf %271 : vector<25x144xf32> to vector<25x144xbf16>
    %c0_296 = arith.constant 0 : index
    %c0_297 = arith.constant 0 : index
    %273 = vector.load %arg4[%c0_296, %c0_297] : memref<144x32xbf16, #tpu.memory_space<vmem>>, vector<144x32xbf16>
    %cst_298 = arith.constant dense<0.000000e+00> : vector<25x32xf32>
    %274 = tpu.matmul %272, %273, %cst_298 {dimension_numbers = #tpu.dot_dimension_numbers<[1], [0], [0], [1], [0, 0, 1, 1], [], []>} : vector<25x144xbf16>, vector<144x32xbf16>, vector<25x32xf32> -> vector<25x32xf32>
    %c0_299 = arith.constant 0 : index
    %c0_300 = arith.constant 0 : index
    %275 = vector.load %arg5[%c0_299, %c0_300] : memref<1x32xf32, #tpu.memory_space<vmem>>, vector<1x32xf32>
    %276 = vector.broadcast %275 : vector<1x32xf32> to vector<25x32xf32>
    %277 = arith.addf %274, %276 : vector<25x32xf32>
    %cst_301 = arith.constant 0.000000e+00 : f32
    %278 = vector.broadcast %cst_301 : f32 to vector<25x32xf32>
    %279 = arith.maximumf %277, %278 : vector<25x32xf32>
    %c0_302 = arith.constant 0 : index
    %c0_303 = arith.constant 0 : index
    %280 = vector.load %arg14[%c0_302, %c0_303] : memref<25x32xf32, #tpu.memory_space<vmem>>, vector<25x32xf32>
    tpu.vector_store %arg14[%c0_302, %c0_303], %279 {strides = array<i32>} : memref<25x32xf32, #tpu.memory_space<vmem>>, vector<25x32xf32>,
    %c0_304 = arith.constant 0 : index
    %c0_305 = arith.constant 0 : index
    %281 = tpu.strided_load %arg14[%c0_304, %c0_305] {strides = array<i32: 2, 1>} : memref<25x32xf32, #tpu.memory_space<vmem>>, vector<2x32xf32>
    %c10 = arith.constant 10 : index
    %c0_306 = arith.constant 0 : index
    %282 = tpu.strided_load %arg14[%c10, %c0_306] {strides = array<i32: 2, 1>} : memref<25x32xf32, #tpu.memory_space<vmem>>, vector<2x32xf32>
    %283 = tpu.concatenate %281, %282 in 0 : vector<2x32xf32>, vector<2x32xf32> -> vector<4x32xf32>
    %c1_307 = arith.constant 1 : index
    %c0_308 = arith.constant 0 : index
    %284 = tpu.strided_load %arg14[%c1_307, %c0_308] {strides = array<i32: 2, 1>} : memref<25x32xf32, #tpu.memory_space<vmem>>, vector<2x32xf32>
    %c11_309 = arith.constant 11 : index
    %c0_310 = arith.constant 0 : index
    %285 = tpu.strided_load %arg14[%c11_309, %c0_310] {strides = array<i32: 2, 1>} : memref<25x32xf32, #tpu.memory_space<vmem>>, vector<2x32xf32>
    %286 = tpu.concatenate %284, %285 in 0 : vector<2x32xf32>, vector<2x32xf32> -> vector<4x32xf32>
    %c2_311 = arith.constant 2 : index
    %c0_312 = arith.constant 0 : index
    %287 = tpu.strided_load %arg14[%c2_311, %c0_312] {strides = array<i32: 2, 1>} : memref<25x32xf32, #tpu.memory_space<vmem>>, vector<2x32xf32>
    %c12_313 = arith.constant 12 : index
    %c0_314 = arith.constant 0 : index
    %288 = tpu.strided_load %arg14[%c12_313, %c0_314] {strides = array<i32: 2, 1>} : memref<25x32xf32, #tpu.memory_space<vmem>>, vector<2x32xf32>
    %289 = tpu.concatenate %287, %288 in 0 : vector<2x32xf32>, vector<2x32xf32> -> vector<4x32xf32>
    %c5 = arith.constant 5 : index
    %c0_315 = arith.constant 0 : index
    %290 = tpu.strided_load %arg14[%c5, %c0_315] {strides = array<i32: 2, 1>} : memref<25x32xf32, #tpu.memory_space<vmem>>, vector<2x32xf32>
    %c15 = arith.constant 15 : index
    %c0_316 = arith.constant 0 : index
    %291 = tpu.strided_load %arg14[%c15, %c0_316] {strides = array<i32: 2, 1>} : memref<25x32xf32, #tpu.memory_space<vmem>>, vector<2x32xf32>
    %292 = tpu.concatenate %290, %291 in 0 : vector<2x32xf32>, vector<2x32xf32> -> vector<4x32xf32>
    %c6 = arith.constant 6 : index
    %c0_317 = arith.constant 0 : index
    %293 = tpu.strided_load %arg14[%c6, %c0_317] {strides = array<i32: 2, 1>} : memref<25x32xf32, #tpu.memory_space<vmem>>, vector<2x32xf32>
    %c16 = arith.constant 16 : index
    %c0_318 = arith.constant 0 : index
    %294 = tpu.strided_load %arg14[%c16, %c0_318] {strides = array<i32: 2, 1>} : memref<25x32xf32, #tpu.memory_space<vmem>>, vector<2x32xf32>
    %295 = tpu.concatenate %293, %294 in 0 : vector<2x32xf32>, vector<2x32xf32> -> vector<4x32xf32>
    %c7 = arith.constant 7 : index
    %c0_319 = arith.constant 0 : index
    %296 = tpu.strided_load %arg14[%c7, %c0_319] {strides = array<i32: 2, 1>} : memref<25x32xf32, #tpu.memory_space<vmem>>, vector<2x32xf32>
    %c17 = arith.constant 17 : index
    %c0_320 = arith.constant 0 : index
    %297 = tpu.strided_load %arg14[%c17, %c0_320] {strides = array<i32: 2, 1>} : memref<25x32xf32, #tpu.memory_space<vmem>>, vector<2x32xf32>
    %298 = tpu.concatenate %296, %297 in 0 : vector<2x32xf32>, vector<2x32xf32> -> vector<4x32xf32>
    %c10_321 = arith.constant 10 : index
    %c0_322 = arith.constant 0 : index
    %299 = tpu.strided_load %arg14[%c10_321, %c0_322] {strides = array<i32: 2, 1>} : memref<25x32xf32, #tpu.memory_space<vmem>>, vector<2x32xf32>
    %c20 = arith.constant 20 : index
    %c0_323 = arith.constant 0 : index
    %300 = tpu.strided_load %arg14[%c20, %c0_323] {strides = array<i32: 2, 1>} : memref<25x32xf32, #tpu.memory_space<vmem>>, vector<2x32xf32>
    %301 = tpu.concatenate %299, %300 in 0 : vector<2x32xf32>, vector<2x32xf32> -> vector<4x32xf32>
    %c11_324 = arith.constant 11 : index
    %c0_325 = arith.constant 0 : index
    %302 = tpu.strided_load %arg14[%c11_324, %c0_325] {strides = array<i32: 2, 1>} : memref<25x32xf32, #tpu.memory_space<vmem>>, vector<2x32xf32>
    %c21 = arith.constant 21 : index
    %c0_326 = arith.constant 0 : index
    %303 = tpu.strided_load %arg14[%c21, %c0_326] {strides = array<i32: 2, 1>} : memref<25x32xf32, #tpu.memory_space<vmem>>, vector<2x32xf32>
    %304 = tpu.concatenate %302, %303 in 0 : vector<2x32xf32>, vector<2x32xf32> -> vector<4x32xf32>
    %c12_327 = arith.constant 12 : index
    %c0_328 = arith.constant 0 : index
    %305 = tpu.strided_load %arg14[%c12_327, %c0_328] {strides = array<i32: 2, 1>} : memref<25x32xf32, #tpu.memory_space<vmem>>, vector<2x32xf32>
    %c22_329 = arith.constant 22 : index
    %c0_330 = arith.constant 0 : index
    %306 = tpu.strided_load %arg14[%c22_329, %c0_330] {strides = array<i32: 2, 1>} : memref<25x32xf32, #tpu.memory_space<vmem>>, vector<2x32xf32>
    %307 = tpu.concatenate %305, %306 in 0 : vector<2x32xf32>, vector<2x32xf32> -> vector<4x32xf32>
    %308 = tpu.concatenate %283, %286, %289, %292, %295, %298, %301, %304, %307 in 1 : vector<4x32xf32>, vector<4x32xf32>, vector<4x32xf32>, vector<4x32xf32>, vector<4x32xf32>, vector<4x32xf32>, vector<4x32xf32>, vector<4x32xf32>, vector<4x32xf32> -> vector<4x288xf32>
    %309 = arith.truncf %308 : vector<4x288xf32> to vector<4x288xbf16>
    %c0_331 = arith.constant 0 : index
    %c0_332 = arith.constant 0 : index
    %310 = vector.load %arg6[%c0_331, %c0_332] : memref<288x64xbf16, #tpu.memory_space<vmem>>, vector<288x64xbf16>
    %cst_333 = arith.constant dense<0.000000e+00> : vector<4x64xf32>
    %311 = tpu.matmul %309, %310, %cst_333 {dimension_numbers = #tpu.dot_dimension_numbers<[1], [0], [0], [1], [0, 0, 1, 1], [], []>} : vector<4x288xbf16>, vector<288x64xbf16>, vector<4x64xf32> -> vector<4x64xf32>
    %c0_334 = arith.constant 0 : index
    %c0_335 = arith.constant 0 : index
    %312 = vector.load %arg7[%c0_334, %c0_335] : memref<1x64xf32, #tpu.memory_space<vmem>>, vector<1x64xf32>
    %313 = vector.broadcast %312 : vector<1x64xf32> to vector<4x64xf32>
    %314 = arith.addf %311, %313 : vector<4x64xf32>
    %cst_336 = arith.constant 0.000000e+00 : f32
    %315 = vector.broadcast %cst_336 : f32 to vector<4x64xf32>
    %316 = arith.maximumf %314, %315 : vector<4x64xf32>
    %c0_337 = arith.constant 0 : index
    %c0_338 = arith.constant 0 : index
    %317 = vector.load %arg15[%c0_337, %c0_338] : memref<4x64xf32, #tpu.memory_space<vmem>>, vector<4x64xf32>
    tpu.vector_store %arg15[%c0_337, %c0_338], %316 {strides = array<i32>} : memref<4x64xf32, #tpu.memory_space<vmem>>, vector<4x64xf32>,
    %c0_339 = arith.constant 0 : index
    %c0_340 = arith.constant 0 : index
    %318 = vector.load %arg15[%c0_339, %c0_340] : memref<4x64xf32, #tpu.memory_space<vmem>>, vector<1x64xf32>
    %c1_341 = arith.constant 1 : index
    %c0_342 = arith.constant 0 : index
    %319 = vector.load %arg15[%c1_341, %c0_342] : memref<4x64xf32, #tpu.memory_space<vmem>>, vector<1x64xf32>
    %c2_343 = arith.constant 2 : index
    %c0_344 = arith.constant 0 : index
    %320 = vector.load %arg15[%c2_343, %c0_344] : memref<4x64xf32, #tpu.memory_space<vmem>>, vector<1x64xf32>
    %c3 = arith.constant 3 : index
    %c0_345 = arith.constant 0 : index
    %321 = vector.load %arg15[%c3, %c0_345] : memref<4x64xf32, #tpu.memory_space<vmem>>, vector<1x64xf32>
    %322 = tpu.concatenate %318, %319, %320, %321 in 1 : vector<1x64xf32>, vector<1x64xf32>, vector<1x64xf32>, vector<1x64xf32> -> vector<1x256xf32>
    %323 = arith.truncf %322 : vector<1x256xf32> to vector<1x256xbf16>
    %c0_346 = arith.constant 0 : index
    %c0_347 = arith.constant 0 : index
    %324 = vector.load %arg8[%c0_346, %c0_347] : memref<256x128xbf16, #tpu.memory_space<vmem>>, vector<256x128xbf16>
    %cst_348 = arith.constant dense<0.000000e+00> : vector<1x128xf32>
    %325 = tpu.matmul %323, %324, %cst_348 {dimension_numbers = #tpu.dot_dimension_numbers<[1], [0], [0], [1], [0, 0, 1, 1], [], []>} : vector<1x256xbf16>, vector<256x128xbf16>, vector<1x128xf32> -> vector<1x128xf32>
    %c0_349 = arith.constant 0 : index
    %c0_350 = arith.constant 0 : index
    %326 = vector.load %arg9[%c0_349, %c0_350] : memref<1x128xf32, #tpu.memory_space<vmem>>, vector<1x128xf32>
    %327 = arith.addf %325, %326 : vector<1x128xf32>
    %cst_351 = arith.constant 0.000000e+00 : f32
    %328 = vector.broadcast %cst_351 : f32 to vector<1x128xf32>
    %329 = arith.maximumf %327, %328 : vector<1x128xf32>
    %330 = arith.truncf %329 : vector<1x128xf32> to vector<1x128xbf16>
    %c0_352 = arith.constant 0 : index
    %c0_353 = arith.constant 0 : index
    %331 = vector.load %arg10[%c0_352, %c0_353] : memref<128x6xbf16, #tpu.memory_space<vmem>>, vector<128x6xbf16>
    %cst_354 = arith.constant dense<0.000000e+00> : vector<1x6xf32>
    %332 = tpu.matmul %330, %331, %cst_354 {dimension_numbers = #tpu.dot_dimension_numbers<[1], [0], [0], [1], [0, 0, 1, 1], [], []>} : vector<1x128xbf16>, vector<128x6xbf16>, vector<1x6xf32> -> vector<1x6xf32>
    %c0_355 = arith.constant 0 : index
    %c0_356 = arith.constant 0 : index
    %333 = vector.load %arg11[%c0_355, %c0_356] : memref<1x6xf32, #tpu.memory_space<vmem>>, vector<1x6xf32>
    %334 = arith.addf %332, %333 : vector<1x6xf32>
    %335 = tpu.iota {dimensions = array<i32: 1>} : vector<1x6xi32>
    %cst_357 = arith.constant 0.000000e+00 : f32
    %336 = vector.broadcast %cst_357 : f32 to vector<1x6xf32>
    %337 = arith.subf %336, %334 : vector<1x6xf32>
    %338 = math.exp %337 : vector<1x6xf32>
    %cst_358 = arith.constant 1.000000e+00 : f32
    %339 = vector.broadcast %cst_358 : f32 to vector<1x6xf32>
    %340 = arith.addf %339, %338 : vector<1x6xf32>
    %cst_359 = arith.constant 1.000000e+00 : f32
    %341 = vector.broadcast %cst_359 : f32 to vector<1x6xf32>
    %342 = arith.divf %341, %340 : vector<1x6xf32>
    %c2_i32 = arith.constant 2 : i32
    %343 = vector.broadcast %c2_i32 : i32 to vector<1x6xi32>
    %344 = arith.cmpi slt, %335, %343 : vector<1x6xi32>
    %345 = arith.select %344, %342, %334 : vector<1x6xi1>, vector<1x6xf32>
    %c0_360 = arith.constant 0 : index
    %c0_361 = arith.constant 0 : index
    %c0_362 = arith.constant 0 : index
    %346 = vector.load %arg12[%c0_360, %c0_361, %c0_362] : memref<1x1x6xf32, #tpu.memory_space<vmem>>, vector<1x1x6xf32>
    %347 = vector.shape_cast %346 : vector<1x1x6xf32> to vector<1x6xf32>
    %348 = vector.shape_cast %345 : vector<1x6xf32> to vector<1x1x6xf32>
    tpu.vector_store %arg12[%c0_360, %c0_361, %c0_362], %348 {strides = array<i32>} : memref<1x1x6xf32, #tpu.memory_space<vmem>>, vector<1x1x6xf32>,
    return
  }
  func.func @transform_0(%arg0: i32) -> (i32, i32, i32) {
    %c0_i32 = arith.constant 0 : i32
    %c0_i32_0 = arith.constant 0 : i32
    %c0_i32_1 = arith.constant 0 : i32
    return %arg0, %c0_i32, %c0_i32_0 : i32, i32, i32
  }
  func.func @transform_1(%arg0: i32) -> (i32, i32) {
    %c0_i32 = arith.constant 0 : i32
    %c0_i32_0 = arith.constant 0 : i32
    %c0_i32_1 = arith.constant 0 : i32
    return %c0_i32, %c0_i32_0 : i32, i32
  }
  func.func @transform_2(%arg0: i32) -> (i32, i32) {
    %c0_i32 = arith.constant 0 : i32
    %c0_i32_0 = arith.constant 0 : i32
    %c0_i32_1 = arith.constant 0 : i32
    return %c0_i32, %c0_i32_0 : i32, i32
  }
  func.func @transform_3(%arg0: i32) -> (i32, i32) {
    %c0_i32 = arith.constant 0 : i32
    %c0_i32_0 = arith.constant 0 : i32
    %c0_i32_1 = arith.constant 0 : i32
    return %c0_i32, %c0_i32_0 : i32, i32
  }
  func.func @transform_4(%arg0: i32) -> (i32, i32) {
    %c0_i32 = arith.constant 0 : i32
    %c0_i32_0 = arith.constant 0 : i32
    %c0_i32_1 = arith.constant 0 : i32
    return %c0_i32, %c0_i32_0 : i32, i32
  }
  func.func @transform_5(%arg0: i32) -> (i32, i32) {
    %c0_i32 = arith.constant 0 : i32
    %c0_i32_0 = arith.constant 0 : i32
    %c0_i32_1 = arith.constant 0 : i32
    return %c0_i32, %c0_i32_0 : i32, i32
  }
  func.func @transform_6(%arg0: i32) -> (i32, i32) {
    %c0_i32 = arith.constant 0 : i32
    %c0_i32_0 = arith.constant 0 : i32
    %c0_i32_1 = arith.constant 0 : i32
    return %c0_i32, %c0_i32_0 : i32, i32
  }
  func.func @transform_7(%arg0: i32) -> (i32, i32) {
    %c0_i32 = arith.constant 0 : i32
    %c0_i32_0 = arith.constant 0 : i32
    %c0_i32_1 = arith.constant 0 : i32
    return %c0_i32, %c0_i32_0 : i32, i32
  }
  func.func @transform_8(%arg0: i32) -> (i32, i32) {
    %c0_i32 = arith.constant 0 : i32
    %c0_i32_0 = arith.constant 0 : i32
    %c0_i32_1 = arith.constant 0 : i32
    return %c0_i32, %c0_i32_0 : i32, i32
  }
  func.func @transform_9(%arg0: i32) -> (i32, i32) {
    %c0_i32 = arith.constant 0 : i32
    %c0_i32_0 = arith.constant 0 : i32
    %c0_i32_1 = arith.constant 0 : i32
    return %c0_i32, %c0_i32_0 : i32, i32
  }
  func.func @transform_10(%arg0: i32) -> (i32, i32) {
    %c0_i32 = arith.constant 0 : i32
    %c0_i32_0 = arith.constant 0 : i32
    %c0_i32_1 = arith.constant 0 : i32
    return %c0_i32, %c0_i32_0 : i32, i32
  }
  func.func @transform_11(%arg0: i32) -> (i32, i32, i32) {
    %c0_i32 = arith.constant 0 : i32
    %c0_i32_0 = arith.constant 0 : i32
    %c0_i32_1 = arith.constant 0 : i32
    return %arg0, %c0_i32, %c0_i32_0 : i32, i32, i32
  }
}

</mosaic_0001>

<llo_original>
// kernel: pnet_pallas.1
$region0: #{pnet_pallas.1}
  #allocation0 [shape = 'u32[]', space=smem, size = 0x4, offset = 0x4, fixed_abs, tag = 'smem constant byte address 0x4 - core index']
  #allocation1 [shape = 'u32[72,128]{1,0:T(1,128)}', space=vmem, size = 0x9000, scoped, tag = 'internal scratch']
  #allocation2 [shape = 'f32[121,16]{1,0:T(8,128)}', space=vmem, size = 0x10000, scoped, tag = 'scratch operand']
  #allocation3 [shape = 'f32[25,32]{1,0:T(8,128)}', space=vmem, size = 0x4000, scoped, tag = 'scratch operand']
  #allocation4 [shape = 'f32[4,64]{1,0:T(4,128)}', space=vmem, size = 0x800, scoped, tag = 'scratch operand']
  %s0 = inlined_call_operand.vmem [shape: f32[2,576,3], index: 0, kind: input, shape index: {}]
  %s1 = inlined_call_operand.vmem [shape: bf16[27,16], index: 1, kind: input, shape index: {}]
  %s2 = inlined_call_operand.vmem [shape: f32[1,16], index: 2, kind: input, shape index: {}]
  %s3 = inlined_call_operand.vmem [shape: bf16[144,32], index: 3, kind: input, shape index: {}]
  %s4 = inlined_call_operand.vmem [shape: f32[1,32], index: 4, kind: input, shape index: {}]
  %s5 = inlined_call_operand.vmem [shape: bf16[288,64], index: 5, kind: input, shape index: {}]
  %s6 = inlined_call_operand.vmem [shape: f32[1,64], index: 6, kind: input, shape index: {}]
  %s7 = inlined_call_operand.vmem [shape: bf16[256,128], index: 7, kind: input, shape index: {}]
  %s8 = inlined_call_operand.vmem [shape: f32[1,128], index: 8, kind: input, shape index: {}]
  %s9 = inlined_call_operand.vmem [shape: bf16[128,6], index: 9, kind: input, shape index: {}]
  %s10 = inlined_call_operand.vmem [shape: f32[1,6], index: 10, kind: input, shape index: {}]
  %s11 = inlined_call_operand.vmem [shape: f32[2,1,6], index: 11, kind: output, shape index: {}]
  %s12 = sld [smem:[#allocation0]]
  $region77: #{pnet_pallas.1} parent=0
    _
  %s14 = ssub.s32 1, %s12
  %s15 = scalar_select 0, %s14, %s12
  loop: start=0, step=1, limit=4
  $region2: #{pnet_pallas.1} parent=0 // loop_pre_header
    _
  $region3: #{pnet_pallas.1} parent=0 // loop_header
    %s17 = sphi 0, %s21
    %p18 = scmp.ge.s32.totalorder %s17, 4
    %s27 = sphi 0, %s29
    %s30 = sphi 0, %s27
    %s31 = sphi 0, %s30
    %s47 = sphi 0, %s31
    %s51 = sphi 0, %s51
    %s53 = sphi 0, %s51
    %s54 = sphi 0, %s53
    %s68 = sphi 0, %s54
    %s72 = sphi 0, %s72
    %s74 = sphi 0, %s72
    %s75 = sphi 0, %s74
    %s89 = sphi 0, %s75
    %s93 = sphi 0, %s93
    %s95 = sphi 0, %s93
    %s96 = sphi 0, %s95
    %s110 = sphi 0, %s96
    %s114 = sphi 0, %s114
    %s116 = sphi 0, %s114
    %s117 = sphi 0, %s116
    %s131 = sphi 0, %s117
    %s135 = sphi 0, %s135
    %s137 = sphi 0, %s135
    %s138 = sphi 0, %s137
    %s152 = sphi 0, %s138
    %s156 = sphi 0, %s156
    %s158 = sphi 0, %s156
    %s159 = sphi 0, %s158
    %s173 = sphi 0, %s159
    %s177 = sphi 0, %s177
    %s179 = sphi 0, %s177
    %s180 = sphi 0, %s179
    %s194 = sphi 0, %s180
    %s198 = sphi 0, %s198
    %s200 = sphi 0, %s198
    %s201 = sphi 0, %s200
    %s215 = sphi 0, %s201
    %s219 = sphi 0, %s219
    %s221 = sphi 0, %s219
    %s222 = sphi 0, %s221
    %s236 = sphi 0, %s222
    %s240 = sphi 0, %s240
    %s242 = sphi 0, %s240
    %s243 = sphi 0, %s242
    %s257 = sphi 0, %s243
    %s263 = sphi 0, %s265
    %s266 = sphi 0, %s263
    %s267 = sphi 0, %s266
    %s283 = sphi 0, %s267
  $region4: #{pnet_pallas.1} parent=0 // loop_header_branch
    %20 = sbr.rel (%p18) target = $region8
  $region5: #{pnet_pallas.1} parent=0 // loop_body
    %s22 = ssub.s32 %s17, 1
    %s23 = ssub.s32 %s17, 2
    %s24 = sadd.s32 %s17, 1
    %s25 = ssub.s32 %s17, %s24
    %p26 = scmp.eq.s32.totalorder %s25, 0
    %s28 = sadd.s32 %s27, 1
    %s29 = scalar_select %p26, %s27, %s28
    %p32 = pneg %p26
    %p33 = scmp.eq.s32.totalorder %s17, 1
    %p34 = por %p32, %p33
    %p35 = scmp.ne.s32.totalorder %s27, %s30
    %p36 = scmp.eq.s32.totalorder %s17, 0
    %p37 = por %p35, %p36
    %p38 = scmp.ne.s32.totalorder %s27, %s30
    %p39 = scmp.eq.s32.totalorder %s22, 1
    %p40 = por %p38, %p39
    %p41 = scmp.ne.s32.totalorder %s30, %s31
    %p42 = scmp.eq.s32.totalorder %s22, 0
    %p43 = por %p41, %p42
    %p44 = scmp.ne.s32.totalorder %s30, %s31
    %p45 = scmp.eq.s32.totalorder %s23, 1
    %p46 = por %p44, %p45
    %p48 = scmp.ne.s32.totalorder %s31, %s47
    %p49 = scmp.eq.s32.totalorder %s23, 0
    %p50 = por %p48, %p49
    %s52 = sadd.s32 %s51, 1
    %p55 = scmp.eq.s32.totalorder %s17, 1
    %p56 = scmp.ne.s32.totalorder %s51, %s53
    %p57 = scmp.eq.s32.totalorder %s17, 0
    %p58 = por %p56, %p57
    %p59 = scmp.ne.s32.totalorder %s51, %s53
    %p60 = scmp.eq.s32.totalorder %s22, 1
    %p61 = por %p59, %p60
    %p62 = scmp.ne.s32.totalorder %s53, %s54
    %p63 = scmp.eq.s32.totalorder %s22, 0
    %p64 = por %p62, %p63
    %p65 = scmp.ne.s32.totalorder %s53, %s54
    %p66 = scmp.eq.s32.totalorder %s23, 1
    %p67 = por %p65, %p66
    %p69 = scmp.ne.s32.totalorder %s54, %s68
    %p70 = scmp.eq.s32.totalorder %s23, 0
    %p71 = por %p69, %p70
    %s73 = sadd.s32 %s72, 1
    %p76 = scmp.eq.s32.totalorder %s17, 1
    %p77 = scmp.ne.s32.totalorder %s72, %s74
    %p78 = scmp.eq.s32.totalorder %s17, 0
    %p79 = por %p77, %p78
    %p80 = scmp.ne.s32.totalorder %s72, %s74
    %p81 = scmp.eq.s32.totalorder %s22, 1
    %p82 = por %p80, %p81
    %p83 = scmp.ne.s32.totalorder %s74, %s75
    %p84 = scmp.eq.s32.totalorder %s22, 0
    %p85 = por %p83, %p84
    %p86 = scmp.ne.s32.totalorder %s74, %s75
    %p87 = scmp.eq.s32.totalorder %s23, 1
    %p88 = por %p86, %p87
    %p90 = scmp.ne.s32.totalorder %s75, %s89
    %p91 = scmp.eq.s32.totalorder %s23, 0
    %p92 = por %p90, %p91
    %s94 = sadd.s32 %s93, 1
    %p97 = scmp.eq.s32.totalorder %s17, 1
    %p98 = scmp.ne.s32.totalorder %s93, %s95
    %p99 = scmp.eq.s32.totalorder %s17, 0
    %p100 = por %p98, %p99
    %p101 = scmp.ne.s32.totalorder %s93, %s95
    %p102 = scmp.eq.s32.totalorder %s22, 1
    %p103 = por %p101, %p102
    %p104 = scmp.ne.s32.totalorder %s95, %s96
    %p105 = scmp.eq.s32.totalorder %s22, 0
    %p106 = por %p104, %p105
    %p107 = scmp.ne.s32.totalorder %s95, %s96
    %p108 = scmp.eq.s32.totalorder %s23, 1
    %p109 = por %p107, %p108
    %p111 = scmp.ne.s32.totalorder %s96, %s110
    %p112 = scmp.eq.s32.totalorder %s23, 0
    %p113 = por %p111, %p112
    %s115 = sadd.s32 %s114, 1
    %p118 = scmp.eq.s32.totalorder %s17, 1
    %p119 = scmp.ne.s32.totalorder %s114, %s116
    %p120 = scmp.eq.s32.totalorder %s17, 0
    %p121 = por %p119, %p120
    %p122 = scmp.ne.s32.totalorder %s114, %s116
    %p123 = scmp.eq.s32.totalorder %s22, 1
    %p124 = por %p122, %p123
    %p125 = scmp.ne.s32.totalorder %s116, %s117
    %p126 = scmp.eq.s32.totalorder %s22, 0
    %p127 = por %p125, %p126
    %p128 = scmp.ne.s32.totalorder %s116, %s117
    %p129 = scmp.eq.s32.totalorder %s23, 1
    %p130 = por %p128, %p129
    %p132 = scmp.ne.s32.totalorder %s117, %s131
    %p133 = scmp.eq.s32.totalorder %s23, 0
    %p134 = por %p132, %p133
    %s136 = sadd.s32 %s135, 1
    %p139 = scmp.eq.s32.totalorder %s17, 1
    %p140 = scmp.ne.s32.totalorder %s135, %s137
    %p141 = scmp.eq.s32.totalorder %s17, 0
    %p142 = por %p140, %p141
    %p143 = scmp.ne.s32.totalorder %s135, %s137
    %p144 = scmp.eq.s32.totalorder %s22, 1
    %p145 = por %p143, %p144
    %p146 = scmp.ne.s32.totalorder %s137, %s138
    %p147 = scmp.eq.s32.totalorder %s22, 0
    %p148 = por %p146, %p147
    %p149 = scmp.ne.s32.totalorder %s137, %s138
    %p150 = scmp.eq.s32.totalorder %s23, 1
    %p151 = por %p149, %p150
    %p153 = scmp.ne.s32.totalorder %s138, %s152
    %p154 = scmp.eq.s32.totalorder %s23, 0
    %p155 = por %p153, %p154
    %s157 = sadd.s32 %s156, 1
    %p160 = scmp.eq.s32.totalorder %s17, 1
    %p161 = scmp.ne.s32.totalorder %s156, %s158
    %p162 = scmp.eq.s32.totalorder %s17, 0
    %p163 = por %p161, %p162
    %p164 = scmp.ne.s32.totalorder %s156, %s158
    %p165 = scmp.eq.s32.totalorder %s22, 1
    %p166 = por %p164, %p165
    %p167 = scmp.ne.s32.totalorder %s158, %s159
    %p168 = scmp.eq.s32.totalorder %s22, 0
    %p169 = por %p167, %p168
    %p170 = scmp.ne.s32.totalorder %s158, %s159
    %p171 = scmp.eq.s32.totalorder %s23, 1
    %p172 = por %p170, %p171
    %p174 = scmp.ne.s32.totalorder %s159, %s173
    %p175 = scmp.eq.s32.totalorder %s23, 0
    %p176 = por %p174, %p175
    %s178 = sadd.s32 %s177, 1
    %p181 = scmp.eq.s32.totalorder %s17, 1
    %p182 = scmp.ne.s32.totalorder %s177, %s179
    %p183 = scmp.eq.s32.totalorder %s17, 0
    %p184 = por %p182, %p183
    %p185 = scmp.ne.s32.totalorder %s177, %s179
    %p186 = scmp.eq.s32.totalorder %s22, 1
    %p187 = por %p185, %p186
    %p188 = scmp.ne.s32.totalorder %s179, %s180
    %p189 = scmp.eq.s32.totalorder %s22, 0
    %p190 = por %p188, %p189
    %p191 = scmp.ne.s32.totalorder %s179, %s180
    %p192 = scmp.eq.s32.totalorder %s23, 1
    %p193 = por %p191, %p192
    %p195 = scmp.ne.s32.totalorder %s180, %s194
    %p196 = scmp.eq.s32.totalorder %s23, 0
    %p197 = por %p195, %p196
    %s199 = sadd.s32 %s198, 1
    %p202 = scmp.eq.s32.totalorder %s17, 1
    %p203 = scmp.ne.s32.totalorder %s198, %s200
    %p204 = scmp.eq.s32.totalorder %s17, 0
    %p205 = por %p203, %p204
    %p206 = scmp.ne.s32.totalorder %s198, %s200
    %p207 = scmp.eq.s32.totalorder %s22, 1
    %p208 = por %p206, %p207
    %p209 = scmp.ne.s32.totalorder %s200, %s201
    %p210 = scmp.eq.s32.totalorder %s22, 0
    %p211 = por %p209, %p210
    %p212 = scmp.ne.s32.totalorder %s200, %s201
    %p213 = scmp.eq.s32.totalorder %s23, 1
    %p214 = por %p212, %p213
    %p216 = scmp.ne.s32.totalorder %s201, %s215
    %p217 = scmp.eq.s32.totalorder %s23, 0
    %p218 = por %p216, %p217
    %s220 = sadd.s32 %s219, 1
    %p223 = scmp.eq.s32.totalorder %s17, 1
    %p224 = scmp.ne.s32.totalorder %s219, %s221
    %p225 = scmp.eq.s32.totalorder %s17, 0
    %p226 = por %p224, %p225
    %p227 = scmp.ne.s32.totalorder %s219, %s221
    %p228 = scmp.eq.s32.totalorder %s22, 1
    %p229 = por %p227, %p228
    %p230 = scmp.ne.s32.totalorder %s221, %s222
    %p231 = scmp.eq.s32.totalorder %s22, 0
    %p232 = por %p230, %p231
    %p233 = scmp.ne.s32.totalorder %s221, %s222
    %p234 = scmp.eq.s32.totalorder %s23, 1
    %p235 = por %p233, %p234
    %p237 = scmp.ne.s32.totalorder %s222, %s236
    %p238 = scmp.eq.s32.totalorder %s23, 0
    %p239 = por %p237, %p238
    %s241 = sadd.s32 %s240, 1
    %p244 = scmp.eq.s32.totalorder %s17, 1
    %p245 = scmp.ne.s32.totalorder %s240, %s242
    %p246 = scmp.eq.s32.totalorder %s17, 0
    %p247 = por %p245, %p246
    %p248 = scmp.ne.s32.totalorder %s240, %s242
    %p249 = scmp.eq.s32.totalorder %s22, 1
    %p250 = por %p248, %p249
    %p251 = scmp.ne.s32.totalorder %s242, %s243
    %p252 = scmp.eq.s32.totalorder %s22, 0
    %p253 = por %p251, %p252
    %p254 = scmp.ne.s32.totalorder %s242, %s243
    %p255 = scmp.eq.s32.totalorder %s23, 1
    %p256 = por %p254, %p255
    %p258 = scmp.ne.s32.totalorder %s243, %s257
    %p259 = scmp.eq.s32.totalorder %s23, 0
    %p260 = por %p258, %p259
    %s261 = ssub.s32 %s17, %s24
    %p262 = scmp.eq.s32.totalorder %s261, 0
    %s264 = sadd.s32 %s263, 1
    %s265 = scalar_select %p262, %s263, %s264
    %p268 = pneg %p262
    %p269 = scmp.eq.s32.totalorder %s17, 1
    %p270 = por %p268, %p269
    %p271 = scmp.ne.s32.totalorder %s263, %s266
    %p272 = scmp.eq.s32.totalorder %s17, 0
    %p273 = por %p271, %p272
    %p274 = scmp.ne.s32.totalorder %s263, %s266
    %p275 = scmp.eq.s32.totalorder %s22, 1
    %p276 = por %p274, %p275
    %p277 = scmp.ne.s32.totalorder %s266, %s267
    %p278 = scmp.eq.s32.totalorder %s22, 0
    %p279 = por %p277, %p278
    %p280 = scmp.ne.s32.totalorder %s266, %s267
    %p281 = scmp.eq.s32.totalorder %s23, 1
    %p282 = por %p280, %p281
    %p284 = scmp.ne.s32.totalorder %s267, %s283
    %p285 = scmp.eq.s32.totalorder %s23, 0
    %p286 = por %p284, %p285
    %p287 = scmp.le.s32.totalorder 1, %s17
    %p288 = scmp.lt.s32.totalorder %s17, 3
    %p289 = pnand %p287, %p288
    %p290 = pneg %p289
    // Predicated region
    $region9: #{pnet_pallas.1} parent=5 // pred_check
      _
    $region10: #{pnet_pallas.1} parent=5 // pred_check_branch
      %292 = sbr.rel (%p289) target = $region12
    $region11: #{pnet_pallas.1} parent=5 // pred_region
      %s293 = ssub.s32 %s17, 1
      // Predicated region
      $region13: #{pnet_pallas.1} parent=11 // pred_check
        %p294 = pneg %p64
      $region14: #{pnet_pallas.1} parent=11 // pred_check_branch
        %296 = sbr.rel (%p294) target = $region16
      $region15: #{pnet_pallas.1} parent=11 // pred_region
        _
      $region16: #{pnet_pallas.1} parent=11 // pred_fallthru
        _
      // Predicated region
      $region17: #{pnet_pallas.1} parent=11 // pred_check
        %p297 = pneg %p85
      $region18: #{pnet_pallas.1} parent=11 // pred_check_branch
        %299 = sbr.rel (%p297) target = $region20
      $region19: #{pnet_pallas.1} parent=11 // pred_region
        _
      $region20: #{pnet_pallas.1} parent=11 // pred_fallthru
        _
      // Predicated region
      $region21: #{pnet_pallas.1} parent=11 // pred_check
        %p300 = pneg %p106
      $region22: #{pnet_pallas.1} parent=11 // pred_check_branch
        %302 = sbr.rel (%p300) target = $region24
      $region23: #{pnet_pallas.1} parent=11 // pred_region
        _
      $region24: #{pnet_pallas.1} parent=11 // pred_fallthru
        _
      // Predicated region
      $region25: #{pnet_pallas.1} parent=11 // pred_check
        %p303 = pneg %p127
      $region26: #{pnet_pallas.1} parent=11 // pred_check_branch
        %305 = sbr.rel (%p303) target = $region28
      $region27: #{pnet_pallas.1} parent=11 // pred_region
        _
      $region28: #{pnet_pallas.1} parent=11 // pred_fallthru
        _
      // Predicated region
      $region29: #{pnet_pallas.1} parent=11 // pred_check
        %p306 = pneg %p148
      $region30: #{pnet_pallas.1} parent=11 // pred_check_branch
        %308 = sbr.rel (%p306) target = $region32
      $region31: #{pnet_pallas.1} parent=11 // pred_region
        _
      $region32: #{pnet_pallas.1} parent=11 // pred_fallthru
        _
      // Predicated region
      $region33: #{pnet_pallas.1} parent=11 // pred_check
        %p309 = pneg %p169
      $region34: #{pnet_pallas.1} parent=11 // pred_check_branch
        %311 = sbr.rel (%p309) target = $region36
      $region35: #{pnet_pallas.1} parent=11 // pred_region
        _
      $region36: #{pnet_pallas.1} parent=11 // pred_fallthru
        _
      // Predicated region
      $region37: #{pnet_pallas.1} parent=11 // pred_check
        %p312 = pneg %p190
      $region38: #{pnet_pallas.1} parent=11 // pred_check_branch
        %314 = sbr.rel (%p312) target = $region40
      $region39: #{pnet_pallas.1} parent=11 // pred_region
        _
      $region40: #{pnet_pallas.1} parent=11 // pred_fallthru
        _
      // Predicated region
      $region41: #{pnet_pallas.1} parent=11 // pred_check
        %p315 = pneg %p211
      $region42: #{pnet_pallas.1} parent=11 // pred_check_branch
        %317 = sbr.rel (%p315) target = $region44
      $region43: #{pnet_pallas.1} parent=11 // pred_region
        _
      $region44: #{pnet_pallas.1} parent=11 // pred_fallthru
        _
      // Predicated region
      $region45: #{pnet_pallas.1} parent=11 // pred_check
        %p318 = pneg %p232
      $region46: #{pnet_pallas.1} parent=11 // pred_check_branch
        %320 = sbr.rel (%p318) target = $region48
      $region47: #{pnet_pallas.1} parent=11 // pred_region
        _
      $region48: #{pnet_pallas.1} parent=11 // pred_fallthru
        _
      // Predicated region
      $region49: #{pnet_pallas.1} parent=11 // pred_check
        %p321 = pneg %p253
      $region50: #{pnet_pallas.1} parent=11 // pred_check_branch
        %323 = sbr.rel (%p321) target = $region52
      $region51: #{pnet_pallas.1} parent=11 // pred_region
        _
      $region52: #{pnet_pallas.1} parent=11 // pred_fallthru
        _
    $region12: #{pnet_pallas.1} parent=5 // pred_fallthru
      _
    %p324 = scmp.lt.s32.totalorder %s17, 2
    // Predicated region
    $region53: #{pnet_pallas.1} parent=5 // pred_check
      %p325 = pneg %p324
    $region54: #{pnet_pallas.1} parent=5 // pred_check_branch
      %327 = sbr.rel (%p325) target = $region56
    $region55: #{pnet_pallas.1} parent=5 // pred_region
      // Predicated region
      $region57: #{pnet_pallas.1} parent=55 // pred_check
        %p328 = pneg %p37
      $region58: #{pnet_pallas.1} parent=55 // pred_check_branch
        %330 = sbr.rel (%p328) target = $region60
      $region59: #{pnet_pallas.1} parent=55 // pred_region
        %p331 = scmp.lt.s32.totalorder %s17, 1
        %s332 = scalar_select %p331, %s17, 1
        %s333 = smul.addr %s332, 72
        %s334 = smul.addr %s333, 8
        %s335 = scalar_lea.vmem %s0, %s334
      $region60: #{pnet_pallas.1} parent=55 // pred_fallthru
        _
    $region56: #{pnet_pallas.1} parent=5 // pred_fallthru
      _
    %p336 = scmp.le.s32.totalorder 1, %s17
    %p337 = scmp.lt.s32.totalorder %s17, 3
    %p338 = pnand %p336, %p337
    %p339 = pneg %p338
    // Predicated region
    $region61: #{pnet_pallas.1} parent=5 // pred_check
      _
    $region62: #{pnet_pallas.1} parent=5 // pred_check_branch
      %341 = sbr.rel (%p338) target = $region64
    $region63: #{pnet_pallas.1} parent=5 // pred_region
      %s342 = ssub.s32 %s17, 1
      %p343 = scmp.lt.s32.totalorder %s22, 1
      %s344 = scalar_select %p343, %s22, 1
      %s345 = smul.addr %s344, 72
      %s346 = smul.addr %s345, 8
      %s347 = scalar_lea.vmem %s0, %s346
      %p348 = pneg %p43
      %p349 = pneg %p40
      %p350 = pneg %p64
      %p351 = pneg %p61
      %p352 = pneg %p85
      %p353 = pneg %p82
      %p354 = pneg %p106
      %p355 = pneg %p103
      %p356 = pneg %p127
      %p357 = pneg %p124
      %p358 = pneg %p148
      %p359 = pneg %p145
      %p360 = pneg %p169
      %p361 = pneg %p166
      %p362 = pneg %p190
      %p363 = pneg %p187
      %p364 = pneg %p211
      %p365 = pneg %p208
      %p366 = pneg %p232
      %p367 = pneg %p229
      %p368 = pneg %p253
      %p369 = pneg %p250
      %p370 = pneg %p279
      %p371 = pneg %p276
      %p372 = scmp.lt.s32.totalorder %s22, 1
      %s373 = scalar_select %p372, %s22, 1
      %s374 = scalar_lea.vmem %s11, %s373
      %p375 = scmp.lt.s32.totalorder %s22, 1
      %s376 = scalar_select %p375, %s22, 1
      %s377 = smul.addr %s376, 72
      %s378 = smul.addr %s377, 8
      %s379 = scalar_lea.vmem %s0, %s378
      %p380 = scmp.lt.s32.totalorder %s22, 1
      %s381 = scalar_select %p380, %s22, 1
      %s382 = scalar_lea.vmem %s11, %s381
      %v384 = vld [vmem:[%s379] ss:$2 sm:$0xff]
      %s385 = scalar_lea.vmem %s379, 16
      %v386 = vld [vmem:[%s385] ss:$2 sm:$0x7]
      %s387 = scalar_lea.vmem %s379, 48
      %v388 = vld [vmem:[%s387] ss:$2 sm:$0xff]
      %s389 = scalar_lea.vmem %s379, 64
      %v390 = vld [vmem:[%s389] ss:$2 sm:$0x7]
      %s391 = scalar_lea.vmem %s379, 96
      %v392 = vld [vmem:[%s391] ss:$2 sm:$0xff]
      %s393 = scalar_lea.vmem %s379, 112
      %v394 = vld [vmem:[%s393] ss:$2 sm:$0x7]
      %s395 = scalar_lea.vmem %s379, 144
      %v396 = vld [vmem:[%s395] ss:$2 sm:$0xff]
      %s397 = scalar_lea.vmem %s379, 160
      %v398 = vld [vmem:[%s397] ss:$2 sm:$0x7]
      %s399 = scalar_lea.vmem %s379, 192
      %v400 = vld [vmem:[%s399] ss:$2 sm:$0xff]
      %s401 = scalar_lea.vmem %s379, 208
      %v402 = vld [vmem:[%s401] ss:$2 sm:$0x7]
      %s403 = scalar_lea.vmem %s379, 240
      %v404 = vld [vmem:[%s403] ss:$2 sm:$0xff]
      %s405 = scalar_lea.vmem %s379, 256
      %v406 = vld [vmem:[%s405] ss:$2 sm:$0x7]
      %s407 = scalar_lea.vmem %s379, 288
      %v408 = vld [vmem:[%s407] ss:$2 sm:$0xff]
      %s409 = scalar_lea.vmem %s379, 304
      %v410 = vld [vmem:[%s409] ss:$2 sm:$0x7]
      %s411 = scalar_lea.vmem %s379, 336
      %v412 = vld [vmem:[%s411] ss:$2 sm:$0xff]
      %s413 = scalar_lea.vmem %s379, 352
      %v414 = vld [vmem:[%s413] ss:$2 sm:$0x7]
      %s415 = scalar_lea.vmem %s379, 384
      %v416 = vld [vmem:[%s415] ss:$2 sm:$0xff]
      %s417 = scalar_lea.vmem %s379, 400
      %v418 = vld [vmem:[%s417] ss:$2 sm:$0x7]
      %s419 = scalar_lea.vmem %s379, 432
      %v420 = vld [vmem:[%s419] ss:$2 sm:$0xff]
      %s421 = scalar_lea.vmem %s379, 448
      %v422 = vld [vmem:[%s421] ss:$2 sm:$0x7]
      %s423 = scalar_lea.vmem %s379, 480
      %v424 = vld [vmem:[%s423] ss:$2 sm:$0xff]
      %s425 = scalar_lea.vmem %s379, 496
      %v426 = vld [vmem:[%s425] ss:$2 sm:$0x7]
      %vm429 = vcmask 1042432
      %v430 = vrot.slane %v388, 5
      %v431 = vrot.slane %v390, 5
      %v432 = vsel %vm429, %v430, %v431
      %vm437 = vcmask 1045504
      %v438 = vrot.slane %v392, 2
      %v439 = vrot.slane %v394, 2
      %v440 = vsel %vm437, %v438, %v439
      %vm446 = vcmask 1040384
      %v447 = vrot.slane %v396, 7
      %v448 = vrot.slane %v398, 7
      %v449 = vsel %vm446, %v447, %v448
      %vm454 = vcmask 1043456
      %v455 = vrot.slane %v400, 4
      %v456 = vrot.slane %v402, 4
      %v457 = vsel %vm454, %v455, %v456
      %vm462 = vcmask 1046528
      %v463 = vrot.slane %v404, 1
      %v464 = vrot.slane %v406, 1
      %v465 = vsel %vm462, %v463, %v464
      %vm471 = vcmask 1041408
      %v472 = vrot.slane %v408, 6
      %v473 = vrot.slane %v410, 6
      %v474 = vsel %vm471, %v472, %v473
      %vm479 = vcmask 1044480
      %v480 = vrot.slane %v412, 3
      %v481 = vrot.slane %v414, 3
      %v482 = vsel %vm479, %v480, %v481
      %v487 = vrot.slane %v420, 5
      %v488 = vrot.slane %v422, 5
      %v489 = vsel %vm429, %v487, %v488
      %v494 = vrot.slane %v424, 2
      %v495 = vrot.slane %v426, 2
      %v496 = vsel %vm437, %v494, %v495
      %v500 = vsel %vm429, %v386, %v430
      %v501 = vsel %vm437, %v432, %v438
      %v502 = vsel %vm446, %v439, %v447
      %v503 = vsel %vm454, %v449, %v455
      %v504 = vsel %vm462, %v457, %v463
      %v505 = vsel %vm471, %v464, %v472
      %v506 = vsel %vm479, %v474, %v480
      %v507 = vsel %vm429, %v418, %v487
      %v508 = vsel %vm437, %v489, %v494
      %s509 = scalar_lea.vmem %s379, 1
      %v510 = vld [vmem:[%s509] ss:$2 sm:$0xff]
      %s511 = scalar_lea.vmem %s379, 17
      %v512 = vld [vmem:[%s511] ss:$2 sm:$0x7]
      %s513 = scalar_lea.vmem %s379, 49
      %v514 = vld [vmem:[%s513] ss:$2 sm:$0xff]
      %s515 = scalar_lea.vmem %s379, 65
      %v516 = vld [vmem:[%s515] ss:$2 sm:$0x7]
      %s517 = scalar_lea.vmem %s379, 97
      %v518 = vld [vmem:[%s517] ss:$2 sm:$0xff]
      %s519 = scalar_lea.vmem %s379, 113
      %v520 = vld [vmem:[%s519] ss:$2 sm:$0x7]
      %s521 = scalar_lea.vmem %s379, 145
      %v522 = vld [vmem:[%s521] ss:$2 sm:$0xff]
      %s523 = scalar_lea.vmem %s379, 161
      %v524 = vld [vmem:[%s523] ss:$2 sm:$0x7]
      %s525 = scalar_lea.vmem %s379, 193
      %v526 = vld [vmem:[%s525] ss:$2 sm:$0xff]
      %s527 = scalar_lea.vmem %s379, 209
      %v528 = vld [vmem:[%s527] ss:$2 sm:$0x7]
      %s529 = scalar_lea.vmem %s379, 241
      %v530 = vld [vmem:[%s529] ss:$2 sm:$0xff]
      %s531 = scalar_lea.vmem %s379, 257
      %v532 = vld [vmem:[%s531] ss:$2 sm:$0x7]
      %s533 = scalar_lea.vmem %s379, 289
      %v534 = vld [vmem:[%s533] ss:$2 sm:$0xff]
      %s535 = scalar_lea.vmem %s379, 305
      %v536 = vld [vmem:[%s535] ss:$2 sm:$0x7]
      %s537 = scalar_lea.vmem %s379, 337
      %v538 = vld [vmem:[%s537] ss:$2 sm:$0xff]
      %s539 = scalar_lea.vmem %s379, 353
      %v540 = vld [vmem:[%s539] ss:$2 sm:$0x7]
      %s541 = scalar_lea.vmem %s379, 385
      %v542 = vld [vmem:[%s541] ss:$2 sm:$0xff]
      %s543 = scalar_lea.vmem %s379, 401
      %v544 = vld [vmem:[%s543] ss:$2 sm:$0x7]
      %s545 = scalar_lea.vmem %s379, 433
      %v546 = vld [vmem:[%s545] ss:$2 sm:$0xff]
      %s547 = scalar_lea.vmem %s379, 449
      %v548 = vld [vmem:[%s547] ss:$2 sm:$0x7]
      %s549 = scalar_lea.vmem %s379, 481
      %v550 = vld [vmem:[%s549] ss:$2 sm:$0xff]
      %s551 = scalar_lea.vmem %s379, 497
      %v552 = vld [vmem:[%s551] ss:$2 sm:$0x7]
      %v555 = vrot.slane %v514, 5
      %v556 = vrot.slane %v516, 5
      %v557 = vsel %vm429, %v555, %v556
      %v562 = vrot.slane %v518, 2
      %v563 = vrot.slane %v520, 2
      %v564 = vsel %vm437, %v562, %v563
      %v569 = vrot.slane %v522, 7
      %v570 = vrot.slane %v524, 7
      %v571 = vsel %vm446, %v569, %v570
      %v576 = vrot.slane %v526, 4
      %v577 = vrot.slane %v528, 4
      %v578 = vsel %vm454, %v576, %v577
      %v583 = vrot.slane %v530, 1
      %v584 = vrot.slane %v532, 1
      %v585 = vsel %vm462, %v583, %v584
      %v590 = vrot.slane %v534, 6
      %v591 = vrot.slane %v536, 6
      %v592 = vsel %vm471, %v590, %v591
      %v597 = vrot.slane %v538, 3
      %v598 = vrot.slane %v540, 3
      %v599 = vsel %vm479, %v597, %v598
      %v603 = vrot.slane %v546, 5
      %v604 = vrot.slane %v548, 5
      %v605 = vsel %vm429, %v603, %v604
      %v610 = vrot.slane %v550, 2
      %v611 = vrot.slane %v552, 2
      %v612 = vsel %vm437, %v610, %v611
      %v614 = vsel %vm429, %v512, %v555
      %v615 = vsel %vm437, %v557, %v562
      %v616 = vsel %vm446, %v563, %v569
      %v617 = vsel %vm454, %v571, %v576
      %v618 = vsel %vm462, %v578, %v583
      %v619 = vsel %vm471, %v584, %v590
      %v620 = vsel %vm479, %v592, %v597
      %v621 = vsel %vm429, %v544, %v603
      %v622 = vsel %vm437, %v605, %v610
      %s623 = scalar_lea.vmem %s379, 2
      %v624 = vld [vmem:[%s623] ss:$2 sm:$0xff]
      %s625 = scalar_lea.vmem %s379, 18
      %v626 = vld [vmem:[%s625] ss:$2 sm:$0x7]
      %s627 = scalar_lea.vmem %s379, 50
      %v628 = vld [vmem:[%s627] ss:$2 sm:$0xff]
      %s629 = scalar_lea.vmem %s379, 66
      %v630 = vld [vmem:[%s629] ss:$2 sm:$0x7]
      %s631 = scalar_lea.vmem %s379, 98
      %v632 = vld [vmem:[%s631] ss:$2 sm:$0xff]
      %s633 = scalar_lea.vmem %s379, 114
      %v634 = vld [vmem:[%s633] ss:$2 sm:$0x7]
      %s635 = scalar_lea.vmem %s379, 146
      %v636 = vld [vmem:[%s635] ss:$2 sm:$0xff]
      %s637 = scalar_lea.vmem %s379, 162
      %v638 = vld [vmem:[%s637] ss:$2 sm:$0x7]
      %s639 = scalar_lea.vmem %s379, 194
      %v640 = vld [vmem:[%s639] ss:$2 sm:$0xff]
      %s641 = scalar_lea.vmem %s379, 210
      %v642 = vld [vmem:[%s641] ss:$2 sm:$0x7]
      %s643 = scalar_lea.vmem %s379, 242
      %v644 = vld [vmem:[%s643] ss:$2 sm:$0xff]
      %s645 = scalar_lea.vmem %s379, 258
      %v646 = vld [vmem:[%s645] ss:$2 sm:$0x7]
      %s647 = scalar_lea.vmem %s379, 290
      %v648 = vld [vmem:[%s647] ss:$2 sm:$0xff]
      %s649 = scalar_lea.vmem %s379, 306
      %v650 = vld [vmem:[%s649] ss:$2 sm:$0x7]
      %s651 = scalar_lea.vmem %s379, 338
      %v652 = vld [vmem:[%s651] ss:$2 sm:$0xff]
      %s653 = scalar_lea.vmem %s379, 354
      %v654 = vld [vmem:[%s653] ss:$2 sm:$0x7]
      %s655 = scalar_lea.vmem %s379, 386
      %v656 = vld [vmem:[%s655] ss:$2 sm:$0xff]
      %s657 = scalar_lea.vmem %s379, 402
      %v658 = vld [vmem:[%s657] ss:$2 sm:$0x7]
      %s659 = scalar_lea.vmem %s379, 434
      %v660 = vld [vmem:[%s659] ss:$2 sm:$0xff]
      %s661 = scalar_lea.vmem %s379, 450
      %v662 = vld [vmem:[%s661] ss:$2 sm:$0x7]
      %s663 = scalar_lea.vmem %s379, 482
      %v664 = vld [vmem:[%s663] ss:$2 sm:$0xff]
      %s665 = scalar_lea.vmem %s379, 498
      %v666 = vld [vmem:[%s665] ss:$2 sm:$0x7]
      %v669 = vrot.slane %v628, 5
      %v670 = vrot.slane %v630, 5
      %v671 = vsel %vm429, %v669, %v670
      %v676 = vrot.slane %v632, 2
      %v677 = vrot.slane %v634, 2
      %v678 = vsel %vm437, %v676, %v677
      %v683 = vrot.slane %v636, 7
      %v684 = vrot.slane %v638, 7
      %v685 = vsel %vm446, %v683, %v684
      %v690 = vrot.slane %v640, 4
      %v691 = vrot.slane %v642, 4
      %v692 = vsel %vm454, %v690, %v691
      %v697 = vrot.slane %v644, 1
      %v698 = vrot.slane %v646, 1
      %v699 = vsel %vm462, %v697, %v698
      %v704 = vrot.slane %v648, 6
      %v705 = vrot.slane %v650, 6
      %v706 = vsel %vm471, %v704, %v705
      %v711 = vrot.slane %v652, 3
      %v712 = vrot.slane %v654, 3
      %v713 = vsel %vm479, %v711, %v712
      %v717 = vrot.slane %v660, 5
      %v718 = vrot.slane %v662, 5
      %v719 = vsel %vm429, %v717, %v718
      %v724 = vrot.slane %v664, 2
      %v725 = vrot.slane %v666, 2
      %v726 = vsel %vm437, %v724, %v725
      %v728 = vsel %vm429, %v626, %v669
      %v729 = vsel %vm437, %v671, %v676
      %v730 = vsel %vm446, %v677, %v683
      %v731 = vsel %vm454, %v685, %v690
      %v732 = vsel %vm462, %v692, %v697
      %v733 = vsel %vm471, %v698, %v704
      %v734 = vsel %vm479, %v706, %v711
      %v735 = vsel %vm429, %v658, %v717
      %v736 = vsel %vm437, %v719, %v724
      %s737 = scalar_lea.vmem %s379, 24
      %v738 = vld [vmem:[%s737] ss:$2 sm:$0xff]
      %s739 = scalar_lea.vmem %s379, 40
      %v740 = vld [vmem:[%s739] ss:$2 sm:$0x7]
      %s741 = scalar_lea.vmem %s379, 72
      %v742 = vld [vmem:[%s741] ss:$2 sm:$0xff]
      %s743 = scalar_lea.vmem %s379, 88
      %v744 = vld [vmem:[%s743] ss:$2 sm:$0x7]
      %s745 = scalar_lea.vmem %s379, 120
      %v746 = vld [vmem:[%s745] ss:$2 sm:$0xff]
      %s747 = scalar_lea.vmem %s379, 136
      %v748 = vld [vmem:[%s747] ss:$2 sm:$0x7]
      %s749 = scalar_lea.vmem %s379, 168
      %v750 = vld [vmem:[%s749] ss:$2 sm:$0xff]
      %s751 = scalar_lea.vmem %s379, 184
      %v752 = vld [vmem:[%s751] ss:$2 sm:$0x7]
      %s753 = scalar_lea.vmem %s379, 216
      %v754 = vld [vmem:[%s753] ss:$2 sm:$0xff]
      %s755 = scalar_lea.vmem %s379, 232
      %v756 = vld [vmem:[%s755] ss:$2 sm:$0x7]
      %s757 = scalar_lea.vmem %s379, 264
      %v758 = vld [vmem:[%s757] ss:$2 sm:$0xff]
      %s759 = scalar_lea.vmem %s379, 280
      %v760 = vld [vmem:[%s759] ss:$2 sm:$0x7]
      %s761 = scalar_lea.vmem %s379, 312
      %v762 = vld [vmem:[%s761] ss:$2 sm:$0xff]
      %s763 = scalar_lea.vmem %s379, 328
      %v764 = vld [vmem:[%s763] ss:$2 sm:$0x7]
      %s765 = scalar_lea.vmem %s379, 360
      %v766 = vld [vmem:[%s765] ss:$2 sm:$0xff]
      %s767 = scalar_lea.vmem %s379, 376
      %v768 = vld [vmem:[%s767] ss:$2 sm:$0x7]
      %s769 = scalar_lea.vmem %s379, 408
      %v770 = vld [vmem:[%s769] ss:$2 sm:$0xff]
      %s771 = scalar_lea.vmem %s379, 424
      %v772 = vld [vmem:[%s771] ss:$2 sm:$0x7]
      %s773 = scalar_lea.vmem %s379, 456
      %v774 = vld [vmem:[%s773] ss:$2 sm:$0xff]
      %s775 = scalar_lea.vmem %s379, 472
      %v776 = vld [vmem:[%s775] ss:$2 sm:$0x7]
      %s777 = scalar_lea.vmem %s379, 504
      %v778 = vld [vmem:[%s777] ss:$2 sm:$0xff]
      %s779 = scalar_lea.vmem %s379, 520
      %v780 = vld [vmem:[%s779] ss:$2 sm:$0x7]
      %v783 = vrot.slane %v742, 5
      %v784 = vrot.slane %v744, 5
      %v785 = vsel %vm429, %v783, %v784
      %v790 = vrot.slane %v746, 2
      %v791 = vrot.slane %v748, 2
      %v792 = vsel %vm437, %v790, %v791
      %v797 = vrot.slane %v750, 7
      %v798 = vrot.slane %v752, 7
      %v799 = vsel %vm446, %v797, %v798
      %v804 = vrot.slane %v754, 4
      %v805 = vrot.slane %v756, 4
      %v806 = vsel %vm454, %v804, %v805
      %v811 = vrot.slane %v758, 1
      %v812 = vrot.slane %v760, 1
      %v813 = vsel %vm462, %v811, %v812
      %v818 = vrot.slane %v762, 6
      %v819 = vrot.slane %v764, 6
      %v820 = vsel %vm471, %v818, %v819
      %v825 = vrot.slane %v766, 3
      %v826 = vrot.slane %v768, 3
      %v827 = vsel %vm479, %v825, %v826
      %v831 = vrot.slane %v774, 5
      %v832 = vrot.slane %v776, 5
      %v833 = vsel %vm429, %v831, %v832
      %v838 = vrot.slane %v778, 2
      %v839 = vrot.slane %v780, 2
      %v840 = vsel %vm437, %v838, %v839
      %v842 = vsel %vm429, %v740, %v783
      %v843 = vsel %vm437, %v785, %v790
      %v844 = vsel %vm446, %v791, %v797
      %v845 = vsel %vm454, %v799, %v804
      %v846 = vsel %vm462, %v806, %v811
      %v847 = vsel %vm471, %v812, %v818
      %v848 = vsel %vm479, %v820, %v825
      %v849 = vsel %vm429, %v772, %v831
      %v850 = vsel %vm437, %v833, %v838
      %s851 = scalar_lea.vmem %s379, 25
      %v852 = vld [vmem:[%s851] ss:$2 sm:$0xff]
      %s853 = scalar_lea.vmem %s379, 41
      %v854 = vld [vmem:[%s853] ss:$2 sm:$0x7]
      %s855 = scalar_lea.vmem %s379, 73
      %v856 = vld [vmem:[%s855] ss:$2 sm:$0xff]
      %s857 = scalar_lea.vmem %s379, 89
      %v858 = vld [vmem:[%s857] ss:$2 sm:$0x7]
      %s859 = scalar_lea.vmem %s379, 121
      %v860 = vld [vmem:[%s859] ss:$2 sm:$0xff]
      %s861 = scalar_lea.vmem %s379, 137
      %v862 = vld [vmem:[%s861] ss:$2 sm:$0x7]
      %s863 = scalar_lea.vmem %s379, 169
      %v864 = vld [vmem:[%s863] ss:$2 sm:$0xff]
      %s865 = scalar_lea.vmem %s379, 185
      %v866 = vld [vmem:[%s865] ss:$2 sm:$0x7]
      %s867 = scalar_lea.vmem %s379, 217
      %v868 = vld [vmem:[%s867] ss:$2 sm:$0xff]
      %s869 = scalar_lea.vmem %s379, 233
      %v870 = vld [vmem:[%s869] ss:$2 sm:$0x7]
      %s871 = scalar_lea.vmem %s379, 265
      %v872 = vld [vmem:[%s871] ss:$2 sm:$0xff]
      %s873 = scalar_lea.vmem %s379, 281
      %v874 = vld [vmem:[%s873] ss:$2 sm:$0x7]
      %s875 = scalar_lea.vmem %s379, 313
      %v876 = vld [vmem:[%s875] ss:$2 sm:$0xff]
      %s877 = scalar_lea.vmem %s379, 329
      %v878 = vld [vmem:[%s877] ss:$2 sm:$0x7]
      %s879 = scalar_lea.vmem %s379, 361
      %v880 = vld [vmem:[%s879] ss:$2 sm:$0xff]
      %s881 = scalar_lea.vmem %s379, 377
      %v882 = vld [vmem:[%s881] ss:$2 sm:$0x7]
      %s883 = scalar_lea.vmem %s379, 409
      %v884 = vld [vmem:[%s883] ss:$2 sm:$0xff]
      %s885 = scalar_lea.vmem %s379, 425
      %v886 = vld [vmem:[%s885] ss:$2 sm:$0x7]
      %s887 = scalar_lea.vmem %s379, 457
      %v888 = vld [vmem:[%s887] ss:$2 sm:$0xff]
      %s889 = scalar_lea.vmem %s379, 473
      %v890 = vld [vmem:[%s889] ss:$2 sm:$0x7]
      %s891 = scalar_lea.vmem %s379, 505
      %v892 = vld [vmem:[%s891] ss:$2 sm:$0xff]
      %s893 = scalar_lea.vmem %s379, 521
      %v894 = vld [vmem:[%s893] ss:$2 sm:$0x7]
      %v897 = vrot.slane %v856, 5
      %v898 = vrot.slane %v858, 5
      %v899 = vsel %vm429, %v897, %v898
      %v904 = vrot.slane %v860, 2
      %v905 = vrot.slane %v862, 2
      %v906 = vsel %vm437, %v904, %v905
      %v911 = vrot.slane %v864, 7
      %v912 = vrot.slane %v866, 7
      %v913 = vsel %vm446, %v911, %v912
      %v918 = vrot.slane %v868, 4
      %v919 = vrot.slane %v870, 4
      %v920 = vsel %vm454, %v918, %v919
      %v925 = vrot.slane %v872, 1
      %v926 = vrot.slane %v874, 1
      %v927 = vsel %vm462, %v925, %v926
      %v932 = vrot.slane %v876, 6
      %v933 = vrot.slane %v878, 6
      %v934 = vsel %vm471, %v932, %v933
      %v939 = vrot.slane %v880, 3
      %v940 = vrot.slane %v882, 3
      %v941 = vsel %vm479, %v939, %v940
      %v945 = vrot.slane %v888, 5
      %v946 = vrot.slane %v890, 5
      %v947 = vsel %vm429, %v945, %v946
      %v952 = vrot.slane %v892, 2
      %v953 = vrot.slane %v894, 2
      %v954 = vsel %vm437, %v952, %v953
      %v956 = vsel %vm429, %v854, %v897
      %v957 = vsel %vm437, %v899, %v904
      %v958 = vsel %vm446, %v905, %v911
      %v959 = vsel %vm454, %v913, %v918
      %v960 = vsel %vm462, %v920, %v925
      %v961 = vsel %vm471, %v926, %v932
      %v962 = vsel %vm479, %v934, %v939
      %v963 = vsel %vm429, %v886, %v945
      %v964 = vsel %vm437, %v947, %v952
      %s965 = scalar_lea.vmem %s379, 26
      %v966 = vld [vmem:[%s965] ss:$2 sm:$0xff]
      %s967 = scalar_lea.vmem %s379, 42
      %v968 = vld [vmem:[%s967] ss:$2 sm:$0x7]
      %s969 = scalar_lea.vmem %s379, 74
      %v970 = vld [vmem:[%s969] ss:$2 sm:$0xff]
      %s971 = scalar_lea.vmem %s379, 90
      %v972 = vld [vmem:[%s971] ss:$2 sm:$0x7]
      %s973 = scalar_lea.vmem %s379, 122
      %v974 = vld [vmem:[%s973] ss:$2 sm:$0xff]
      %s975 = scalar_lea.vmem %s379, 138
      %v976 = vld [vmem:[%s975] ss:$2 sm:$0x7]
      %s977 = scalar_lea.vmem %s379, 170
      %v978 = vld [vmem:[%s977] ss:$2 sm:$0xff]
      %s979 = scalar_lea.vmem %s379, 186
      %v980 = vld [vmem:[%s979] ss:$2 sm:$0x7]
      %s981 = scalar_lea.vmem %s379, 218
      %v982 = vld [vmem:[%s981] ss:$2 sm:$0xff]
      %s983 = scalar_lea.vmem %s379, 234
      %v984 = vld [vmem:[%s983] ss:$2 sm:$0x7]
      %s985 = scalar_lea.vmem %s379, 266
      %v986 = vld [vmem:[%s985] ss:$2 sm:$0xff]
      %s987 = scalar_lea.vmem %s379, 282
      %v988 = vld [vmem:[%s987] ss:$2 sm:$0x7]
      %s989 = scalar_lea.vmem %s379, 314
      %v990 = vld [vmem:[%s989] ss:$2 sm:$0xff]
      %s991 = scalar_lea.vmem %s379, 330
      %v992 = vld [vmem:[%s991] ss:$2 sm:$0x7]
      %s993 = scalar_lea.vmem %s379, 362
      %v994 = vld [vmem:[%s993] ss:$2 sm:$0xff]
      %s995 = scalar_lea.vmem %s379, 378
      %v996 = vld [vmem:[%s995] ss:$2 sm:$0x7]
      %s997 = scalar_lea.vmem %s379, 410
      %v998 = vld [vmem:[%s997] ss:$2 sm:$0xff]
      %s999 = scalar_lea.vmem %s379, 426
      %v1000 = vld [vmem:[%s999] ss:$2 sm:$0x7]
      %s1001 = scalar_lea.vmem %s379, 458
      %v1002 = vld [vmem:[%s1001] ss:$2 sm:$0xff]
      %s1003 = scalar_lea.vmem %s379, 474
      %v1004 = vld [vmem:[%s1003] ss:$2 sm:$0x7]
      %s1005 = scalar_lea.vmem %s379, 506
      %v1006 = vld [vmem:[%s1005] ss:$2 sm:$0xff]
      %s1007 = scalar_lea.vmem %s379, 522
      %v1008 = vld [vmem:[%s1007] ss:$2 sm:$0x7]
      %v1011 = vrot.slane %v970, 5
      %v1012 = vrot.slane %v972, 5
      %v1013 = vsel %vm429, %v1011, %v1012
      %v1018 = vrot.slane %v974, 2
      %v1019 = vrot.slane %v976, 2
      %v1020 = vsel %vm437, %v1018, %v1019
      %v1025 = vrot.slane %v978, 7
      %v1026 = vrot.slane %v980, 7
      %v1027 = vsel %vm446, %v1025, %v1026
      %v1032 = vrot.slane %v982, 4
      %v1033 = vrot.slane %v984, 4
      %v1034 = vsel %vm454, %v1032, %v1033
      %v1039 = vrot.slane %v986, 1
      %v1040 = vrot.slane %v988, 1
      %v1041 = vsel %vm462, %v1039, %v1040
      %v1046 = vrot.slane %v990, 6
      %v1047 = vrot.slane %v992, 6
      %v1048 = vsel %vm471, %v1046, %v1047
      %v1053 = vrot.slane %v994, 3
      %v1054 = vrot.slane %v996, 3
      %v1055 = vsel %vm479, %v1053, %v1054
      %v1059 = vrot.slane %v1002, 5
      %v1060 = vrot.slane %v1004, 5
      %v1061 = vsel %vm429, %v1059, %v1060
      %v1066 = vrot.slane %v1006, 2
      %v1067 = vrot.slane %v1008, 2
      %v1068 = vsel %vm437, %v1066, %v1067
      %v1070 = vsel %vm429, %v968, %v1011
      %v1071 = vsel %vm437, %v1013, %v1018
      %v1072 = vsel %vm446, %v1019, %v1025
      %v1073 = vsel %vm454, %v1027, %v1032
      %v1074 = vsel %vm462, %v1034, %v1039
      %v1075 = vsel %vm471, %v1040, %v1046
      %v1076 = vsel %vm479, %v1048, %v1053
      %v1077 = vsel %vm429, %v1000, %v1059
      %v1078 = vsel %vm437, %v1061, %v1066
      %s1079 = scalar_lea.vmem %s379, 528
      %v1080 = vld [vmem:[%s1079] ss:$2 sm:$0xff]
      %s1081 = scalar_lea.vmem %s379, 544
      %v1082 = vld [vmem:[%s1081] ss:$2 sm:$0x7]
      %v1083 = vrot.slane %v392, 5
      %v1084 = vrot.slane %v394, 5
      %v1085 = vsel %vm429, %v1083, %v1084
      %v1088 = vrot.slane %v396, 2
      %v1089 = vrot.slane %v398, 2
      %v1090 = vsel %vm437, %v1088, %v1089
      %v1093 = vrot.slane %v400, 7
      %v1094 = vrot.slane %v402, 7
      %v1095 = vsel %vm446, %v1093, %v1094
      %v1098 = vrot.slane %v404, 4
      %v1099 = vrot.slane %v406, 4
      %v1100 = vsel %vm454, %v1098, %v1099
      %v1103 = vrot.slane %v408, 1
      %v1104 = vrot.slane %v410, 1
      %v1105 = vsel %vm462, %v1103, %v1104
      %v1108 = vrot.slane %v412, 6
      %v1109 = vrot.slane %v414, 6
      %v1110 = vsel %vm471, %v1108, %v1109
      %v1115 = vrot.slane %v416, 3
      %v1116 = vrot.slane %v418, 3
      %v1117 = vsel %vm479, %v1115, %v1116
      %v1119 = vrot.slane %v424, 5
      %v1120 = vrot.slane %v426, 5
      %v1121 = vsel %vm429, %v1119, %v1120
      %v1126 = vrot.slane %v1080, 2
      %v1127 = vrot.slane %v1082, 2
      %v1128 = vsel %vm437, %v1126, %v1127
      %v1130 = vsel %vm429, %v390, %v1083
      %v1131 = vsel %vm437, %v1085, %v1088
      %v1132 = vsel %vm446, %v1089, %v1093
      %v1133 = vsel %vm454, %v1095, %v1098
      %v1134 = vsel %vm462, %v1100, %v1103
      %v1135 = vsel %vm471, %v1104, %v1108
      %v1136 = vsel %vm479, %v1110, %v1115
      %v1137 = vsel %vm429, %v422, %v1119
      %v1138 = vsel %vm437, %v1121, %v1126
      %s1139 = scalar_lea.vmem %s379, 529
      %v1140 = vld [vmem:[%s1139] ss:$2 sm:$0xff]
      %s1141 = scalar_lea.vmem %s379, 545
      %v1142 = vld [vmem:[%s1141] ss:$2 sm:$0x7]
      %v1143 = vrot.slane %v518, 5
      %v1144 = vrot.slane %v520, 5
      %v1145 = vsel %vm429, %v1143, %v1144
      %v1148 = vrot.slane %v522, 2
      %v1149 = vrot.slane %v524, 2
      %v1150 = vsel %vm437, %v1148, %v1149
      %v1153 = vrot.slane %v526, 7
      %v1154 = vrot.slane %v528, 7
      %v1155 = vsel %vm446, %v1153, %v1154
      %v1158 = vrot.slane %v530, 4
      %v1159 = vrot.slane %v532, 4
      %v1160 = vsel %vm454, %v1158, %v1159
      %v1163 = vrot.slane %v534, 1
      %v1164 = vrot.slane %v536, 1
      %v1165 = vsel %vm462, %v1163, %v1164
      %v1168 = vrot.slane %v538, 6
      %v1169 = vrot.slane %v540, 6
      %v1170 = vsel %vm471, %v1168, %v1169
      %v1175 = vrot.slane %v542, 3
      %v1176 = vrot.slane %v544, 3
      %v1177 = vsel %vm479, %v1175, %v1176
      %v1179 = vrot.slane %v550, 5
      %v1180 = vrot.slane %v552, 5
      %v1181 = vsel %vm429, %v1179, %v1180
      %v1186 = vrot.slane %v1140, 2
      %v1187 = vrot.slane %v1142, 2
      %v1188 = vsel %vm437, %v1186, %v1187
      %v1190 = vsel %vm429, %v516, %v1143
      %v1191 = vsel %vm437, %v1145, %v1148
      %v1192 = vsel %vm446, %v1149, %v1153
      %v1193 = vsel %vm454, %v1155, %v1158
      %v1194 = vsel %vm462, %v1160, %v1163
      %v1195 = vsel %vm471, %v1164, %v1168
      %v1196 = vsel %vm479, %v1170, %v1175
      %v1197 = vsel %vm429, %v548, %v1179
      %v1198 = vsel %vm437, %v1181, %v1186
      %s1199 = scalar_lea.vmem %s379, 530
      %v1200 = vld [vmem:[%s1199] ss:$2 sm:$0xff]
      %s1201 = scalar_lea.vmem %s379, 546
      %v1202 = vld [vmem:[%s1201] ss:$2 sm:$0x7]
      %v1203 = vrot.slane %v632, 5
      %v1204 = vrot.slane %v634, 5
      %v1205 = vsel %vm429, %v1203, %v1204
      %v1208 = vrot.slane %v636, 2
      %v1209 = vrot.slane %v638, 2
      %v1210 = vsel %vm437, %v1208, %v1209
      %v1213 = vrot.slane %v640, 7
      %v1214 = vrot.slane %v642, 7
      %v1215 = vsel %vm446, %v1213, %v1214
      %v1218 = vrot.slane %v644, 4
      %v1219 = vrot.slane %v646, 4
      %v1220 = vsel %vm454, %v1218, %v1219
      %v1223 = vrot.slane %v648, 1
      %v1224 = vrot.slane %v650, 1
      %v1225 = vsel %vm462, %v1223, %v1224
      %v1228 = vrot.slane %v652, 6
      %v1229 = vrot.slane %v654, 6
      %v1230 = vsel %vm471, %v1228, %v1229
      %v1235 = vrot.slane %v656, 3
      %v1236 = vrot.slane %v658, 3
      %v1237 = vsel %vm479, %v1235, %v1236
      %v1239 = vrot.slane %v664, 5
      %v1240 = vrot.slane %v666, 5
      %v1241 = vsel %vm429, %v1239, %v1240
      %v1246 = vrot.slane %v1200, 2
      %v1247 = vrot.slane %v1202, 2
      %v1248 = vsel %vm437, %v1246, %v1247
      %v1250 = vsel %vm429, %v630, %v1203
      %v1251 = vsel %vm437, %v1205, %v1208
      %v1252 = vsel %vm446, %v1209, %v1213
      %v1253 = vsel %vm454, %v1215, %v1218
      %v1254 = vsel %vm462, %v1220, %v1223
      %v1255 = vsel %vm471, %v1224, %v1228
      %v1256 = vsel %vm479, %v1230, %v1235
      %v1257 = vsel %vm429, %v662, %v1239
      %v1258 = vsel %vm437, %v1241, %v1246
      %1269 = vrot.lane.b32.xlu0 %v510, 3
      %v1270 = vpop.permute.xlu0 %1269
      %1271 = vrot.lane.b32.xlu0 %v614, 3
      %v1272 = vpop.permute.xlu0 %1271
      %1273 = vrot.lane.b32.xlu0 %v615, 3
      %v1274 = vpop.permute.xlu0 %1273
      %1275 = vrot.lane.b32.xlu0 %v564, 3
      %v1276 = vpop.permute.xlu0 %1275
      %1277 = vrot.lane.b32.xlu0 %v616, 3
      %v1278 = vpop.permute.xlu0 %1277
      %1279 = vrot.lane.b32.xlu0 %v617, 3
      %v1280 = vpop.permute.xlu0 %1279
      %1281 = vrot.lane.b32.xlu0 %v618, 3
      %v1282 = vpop.permute.xlu0 %1281
      %1283 = vrot.lane.b32.xlu0 %v585, 3
      %v1284 = vpop.permute.xlu0 %1283
      %1285 = vrot.lane.b32.xlu0 %v619, 3
      %v1286 = vpop.permute.xlu0 %1285
      %1287 = vrot.lane.b32.xlu0 %v620, 3
      %v1288 = vpop.permute.xlu0 %1287
      %1289 = vrot.lane.b32.xlu0 %v599, 3
      %v1290 = vpop.permute.xlu0 %1289
      %1291 = vrot.lane.b32.xlu0 %v542, 3
      %v1292 = vpop.permute.xlu0 %1291
      %1293 = vrot.lane.b32.xlu0 %v621, 3
      %v1294 = vpop.permute.xlu0 %1293
      %1295 = vrot.lane.b32.xlu0 %v622, 3
      %v1296 = vpop.permute.xlu0 %1295
      %1297 = vrot.lane.b32.xlu0 %v612, 3
      %v1298 = vpop.permute.xlu0 %1297
      %1299 = vrot.lane.b32.xlu0 %v611, 3
      %v1300 = vpop.permute.xlu0 %1299
      %1327 = vrot.lane.b32.xlu0 %v624, 6
      %v1328 = vpop.permute.xlu0 %1327
      %1329 = vrot.lane.b32.xlu0 %v728, 6
      %v1330 = vpop.permute.xlu0 %1329
      %1331 = vrot.lane.b32.xlu0 %v729, 6
      %v1332 = vpop.permute.xlu0 %1331
      %1333 = vrot.lane.b32.xlu0 %v678, 6
      %v1334 = vpop.permute.xlu0 %1333
      %1335 = vrot.lane.b32.xlu0 %v730, 6
      %v1336 = vpop.permute.xlu0 %1335
      %1337 = vrot.lane.b32.xlu0 %v731, 6
      %v1338 = vpop.permute.xlu0 %1337
      %1339 = vrot.lane.b32.xlu0 %v732, 6
      %v1340 = vpop.permute.xlu0 %1339
      %1341 = vrot.lane.b32.xlu0 %v699, 6
      %v1342 = vpop.permute.xlu0 %1341
      %1343 = vrot.lane.b32.xlu0 %v733, 6
      %v1344 = vpop.permute.xlu0 %1343
      %1345 = vrot.lane.b32.xlu0 %v734, 6
      %v1346 = vpop.permute.xlu0 %1345
      %1347 = vrot.lane.b32.xlu0 %v713, 6
      %v1348 = vpop.permute.xlu0 %1347
      %1349 = vrot.lane.b32.xlu0 %v656, 6
      %v1350 = vpop.permute.xlu0 %1349
      %1351 = vrot.lane.b32.xlu0 %v735, 6
      %v1352 = vpop.permute.xlu0 %1351
      %1353 = vrot.lane.b32.xlu0 %v736, 6
      %v1354 = vpop.permute.xlu0 %1353
      %1355 = vrot.lane.b32.xlu0 %v726, 6
      %v1356 = vpop.permute.xlu0 %1355
      %1357 = vrot.lane.b32.xlu0 %v725, 6
      %v1358 = vpop.permute.xlu0 %1357
      %1386 = vrot.lane.b32.xlu0 %v738, 9
      %v1387 = vpop.permute.xlu0 %1386
      %1388 = vrot.lane.b32.xlu0 %v842, 9
      %v1389 = vpop.permute.xlu0 %1388
      %1390 = vrot.lane.b32.xlu0 %v843, 9
      %v1391 = vpop.permute.xlu0 %1390
      %1392 = vrot.lane.b32.xlu0 %v792, 9
      %v1393 = vpop.permute.xlu0 %1392
      %1394 = vrot.lane.b32.xlu0 %v844, 9
      %v1395 = vpop.permute.xlu0 %1394
      %1396 = vrot.lane.b32.xlu0 %v845, 9
      %v1397 = vpop.permute.xlu0 %1396
      %1398 = vrot.lane.b32.xlu0 %v846, 9
      %v1399 = vpop.permute.xlu0 %1398
      %1400 = vrot.lane.b32.xlu0 %v813, 9
      %v1401 = vpop.permute.xlu0 %1400
      %1402 = vrot.lane.b32.xlu0 %v847, 9
      %v1403 = vpop.permute.xlu0 %1402
      %1404 = vrot.lane.b32.xlu0 %v848, 9
      %v1405 = vpop.permute.xlu0 %1404
      %1406 = vrot.lane.b32.xlu0 %v827, 9
      %v1407 = vpop.permute.xlu0 %1406
      %1408 = vrot.lane.b32.xlu0 %v770, 9
      %v1409 = vpop.permute.xlu0 %1408
      %1410 = vrot.lane.b32.xlu0 %v849, 9
      %v1411 = vpop.permute.xlu0 %1410
      %1412 = vrot.lane.b32.xlu0 %v850, 9
      %v1413 = vpop.permute.xlu0 %1412
      %1414 = vrot.lane.b32.xlu0 %v840, 9
      %v1415 = vpop.permute.xlu0 %1414
      %1416 = vrot.lane.b32.xlu0 %v839, 9
      %v1417 = vpop.permute.xlu0 %1416
      %1445 = vrot.lane.b32.xlu0 %v852, 12
      %v1446 = vpop.permute.xlu0 %1445
      %1447 = vrot.lane.b32.xlu0 %v956, 12
      %v1448 = vpop.permute.xlu0 %1447
      %1449 = vrot.lane.b32.xlu0 %v957, 12
      %v1450 = vpop.permute.xlu0 %1449
      %1451 = vrot.lane.b32.xlu0 %v906, 12
      %v1452 = vpop.permute.xlu0 %1451
      %1453 = vrot.lane.b32.xlu0 %v958, 12
      %v1454 = vpop.permute.xlu0 %1453
      %1455 = vrot.lane.b32.xlu0 %v959, 12
      %v1456 = vpop.permute.xlu0 %1455
      %1457 = vrot.lane.b32.xlu0 %v960, 12
      %v1458 = vpop.permute.xlu0 %1457
      %1459 = vrot.lane.b32.xlu0 %v927, 12
      %v1460 = vpop.permute.xlu0 %1459
      %1461 = vrot.lane.b32.xlu0 %v961, 12
      %v1462 = vpop.permute.xlu0 %1461
      %1463 = vrot.lane.b32.xlu0 %v962, 12
      %v1464 = vpop.permute.xlu0 %1463
      %1465 = vrot.lane.b32.xlu0 %v941, 12
      %v1466 = vpop.permute.xlu0 %1465
      %1467 = vrot.lane.b32.xlu0 %v884, 12
      %v1468 = vpop.permute.xlu0 %1467
      %1469 = vrot.lane.b32.xlu0 %v963, 12
      %v1470 = vpop.permute.xlu0 %1469
      %1471 = vrot.lane.b32.xlu0 %v964, 12
      %v1472 = vpop.permute.xlu0 %1471
      %1473 = vrot.lane.b32.xlu0 %v954, 12
      %v1474 = vpop.permute.xlu0 %1473
      %1475 = vrot.lane.b32.xlu0 %v953, 12
      %v1476 = vpop.permute.xlu0 %1475
      %1504 = vrot.lane.b32.xlu0 %v966, 15
      %v1505 = vpop.permute.xlu0 %1504
      %1506 = vrot.lane.b32.xlu0 %v1070, 15
      %v1507 = vpop.permute.xlu0 %1506
      %1508 = vrot.lane.b32.xlu0 %v1071, 15
      %v1509 = vpop.permute.xlu0 %1508
      %1510 = vrot.lane.b32.xlu0 %v1020, 15
      %v1511 = vpop.permute.xlu0 %1510
      %1512 = vrot.lane.b32.xlu0 %v1072, 15
      %v1513 = vpop.permute.xlu0 %1512
      %1514 = vrot.lane.b32.xlu0 %v1073, 15
      %v1515 = vpop.permute.xlu0 %1514
      %1516 = vrot.lane.b32.xlu0 %v1074, 15
      %v1517 = vpop.permute.xlu0 %1516
      %1518 = vrot.lane.b32.xlu0 %v1041, 15
      %v1519 = vpop.permute.xlu0 %1518
      %1520 = vrot.lane.b32.xlu0 %v1075, 15
      %v1521 = vpop.permute.xlu0 %1520
      %1522 = vrot.lane.b32.xlu0 %v1076, 15
      %v1523 = vpop.permute.xlu0 %1522
      %1524 = vrot.lane.b32.xlu0 %v1055, 15
      %v1525 = vpop.permute.xlu0 %1524
      %1526 = vrot.lane.b32.xlu0 %v998, 15
      %v1527 = vpop.permute.xlu0 %1526
      %1528 = vrot.lane.b32.xlu0 %v1077, 15
      %v1529 = vpop.permute.xlu0 %1528
      %1530 = vrot.lane.b32.xlu0 %v1078, 15
      %v1531 = vpop.permute.xlu0 %1530
      %1532 = vrot.lane.b32.xlu0 %v1068, 15
      %v1533 = vpop.permute.xlu0 %1532
      %1534 = vrot.lane.b32.xlu0 %v1067, 15
      %v1535 = vpop.permute.xlu0 %1534
      %1561 = vrot.lane.b32.xlu0 %v388, 18
      %v1562 = vpop.permute.xlu0 %1561
      %1563 = vrot.lane.b32.xlu0 %v1130, 18
      %v1564 = vpop.permute.xlu0 %1563
      %1565 = vrot.lane.b32.xlu0 %v1131, 18
      %v1566 = vpop.permute.xlu0 %1565
      %1567 = vrot.lane.b32.xlu0 %v1090, 18
      %v1568 = vpop.permute.xlu0 %1567
      %1569 = vrot.lane.b32.xlu0 %v1132, 18
      %v1570 = vpop.permute.xlu0 %1569
      %1571 = vrot.lane.b32.xlu0 %v1133, 18
      %v1572 = vpop.permute.xlu0 %1571
      %1573 = vrot.lane.b32.xlu0 %v1134, 18
      %v1574 = vpop.permute.xlu0 %1573
      %1575 = vrot.lane.b32.xlu0 %v1105, 18
      %v1576 = vpop.permute.xlu0 %1575
      %1577 = vrot.lane.b32.xlu0 %v1135, 18
      %v1578 = vpop.permute.xlu0 %1577
      %1579 = vrot.lane.b32.xlu0 %v1136, 18
      %v1580 = vpop.permute.xlu0 %1579
      %1581 = vrot.lane.b32.xlu0 %v1117, 18
      %v1582 = vpop.permute.xlu0 %1581
      %1583 = vrot.lane.b32.xlu0 %v420, 18
      %v1584 = vpop.permute.xlu0 %1583
      %1585 = vrot.lane.b32.xlu0 %v1137, 18
      %v1586 = vpop.permute.xlu0 %1585
      %1587 = vrot.lane.b32.xlu0 %v1138, 18
      %v1588 = vpop.permute.xlu0 %1587
      %1589 = vrot.lane.b32.xlu0 %v1128, 18
      %v1590 = vpop.permute.xlu0 %1589
      %1591 = vrot.lane.b32.xlu0 %v1127, 18
      %v1592 = vpop.permute.xlu0 %1591
      %1618 = vrot.lane.b32.xlu0 %v514, 21
      %v1619 = vpop.permute.xlu0 %1618
      %1620 = vrot.lane.b32.xlu0 %v1190, 21
      %v1621 = vpop.permute.xlu0 %1620
      %1622 = vrot.lane.b32.xlu0 %v1191, 21
      %v1623 = vpop.permute.xlu0 %1622
      %1624 = vrot.lane.b32.xlu0 %v1150, 21
      %v1625 = vpop.permute.xlu0 %1624
      %1626 = vrot.lane.b32.xlu0 %v1192, 21
      %v1627 = vpop.permute.xlu0 %1626
      %1628 = vrot.lane.b32.xlu0 %v1193, 21
      %v1629 = vpop.permute.xlu0 %1628
      %1630 = vrot.lane.b32.xlu0 %v1194, 21
      %v1631 = vpop.permute.xlu0 %1630
      %1632 = vrot.lane.b32.xlu0 %v1165, 21
      %v1633 = vpop.permute.xlu0 %1632
      %1634 = vrot.lane.b32.xlu0 %v1195, 21
      %v1635 = vpop.permute.xlu0 %1634
      %1636 = vrot.lane.b32.xlu0 %v1196, 21
      %v1637 = vpop.permute.xlu0 %1636
      %1638 = vrot.lane.b32.xlu0 %v1177, 21
      %v1639 = vpop.permute.xlu0 %1638
      %1640 = vrot.lane.b32.xlu0 %v546, 21
      %v1641 = vpop.permute.xlu0 %1640
      %1642 = vrot.lane.b32.xlu0 %v1197, 21
      %v1643 = vpop.permute.xlu0 %1642
      %1644 = vrot.lane.b32.xlu0 %v1198, 21
      %v1645 = vpop.permute.xlu0 %1644
      %1646 = vrot.lane.b32.xlu0 %v1188, 21
      %v1647 = vpop.permute.xlu0 %1646
      %1648 = vrot.lane.b32.xlu0 %v1187, 21
      %v1649 = vpop.permute.xlu0 %1648
      %1675 = vrot.lane.b32.xlu0 %v628, 24
      %v1676 = vpop.permute.xlu0 %1675
      %1677 = vrot.lane.b32.xlu0 %v1250, 24
      %v1678 = vpop.permute.xlu0 %1677
      %1679 = vrot.lane.b32.xlu0 %v1251, 24
      %v1680 = vpop.permute.xlu0 %1679
      %1681 = vrot.lane.b32.xlu0 %v1210, 24
      %v1682 = vpop.permute.xlu0 %1681
      %1683 = vrot.lane.b32.xlu0 %v1252, 24
      %v1684 = vpop.permute.xlu0 %1683
      %1685 = vrot.lane.b32.xlu0 %v1253, 24
      %v1686 = vpop.permute.xlu0 %1685
      %1687 = vrot.lane.b32.xlu0 %v1254, 24
      %v1688 = vpop.permute.xlu0 %1687
      %1689 = vrot.lane.b32.xlu0 %v1225, 24
      %v1690 = vpop.permute.xlu0 %1689
      %1691 = vrot.lane.b32.xlu0 %v1255, 24
      %v1692 = vpop.permute.xlu0 %1691
      %1693 = vrot.lane.b32.xlu0 %v1256, 24
      %v1694 = vpop.permute.xlu0 %1693
      %1695 = vrot.lane.b32.xlu0 %v1237, 24
      %v1696 = vpop.permute.xlu0 %1695
      %1697 = vrot.lane.b32.xlu0 %v660, 24
      %v1698 = vpop.permute.xlu0 %1697
      %1699 = vrot.lane.b32.xlu0 %v1257, 24
      %v1700 = vpop.permute.xlu0 %1699
      %1701 = vrot.lane.b32.xlu0 %v1258, 24
      %v1702 = vpop.permute.xlu0 %1701
      %1703 = vrot.lane.b32.xlu0 %v1248, 24
      %v1704 = vpop.permute.xlu0 %1703
      %1705 = vrot.lane.b32.xlu0 %v1247, 24
      %v1706 = vpop.permute.xlu0 %1705
      %vm1723 = vcmask 23552
      %v1724 = vsel %vm1723, %v384, %v1270
      %v1725 = vsel %vm1723, %v500, %v1272
      %v1726 = vsel %vm1723, %v501, %v1274
      %v1727 = vsel %vm1723, %v440, %v1276
      %v1728 = vsel %vm1723, %v502, %v1278
      %v1729 = vsel %vm1723, %v503, %v1280
      %v1730 = vsel %vm1723, %v504, %v1282
      %v1731 = vsel %vm1723, %v465, %v1284
      %v1732 = vsel %vm1723, %v505, %v1286
      %v1733 = vsel %vm1723, %v506, %v1288
      %v1734 = vsel %vm1723, %v482, %v1290
      %v1735 = vsel %vm1723, %v416, %v1292
      %v1736 = vsel %vm1723, %v507, %v1294
      %v1737 = vsel %vm1723, %v508, %v1296
      %v1738 = vsel %vm1723, %v496, %v1298
      %v1739 = vsel %vm1723, %v495, %v1300
      %vm1740 = vcmask 48128
      %v1741 = vsel %vm1740, %v1724, %v1328
      %v1742 = vsel %vm1740, %v1725, %v1330
      %v1743 = vsel %vm1740, %v1726, %v1332
      %v1744 = vsel %vm1740, %v1727, %v1334
      %v1745 = vsel %vm1740, %v1728, %v1336
      %v1746 = vsel %vm1740, %v1729, %v1338
      %v1747 = vsel %vm1740, %v1730, %v1340
      %v1748 = vsel %vm1740, %v1731, %v1342
      %v1749 = vsel %vm1740, %v1732, %v1344
      %v1750 = vsel %vm1740, %v1733, %v1346
      %v1751 = vsel %vm1740, %v1734, %v1348
      %v1752 = vsel %vm1740, %v1735, %v1350
      %v1753 = vsel %vm1740, %v1736, %v1352
      %v1754 = vsel %vm1740, %v1737, %v1354
      %v1755 = vsel %vm1740, %v1738, %v1356
      %v1756 = vsel %vm1740, %v1739, %v1358
      %vm1757 = vcmask 72704
      %v1758 = vsel %vm1757, %v1741, %v1387
      %v1759 = vsel %vm1757, %v1742, %v1389
      %v1760 = vsel %vm1757, %v1743, %v1391
      %v1761 = vsel %vm1757, %v1744, %v1393
      %v1762 = vsel %vm1757, %v1745, %v1395
      %v1763 = vsel %vm1757, %v1746, %v1397
      %v1764 = vsel %vm1757, %v1747, %v1399
      %v1765 = vsel %vm1757, %v1748, %v1401
      %v1766 = vsel %vm1757, %v1749, %v1403
      %v1767 = vsel %vm1757, %v1750, %v1405
      %v1768 = vsel %vm1757, %v1751, %v1407
      %v1769 = vsel %vm1757, %v1752, %v1409
      %v1770 = vsel %vm1757, %v1753, %v1411
      %v1771 = vsel %vm1757, %v1754, %v1413
      %v1772 = vsel %vm1757, %v1755, %v1415
      %v1773 = vsel %vm1757, %v1756, %v1417
      %vm1774 = vcmask 97280
      %v1775 = vsel %vm1774, %v1758, %v1446
      %v1776 = vsel %vm1774, %v1759, %v1448
      %v1777 = vsel %vm1774, %v1760, %v1450
      %v1778 = vsel %vm1774, %v1761, %v1452
      %v1779 = vsel %vm1774, %v1762, %v1454
      %v1780 = vsel %vm1774, %v1763, %v1456
      %v1781 = vsel %vm1774, %v1764, %v1458
      %v1782 = vsel %vm1774, %v1765, %v1460
      %v1783 = vsel %vm1774, %v1766, %v1462
      %v1784 = vsel %vm1774, %v1767, %v1464
      %v1785 = vsel %vm1774, %v1768, %v1466
      %v1786 = vsel %vm1774, %v1769, %v1468
      %v1787 = vsel %vm1774, %v1770, %v1470
      %v1788 = vsel %vm1774, %v1771, %v1472
      %v1789 = vsel %vm1774, %v1772, %v1474
      %v1790 = vsel %vm1774, %v1773, %v1476
      %vm1791 = vcmask 121856
      %v1792 = vsel %vm1791, %v1775, %v1505
      %v1793 = vsel %vm1791, %v1776, %v1507
      %v1794 = vsel %vm1791, %v1777, %v1509
      %v1795 = vsel %vm1791, %v1778, %v1511
      %v1796 = vsel %vm1791, %v1779, %v1513
      %v1797 = vsel %vm1791, %v1780, %v1515
      %v1798 = vsel %vm1791, %v1781, %v1517
      %v1799 = vsel %vm1791, %v1782, %v1519
      %v1800 = vsel %vm1791, %v1783, %v1521
      %v1801 = vsel %vm1791, %v1784, %v1523
      %v1802 = vsel %vm1791, %v1785, %v1525
      %v1803 = vsel %vm1791, %v1786, %v1527
      %v1804 = vsel %vm1791, %v1787, %v1529
      %v1805 = vsel %vm1791, %v1788, %v1531
      %v1806 = vsel %vm1791, %v1789, %v1533
      %v1807 = vsel %vm1791, %v1790, %v1535
      %vm1808 = vcmask 146432
      %v1809 = vsel %vm1808, %v1792, %v1562
      %v1810 = vsel %vm1808, %v1793, %v1564
      %v1811 = vsel %vm1808, %v1794, %v1566
      %v1812 = vsel %vm1808, %v1795, %v1568
      %v1813 = vsel %vm1808, %v1796, %v1570
      %v1814 = vsel %vm1808, %v1797, %v1572
      %v1815 = vsel %vm1808, %v1798, %v1574
      %v1816 = vsel %vm1808, %v1799, %v1576
      %v1817 = vsel %vm1808, %v1800, %v1578
      %v1818 = vsel %vm1808, %v1801, %v1580
      %v1819 = vsel %vm1808, %v1802, %v1582
      %v1820 = vsel %vm1808, %v1803, %v1584
      %v1821 = vsel %vm1808, %v1804, %v1586
      %v1822 = vsel %vm1808, %v1805, %v1588
      %v1823 = vsel %vm1808, %v1806, %v1590
      %v1824 = vsel %vm1808, %v1807, %v1592
      %vm1825 = vcmask 171008
      %v1826 = vsel %vm1825, %v1809, %v1619
      %v1827 = vsel %vm1825, %v1810, %v1621
      %v1828 = vsel %vm1825, %v1811, %v1623
      %v1829 = vsel %vm1825, %v1812, %v1625
      %v1830 = vsel %vm1825, %v1813, %v1627
      %v1831 = vsel %vm1825, %v1814, %v1629
      %v1832 = vsel %vm1825, %v1815, %v1631
      %v1833 = vsel %vm1825, %v1816, %v1633
      %v1834 = vsel %vm1825, %v1817, %v1635
      %v1835 = vsel %vm1825, %v1818, %v1637
      %v1836 = vsel %vm1825, %v1819, %v1639
      %v1837 = vsel %vm1825, %v1820, %v1641
      %v1838 = vsel %vm1825, %v1821, %v1643
      %v1839 = vsel %vm1825, %v1822, %v1645
      %v1840 = vsel %vm1825, %v1823, %v1647
      %v1841 = vsel %vm1825, %v1824, %v1649
      %vm1842 = vcmask 195584
      %v1843 = vsel %vm1842, %v1826, %v1676
      %v1844 = vsel %vm1842, %v1827, %v1678
      %v1845 = vsel %vm1842, %v1828, %v1680
      %v1846 = vsel %vm1842, %v1829, %v1682
      %v1847 = vsel %vm1842, %v1830, %v1684
      %v1848 = vsel %vm1842, %v1831, %v1686
      %v1849 = vsel %vm1842, %v1832, %v1688
      %v1850 = vsel %vm1842, %v1833, %v1690
      %v1851 = vsel %vm1842, %v1834, %v1692
      %v1852 = vsel %vm1842, %v1835, %v1694
      %v1853 = vsel %vm1842, %v1836, %v1696
      %v1854 = vsel %vm1842, %v1837, %v1698
      %v1855 = vsel %vm1842, %v1838, %v1700
      %v1856 = vsel %vm1842, %v1839, %v1702
      %v1857 = vsel %vm1842, %v1840, %v1704
      %v1858 = vsel %vm1842, %v1841, %v1706
      %v1859 = vpack.c.bf16 %v1844, %v1843
      %v1860 = vpack.c.bf16 %v1846, %v1845
      %v1861 = vpack.c.bf16 %v1848, %v1847
      %v1862 = vpack.c.bf16 %v1850, %v1849
      %v1863 = vpack.c.bf16 %v1852, %v1851
      %v1864 = vpack.c.bf16 %v1854, %v1853
      %v1865 = vpack.c.bf16 %v1856, %v1855
      %v1866 = vpack.c.bf16 %v1858, %v1857
      %v1867 = vld [vmem:[%s1] sm:$0xf]
      %v1868 = vld [vmem:[%s1 + $0x4] sm:$0xf]
      %v1869 = vld [vmem:[%s1 + $0x8] sm:$0xf]
      %v1870 = vld [vmem:[%s1 + $0xc] sm:$0x3]
      %v1871 = vld [vmem:[%s2] sm:$0x1]
      %v1873 = vperm.slane %v1871, 0
      %v1879 = vunpack.c.l.b16 %v1867
      %v1880 = vunpack.c.l.b16 %v1868
      %v1881 = vunpack.c.l.b16 %v1869
      %v1882 = vunpack.c.l.b16 %v1870
      %v1883 = vpack.c.b16 %v1880, %v1879
      %v1884 = vpack.c.b16 %v1882, %v1881
      %vm1886 = vcmask 220160
      %v1888 = vsel %vm1886, %v1859, 0
      %v1891 = vsel %vm1886, %v1860, 0
      %v1894 = vsel %vm1886, %v1861, 0
      %v1897 = vsel %vm1886, %v1862, 0
      %v1900 = vsel %vm1886, %v1863, 0
      %v1903 = vsel %vm1886, %v1864, 0
      %v1906 = vsel %vm1886, %v1865, 0
      %v1909 = vsel %vm1886, %v1866, 0
      %v1911 = vsel %vm479, 4294967295, 65535
      %v1912 = vsel %vm437, %v1911, 0
      %v1914 = vand.u32 %v1884, %v1912
      %1916 = vmatpush.bf16.msra.mxu0 0
      %1917 = vmatpush.bf16.msra.mxu0 0
      %1918 = vmatpush.bf16.msra.mxu0 0
      %1919 = vmatpush.bf16.msra.mxu0 0
      %1920 = vmatpush.bf16.msra.mxu0 0
      %1921 = vmatpush.bf16.msra.mxu0 0
      %1922 = vmatpush.bf16.msra.mxu0 %v1914
      %1923 = vmatpush.bf16.msra.mxu0 %v1883
      %1924 = vmatmul.bf16.gmra.mxu0 %v1888
      %v1925 = vpop.f32.mrf.mxu0
      %v1926 = vadd.f32 %v1873, %v1925
      %v1927 = vpop.f32.mrf.mxu0
      %v1928 = vadd.f32 %v1873, %v1927
      %1929 = vmatmul.bf16.gmra.mxu0 %v1891
      %v1930 = vpop.f32.mrf.mxu0
      %v1931 = vadd.f32 %v1873, %v1930
      %v1932 = vpop.f32.mrf.mxu0
      %v1933 = vadd.f32 %v1873, %v1932
      %1934 = vmatmul.bf16.gmra.mxu0 %v1894
      %v1935 = vpop.f32.mrf.mxu0
      %v1936 = vadd.f32 %v1873, %v1935
      %v1937 = vpop.f32.mrf.mxu0
      %v1938 = vadd.f32 %v1873, %v1937
      %1939 = vmatmul.bf16.gmra.mxu0 %v1897
      %v1940 = vpop.f32.mrf.mxu0
      %v1941 = vadd.f32 %v1873, %v1940
      %v1942 = vpop.f32.mrf.mxu0
      %v1943 = vadd.f32 %v1873, %v1942
      %1944 = vmatmul.bf16.gmra.mxu0 %v1900
      %v1945 = vpop.f32.mrf.mxu0
      %v1946 = vadd.f32 %v1873, %v1945
      %v1947 = vpop.f32.mrf.mxu0
      %v1948 = vadd.f32 %v1873, %v1947
      %1949 = vmatmul.bf16.gmra.mxu0 %v1903
      %v1950 = vpop.f32.mrf.mxu0
      %v1951 = vadd.f32 %v1873, %v1950
      %v1952 = vpop.f32.mrf.mxu0
      %v1953 = vadd.f32 %v1873, %v1952
      %1954 = vmatmul.bf16.gmra.mxu0 %v1906
      %v1955 = vpop.f32.mrf.mxu0
      %v1956 = vadd.f32 %v1873, %v1955
      %v1957 = vpop.f32.mrf.mxu0
      %v1958 = vadd.f32 %v1873, %v1957
      %1959 = vmatmul.bf16.gmra.mxu0 %v1909
      %v1960 = vpop.f32.mrf.mxu0
      %v1961 = vadd.f32 %v1873, %v1960
      %v1962 = vpop.f32.mrf.mxu0
      %v1963 = vadd.f32 %v1873, %v1962
      %1964 = vdwg.mxu0
      %v1965 = vmax.f32 %v1926, 0.0
      %v1966 = vmax.f32 %v1928, 0.0
      %v1967 = vmax.f32 %v1931, 0.0
      %v1968 = vmax.f32 %v1933, 0.0
      %v1969 = vmax.f32 %v1936, 0.0
      %v1970 = vmax.f32 %v1938, 0.0
      %v1971 = vmax.f32 %v1941, 0.0
      %v1972 = vmax.f32 %v1943, 0.0
      %v1973 = vmax.f32 %v1946, 0.0
      %v1974 = vmax.f32 %v1948, 0.0
      %v1975 = vmax.f32 %v1951, 0.0
      %v1976 = vmax.f32 %v1953, 0.0
      %v1977 = vmax.f32 %v1956, 0.0
      %v1978 = vmax.f32 %v1958, 0.0
      %v1979 = vmax.f32 %v1961, 0.0
      %v1980 = vmax.f32 %v1963, 0.0
      %vm1981 = vcmask 130048
      %1982 = vst.msk [vmem:[#allocation2] sm:$0xff] %vm1981, %v1965
      %1983 = vst.msk [vmem:[#allocation2 + $0x8] sm:$0xff] %vm1981, %v1966
      %1984 = vst.msk [vmem:[#allocation2 + $0x10] sm:$0xff] %vm1981, %v1967
      %1985 = vst.msk [vmem:[#allocation2 + $0x18] sm:$0xff] %vm1981, %v1968
      %1986 = vst.msk [vmem:[#allocation2 + $0x20] sm:$0xff] %vm1981, %v1969
      %1987 = vst.msk [vmem:[#allocation2 + $0x28] sm:$0xff] %vm1981, %v1970
      %1988 = vst.msk [vmem:[#allocation2 + $0x30] sm:$0xff] %vm1981, %v1971
      %1989 = vst.msk [vmem:[#allocation2 + $0x38] sm:$0xff] %vm1981, %v1972
      %1990 = vst.msk [vmem:[#allocation2 + $0x40] sm:$0xff] %vm1981, %v1973
      %1991 = vst.msk [vmem:[#allocation2 + $0x48] sm:$0xff] %vm1981, %v1974
      %1992 = vst.msk [vmem:[#allocation2 + $0x50] sm:$0xff] %vm1981, %v1975
      %1993 = vst.msk [vmem:[#allocation2 + $0x58] sm:$0xff] %vm1981, %v1976
      %1994 = vst.msk [vmem:[#allocation2 + $0x60] sm:$0xff] %vm1981, %v1977
      %1995 = vst.msk [vmem:[#allocation2 + $0x68] sm:$0xff] %vm1981, %v1978
      %1996 = vst.msk [vmem:[#allocation2 + $0x70] sm:$0xff] %vm1981, %v1979
      %vm1997 = vcmask 122880
      %1998 = vst.msk [vmem:[#allocation2 + $0x78] sm:$0x1] %vm1997, %v1980
      %v1999 = vld [vmem:[#allocation2] ss:$2 sm:$0x1f]
      %s2000 = scalar_lea.vmem [#allocation2], 22
      %v2001 = vld [vmem:[%s2000] ss:$2 sm:$0x1f]
      %s2002 = scalar_lea.vmem [#allocation2], 44
      %v2003 = vld [vmem:[%s2002] ss:$2 sm:$0x1f]
      %s2004 = scalar_lea.vmem [#allocation2], 66
      %v2005 = vld [vmem:[%s2004] ss:$2 sm:$0x1f]
      %s2006 = scalar_lea.vmem [#allocation2], 88
      %v2007 = vld [vmem:[%s2006] ss:$2 sm:$0x1f]
      %v2009 = vrot.slane %v2001, 3
      %v2012 = vrot.slane %v2003, 6
      %v2015 = vrot.slane %v2005, 1
      %v2018 = vrot.slane %v2007, 4
      %v2020 = vsel %vm479, %v1999, %v2009
      %v2021 = vsel %vm471, %v2009, %v2012
      %v2022 = vsel %vm462, %v2021, %v2015
      %v2023 = vsel %vm454, %v2015, %v2018
      %s2024 = scalar_lea.vmem [#allocation2], 1
      %v2025 = vld [vmem:[%s2024] ss:$2 sm:$0x1f]
      %s2026 = scalar_lea.vmem [#allocation2], 23
      %v2027 = vld [vmem:[%s2026] ss:$2 sm:$0x1f]
      %s2028 = scalar_lea.vmem [#allocation2], 45
      %v2029 = vld [vmem:[%s2028] ss:$2 sm:$0x1f]
      %s2030 = scalar_lea.vmem [#allocation2], 67
      %v2031 = vld [vmem:[%s2030] ss:$2 sm:$0x1f]
      %s2032 = scalar_lea.vmem [#allocation2], 89
      %v2033 = vld [vmem:[%s2032] ss:$2 sm:$0x1f]
      %v2035 = vrot.slane %v2027, 3
      %v2038 = vrot.slane %v2029, 6
      %v2041 = vrot.slane %v2031, 1
      %v2044 = vrot.slane %v2033, 4
      %v2046 = vsel %vm479, %v2025, %v2035
      %v2047 = vsel %vm471, %v2035, %v2038
      %v2048 = vsel %vm462, %v2047, %v2041
      %v2049 = vsel %vm454, %v2041, %v2044
      %s2050 = scalar_lea.vmem [#allocation2], 2
      %v2051 = vld [vmem:[%s2050] ss:$2 sm:$0x1f]
      %s2052 = scalar_lea.vmem [#allocation2], 24
      %v2053 = vld [vmem:[%s2052] ss:$2 sm:$0x1f]
      %s2054 = scalar_lea.vmem [#allocation2], 46
      %v2055 = vld [vmem:[%s2054] ss:$2 sm:$0x1f]
      %s2056 = scalar_lea.vmem [#allocation2], 68
      %v2057 = vld [vmem:[%s2056] ss:$2 sm:$0x1f]
      %s2058 = scalar_lea.vmem [#allocation2], 90
      %v2059 = vld [vmem:[%s2058] ss:$2 sm:$0x1f]
      %v2061 = vrot.slane %v2053, 3
      %v2064 = vrot.slane %v2055, 6
      %v2067 = vrot.slane %v2057, 1
      %v2070 = vrot.slane %v2059, 4
      %v2072 = vsel %vm479, %v2051, %v2061
      %v2073 = vsel %vm471, %v2061, %v2064
      %v2074 = vsel %vm462, %v2073, %v2067
      %v2075 = vsel %vm454, %v2067, %v2070
      %s2076 = scalar_lea.vmem [#allocation2], 11
      %v2077 = vld [vmem:[%s2076] ss:$2 sm:$0x1f]
      %s2078 = scalar_lea.vmem [#allocation2], 33
      %v2079 = vld [vmem:[%s2078] ss:$2 sm:$0x1f]
      %s2080 = scalar_lea.vmem [#allocation2], 55
      %v2081 = vld [vmem:[%s2080] ss:$2 sm:$0x1f]
      %s2082 = scalar_lea.vmem [#allocation2], 77
      %v2083 = vld [vmem:[%s2082] ss:$2 sm:$0x1f]
      %s2084 = scalar_lea.vmem [#allocation2], 99
      %v2085 = vld [vmem:[%s2084] ss:$2 sm:$0x1f]
      %v2087 = vrot.slane %v2079, 3
      %v2090 = vrot.slane %v2081, 6
      %v2093 = vrot.slane %v2083, 1
      %v2096 = vrot.slane %v2085, 4
      %v2098 = vsel %vm479, %v2077, %v2087
      %v2099 = vsel %vm471, %v2087, %v2090
      %v2100 = vsel %vm462, %v2099, %v2093
      %v2101 = vsel %vm454, %v2093, %v2096
      %s2102 = scalar_lea.vmem [#allocation2], 12
      %v2103 = vld [vmem:[%s2102] ss:$2 sm:$0x1f]
      %s2104 = scalar_lea.vmem [#allocation2], 34
      %v2105 = vld [vmem:[%s2104] ss:$2 sm:$0x1f]
      %s2106 = scalar_lea.vmem [#allocation2], 56
      %v2107 = vld [vmem:[%s2106] ss:$2 sm:$0x1f]
      %s2108 = scalar_lea.vmem [#allocation2], 78
      %v2109 = vld [vmem:[%s2108] ss:$2 sm:$0x1f]
      %s2110 = scalar_lea.vmem [#allocation2], 100
      %v2111 = vld [vmem:[%s2110] ss:$2 sm:$0x1f]
      %v2113 = vrot.slane %v2105, 3
      %v2116 = vrot.slane %v2107, 6
      %v2119 = vrot.slane %v2109, 1
      %v2122 = vrot.slane %v2111, 4
      %v2124 = vsel %vm479, %v2103, %v2113
      %v2125 = vsel %vm471, %v2113, %v2116
      %v2126 = vsel %vm462, %v2125, %v2119
      %v2127 = vsel %vm454, %v2119, %v2122
      %s2128 = scalar_lea.vmem [#allocation2], 13
      %v2129 = vld [vmem:[%s2128] ss:$2 sm:$0x1f]
      %s2130 = scalar_lea.vmem [#allocation2], 35
      %v2131 = vld [vmem:[%s2130] ss:$2 sm:$0x1f]
      %s2132 = scalar_lea.vmem [#allocation2], 57
      %v2133 = vld [vmem:[%s2132] ss:$2 sm:$0x1f]
      %s2134 = scalar_lea.vmem [#allocation2], 79
      %v2135 = vld [vmem:[%s2134] ss:$2 sm:$0x1f]
      %s2136 = scalar_lea.vmem [#allocation2], 101
      %v2137 = vld [vmem:[%s2136] ss:$2 sm:$0x1f]
      %v2139 = vrot.slane %v2131, 3
      %v2142 = vrot.slane %v2133, 6
      %v2145 = vrot.slane %v2135, 1
      %v2148 = vrot.slane %v2137, 4
      %v2150 = vsel %vm479, %v2129, %v2139
      %v2151 = vsel %vm471, %v2139, %v2142
      %v2152 = vsel %vm462, %v2151, %v2145
      %v2153 = vsel %vm454, %v2145, %v2148
      %s2154 = scalar_lea.vmem [#allocation2], 110
      %v2155 = vld [vmem:[%s2154] ss:$2 sm:$0x1f]
      %v2156 = vrot.slane %v2003, 3
      %v2158 = vrot.slane %v2005, 6
      %v2160 = vrot.slane %v2007, 1
      %v2163 = vrot.slane %v2155, 4
      %v2165 = vsel %vm479, %v2001, %v2156
      %v2166 = vsel %vm471, %v2156, %v2158
      %v2167 = vsel %vm462, %v2166, %v2160
      %v2168 = vsel %vm454, %v2160, %v2163
      %s2169 = scalar_lea.vmem [#allocation2], 111
      %v2170 = vld [vmem:[%s2169] ss:$2 sm:$0x1f]
      %v2171 = vrot.slane %v2029, 3
      %v2173 = vrot.slane %v2031, 6
      %v2175 = vrot.slane %v2033, 1
      %v2178 = vrot.slane %v2170, 4
      %v2180 = vsel %vm479, %v2027, %v2171
      %v2181 = vsel %vm471, %v2171, %v2173
      %v2182 = vsel %vm462, %v2181, %v2175
      %v2183 = vsel %vm454, %v2175, %v2178
      %s2184 = scalar_lea.vmem [#allocation2], 112
      %v2185 = vld [vmem:[%s2184] ss:$2 sm:$0x1f]
      %v2186 = vrot.slane %v2055, 3
      %v2188 = vrot.slane %v2057, 6
      %v2190 = vrot.slane %v2059, 1
      %v2193 = vrot.slane %v2185, 4
      %v2195 = vsel %vm479, %v2053, %v2186
      %v2196 = vsel %vm471, %v2186, %v2188
      %v2197 = vsel %vm462, %v2196, %v2190
      %v2198 = vsel %vm454, %v2190, %v2193
      %2202 = vrot.lane.b32.xlu0 %v2046, 16
      %v2203 = vpop.permute.xlu0 %2202
      %2204 = vrot.lane.b32.xlu0 %v2048, 16
      %v2205 = vpop.permute.xlu0 %2204
      %2206 = vrot.lane.b32.xlu0 %v2049, 16
      %v2207 = vpop.permute.xlu0 %2206
      %2208 = vrot.lane.b32.xlu0 %v2044, 16
      %v2209 = vpop.permute.xlu0 %2208
      %2217 = vrot.lane.b32.xlu0 %v2072, 32
      %v2218 = vpop.permute.xlu0 %2217
      %2219 = vrot.lane.b32.xlu0 %v2074, 32
      %v2220 = vpop.permute.xlu0 %2219
      %2221 = vrot.lane.b32.xlu0 %v2075, 32
      %v2222 = vpop.permute.xlu0 %2221
      %2223 = vrot.lane.b32.xlu0 %v2070, 32
      %v2224 = vpop.permute.xlu0 %2223
      %2232 = vrot.lane.b32.xlu0 %v2098, 48
      %v2233 = vpop.permute.xlu0 %2232
      %2234 = vrot.lane.b32.xlu0 %v2100, 48
      %v2235 = vpop.permute.xlu0 %2234
      %2236 = vrot.lane.b32.xlu0 %v2101, 48
      %v2237 = vpop.permute.xlu0 %2236
      %2238 = vrot.lane.b32.xlu0 %v2096, 48
      %v2239 = vpop.permute.xlu0 %2238
      %2247 = vrot.lane.b32.xlu0 %v2124, 64
      %v2248 = vpop.permute.xlu0 %2247
      %2249 = vrot.lane.b32.xlu0 %v2126, 64
      %v2250 = vpop.permute.xlu0 %2249
      %2251 = vrot.lane.b32.xlu0 %v2127, 64
      %v2252 = vpop.permute.xlu0 %2251
      %2253 = vrot.lane.b32.xlu0 %v2122, 64
      %v2254 = vpop.permute.xlu0 %2253
      %2262 = vrot.lane.b32.xlu0 %v2150, 80
      %v2263 = vpop.permute.xlu0 %2262
      %2264 = vrot.lane.b32.xlu0 %v2152, 80
      %v2265 = vpop.permute.xlu0 %2264
      %2266 = vrot.lane.b32.xlu0 %v2153, 80
      %v2267 = vpop.permute.xlu0 %2266
      %2268 = vrot.lane.b32.xlu0 %v2148, 80
      %v2269 = vpop.permute.xlu0 %2268
      %2277 = vrot.lane.b32.xlu0 %v2165, 96
      %v2278 = vpop.permute.xlu0 %2277
      %2279 = vrot.lane.b32.xlu0 %v2167, 96
      %v2280 = vpop.permute.xlu0 %2279
      %2281 = vrot.lane.b32.xlu0 %v2168, 96
      %v2282 = vpop.permute.xlu0 %2281
      %2283 = vrot.lane.b32.xlu0 %v2163, 96
      %v2284 = vpop.permute.xlu0 %2283
      %2292 = vrot.lane.b32.xlu0 %v2180, 112
      %v2293 = vpop.permute.xlu0 %2292
      %2294 = vrot.lane.b32.xlu0 %v2182, 112
      %v2295 = vpop.permute.xlu0 %2294
      %2296 = vrot.lane.b32.xlu0 %v2183, 112
      %v2297 = vpop.permute.xlu0 %2296
      %2298 = vrot.lane.b32.xlu0 %v2178, 112
      %v2299 = vpop.permute.xlu0 %2298
      %v2304 = vsel %vm1981, %v2020, %v2203
      %v2305 = vsel %vm1981, %v2022, %v2205
      %v2306 = vsel %vm1981, %v2023, %v2207
      %v2307 = vsel %vm1981, %v2018, %v2209
      %vm2308 = vcmask 261120
      %v2309 = vsel %vm2308, %v2304, %v2218
      %v2310 = vsel %vm2308, %v2305, %v2220
      %v2311 = vsel %vm2308, %v2306, %v2222
      %v2312 = vsel %vm2308, %v2307, %v2224
      %vm2313 = vcmask 392192
      %v2314 = vsel %vm2313, %v2309, %v2233
      %v2315 = vsel %vm2313, %v2310, %v2235
      %v2316 = vsel %vm2313, %v2311, %v2237
      %v2317 = vsel %vm2313, %v2312, %v2239
      %vm2318 = vcmask 523264
      %v2319 = vsel %vm2318, %v2314, %v2248
      %v2320 = vsel %vm2318, %v2315, %v2250
      %v2321 = vsel %vm2318, %v2316, %v2252
      %v2322 = vsel %vm2318, %v2317, %v2254
      %vm2323 = vcmask 654336
      %v2324 = vsel %vm2323, %v2319, %v2263
      %v2325 = vsel %vm2323, %v2320, %v2265
      %v2326 = vsel %vm2323, %v2321, %v2267
      %v2327 = vsel %vm2323, %v2322, %v2269
      %vm2328 = vcmask 785408
      %v2329 = vsel %vm2328, %v2324, %v2278
      %v2330 = vsel %vm2328, %v2325, %v2280
      %v2331 = vsel %vm2328, %v2326, %v2282
      %v2332 = vsel %vm2328, %v2327, %v2284
      %vm2333 = vcmask 916480
      %v2334 = vsel %vm2333, %v2329, %v2293
      %v2335 = vsel %vm2333, %v2330, %v2295
      %v2336 = vsel %vm2333, %v2331, %v2297
      %v2337 = vsel %vm2333, %v2332, %v2299
      %v2338 = vpack.c.bf16 %v2335, %v2334
      %v2339 = vpack.c.bf16 %v2197, %v2195
      %v2340 = vpack.c.bf16 %v2337, %v2336
      %v2341 = vpack.c.bf16 %v2193, %v2198
      %v2342 = vld [vmem:[%s3] sm:$0xf]
      %v2343 = vld [vmem:[%s3 + $0x4] sm:$0xf]
      %v2344 = vld [vmem:[%s3 + $0x8] sm:$0xf]
      %v2345 = vld [vmem:[%s3 + $0xc] sm:$0xf]
      %v2346 = vld [vmem:[%s3 + $0x10] sm:$0xf]
      %v2347 = vld [vmem:[%s3 + $0x14] sm:$0xf]
      %v2348 = vld [vmem:[%s3 + $0x18] sm:$0xf]
      %v2349 = vld [vmem:[%s3 + $0x1c] sm:$0xf]
      %v2350 = vld [vmem:[%s3 + $0x20] sm:$0xf]
      %v2351 = vld [vmem:[%s3 + $0x24] sm:$0xf]
      %v2352 = vld [vmem:[%s3 + $0x28] sm:$0xf]
      %v2353 = vld [vmem:[%s3 + $0x2c] sm:$0xf]
      %v2354 = vld [vmem:[%s3 + $0x30] sm:$0xf]
      %v2355 = vld [vmem:[%s3 + $0x34] sm:$0xf]
      %v2356 = vld [vmem:[%s3 + $0x38] sm:$0xf]
      %v2357 = vld [vmem:[%s3 + $0x3c] sm:$0xf]
      %v2358 = vld [vmem:[%s3 + $0x40] sm:$0xf]
      %v2359 = vld [vmem:[%s3 + $0x44] sm:$0xf]
      %v2360 = vld [vmem:[%s4] sm:$0x1]
      %v2362 = vperm.slane %v2360, 0
      %v2382 = vunpack.c.l.b16 %v2342
      %v2383 = vunpack.c.l.b16 %v2343
      %v2384 = vunpack.c.l.b16 %v2344
      %v2385 = vunpack.c.l.b16 %v2345
      %v2386 = vunpack.c.l.b16 %v2346
      %v2387 = vunpack.c.l.b16 %v2347
      %v2388 = vunpack.c.l.b16 %v2348
      %v2389 = vunpack.c.l.b16 %v2349
      %v2390 = vunpack.c.l.b16 %v2350
      %v2391 = vunpack.c.l.b16 %v2351
      %v2392 = vunpack.c.l.b16 %v2352
      %v2393 = vunpack.c.l.b16 %v2353
      %v2394 = vunpack.c.l.b16 %v2354
      %v2395 = vunpack.c.l.b16 %v2355
      %v2396 = vunpack.c.l.b16 %v2356
      %v2397 = vunpack.c.l.b16 %v2357
      %v2398 = vunpack.c.l.b16 %v2358
      %v2399 = vunpack.c.l.b16 %v2359
      %v2400 = vpack.c.b16 %v2383, %v2382
      %v2401 = vpack.c.b16 %v2385, %v2384
      %v2402 = vpack.c.b16 %v2387, %v2386
      %v2403 = vpack.c.b16 %v2389, %v2388
      %v2404 = vpack.c.b16 %v2391, %v2390
      %v2405 = vpack.c.b16 %v2393, %v2392
      %v2406 = vpack.c.b16 %v2395, %v2394
      %v2407 = vpack.c.b16 %v2397, %v2396
      %v2408 = vpack.c.b16 %v2399, %v2398
      %v2419 = vsel %vm1981, %v2339, 0
      %v2422 = vsel %vm1981, %v2341, 0
      %2424 = vmatpush.bf16.msra.mxu0 %v2407
      %2425 = vmatpush.bf16.msra.mxu0 %v2406
      %2426 = vmatpush.bf16.msra.mxu0 %v2405
      %2427 = vmatpush.bf16.msra.mxu0 %v2404
      %2428 = vmatpush.bf16.msra.mxu0 %v2403
      %2429 = vmatpush.bf16.msra.mxu0 %v2402
      %2430 = vmatpush.bf16.msra.mxu0 %v2401
      %2431 = vmatpush.bf16.msra.mxu0 %v2400
      %2432 = vmatmul.bf16.gmra.mxu0 %v2338
      %v2433 = vpop.f32.mrf.mxu0
      %v2434 = vadd.f32 %v2362, %v2433
      %v2435 = vpop.f32.mrf.mxu0
      %v2436 = vadd.f32 %v2362, %v2435
      %2437 = vmatmul.bf16.gmra.mxu0 %v2340
      %v2438 = vpop.f32.mrf.mxu0
      %v2439 = vadd.f32 %v2362, %v2438
      %v2440 = vpop.f32.mrf.mxu0
      %v2441 = vadd.f32 %v2362, %v2440
      %2442 = vdwg.mxu0
      %2443 = vmatpush.bf16.msra.mxu0 0
      %2444 = vmatpush.bf16.msra.mxu0 0
      %2445 = vmatpush.bf16.msra.mxu0 0
      %2446 = vmatpush.bf16.msra.mxu0 0
      %2447 = vmatpush.bf16.msra.mxu0 0
      %2448 = vmatpush.bf16.msra.mxu0 0
      %2449 = vmatpush.bf16.msra.mxu0 0
      %2450 = vmatpush.bf16.msra.mxu0 %v2408
      %2451 = vmatmul.bf16.gmra.mxu0 %v2419
      %v2452 = vpop.f32.mrf.mxu0
      %v2453 = vadd.f32 %v2434, %v2452
      %v2454 = vpop.f32.mrf.mxu0
      %v2455 = vadd.f32 %v2436, %v2454
      %2456 = vmatmul.bf16.gmra.mxu0 %v2422
      %v2457 = vpop.f32.mrf.mxu0
      %v2458 = vadd.f32 %v2439, %v2457
      %v2459 = vpop.f32.mrf.mxu0
      %v2460 = vadd.f32 %v2441, %v2459
      %2461 = vdwg.mxu0
      %v2462 = vmax.f32 %v2453, 0.0
      %v2463 = vmax.f32 %v2455, 0.0
      %v2464 = vmax.f32 %v2458, 0.0
      %v2465 = vmax.f32 %v2460, 0.0
      %2466 = vst.msk [vmem:[#allocation3] sm:$0xff] %vm2308, %v2462
      %2467 = vst.msk [vmem:[#allocation3 + $0x8] sm:$0xff] %vm2308, %v2463
      %2468 = vst.msk [vmem:[#allocation3 + $0x10] sm:$0xff] %vm2308, %v2464
      %vm2469 = vcmask 253952
      %2470 = vst.msk [vmem:[#allocation3 + $0x18] sm:$0x1] %vm2469, %v2465
      %v2471 = vld [vmem:[#allocation3] ss:$2 sm:$0x3]
      %s2472 = scalar_lea.vmem [#allocation3], 10
      %v2473 = vld [vmem:[%s2472] ss:$2 sm:$0x3]
      %v2475 = vrot.slane %v2473, 6
      %v2477 = vsel %vm471, %v2471, %v2475
      %s2478 = scalar_lea.vmem [#allocation3], 1
      %v2479 = vld [vmem:[%s2478] ss:$2 sm:$0x3]
      %s2480 = scalar_lea.vmem [#allocation3], 11
      %v2481 = vld [vmem:[%s2480] ss:$2 sm:$0x3]
      %v2483 = vrot.slane %v2481, 6
      %v2485 = vsel %vm471, %v2479, %v2483
      %s2486 = scalar_lea.vmem [#allocation3], 2
      %v2487 = vld [vmem:[%s2486] ss:$2 sm:$0x3]
      %s2488 = scalar_lea.vmem [#allocation3], 12
      %v2489 = vld [vmem:[%s2488] ss:$2 sm:$0x3]
      %v2491 = vrot.slane %v2489, 6
      %v2493 = vsel %vm471, %v2487, %v2491
      %s2494 = scalar_lea.vmem [#allocation3], 5
      %v2495 = vld [vmem:[%s2494] ss:$2 sm:$0x3]
      %s2496 = scalar_lea.vmem [#allocation3], 15
      %v2497 = vld [vmem:[%s2496] ss:$2 sm:$0x3]
      %v2499 = vrot.slane %v2497, 6
      %v2501 = vsel %vm471, %v2495, %v2499
      %s2502 = scalar_lea.vmem [#allocation3], 6
      %v2503 = vld [vmem:[%s2502] ss:$2 sm:$0x3]
      %s2504 = scalar_lea.vmem [#allocation3], 16
      %v2505 = vld [vmem:[%s2504] ss:$2 sm:$0x3]
      %v2507 = vrot.slane %v2505, 6
      %v2509 = vsel %vm471, %v2503, %v2507
      %s2510 = scalar_lea.vmem [#allocation3], 7
      %v2511 = vld [vmem:[%s2510] ss:$2 sm:$0x3]
      %s2512 = scalar_lea.vmem [#allocation3], 17
      %v2513 = vld [vmem:[%s2512] ss:$2 sm:$0x3]
      %v2515 = vrot.slane %v2513, 6
      %v2517 = vsel %vm471, %v2511, %v2515
      %s2518 = scalar_lea.vmem [#allocation3], 20
      %v2519 = vld [vmem:[%s2518] ss:$2 sm:$0x3]
      %v2521 = vrot.slane %v2519, 6
      %v2523 = vsel %vm471, %v2473, %v2521
      %s2524 = scalar_lea.vmem [#allocation3], 21
      %v2525 = vld [vmem:[%s2524] ss:$2 sm:$0x3]
      %v2527 = vrot.slane %v2525, 6
      %v2529 = vsel %vm471, %v2481, %v2527
      %s2530 = scalar_lea.vmem [#allocation3], 22
      %v2531 = vld [vmem:[%s2530] ss:$2 sm:$0x3]
      %v2533 = vrot.slane %v2531, 6
      %v2535 = vsel %vm471, %v2489, %v2533
      %2537 = vrot.lane.b32.xlu0 %v2485, 32
      %v2538 = vpop.permute.xlu0 %2537
      %2541 = vrot.lane.b32.xlu0 %v2493, 64
      %v2542 = vpop.permute.xlu0 %2541
      %2545 = vrot.lane.b32.xlu0 %v2501, 96
      %v2546 = vpop.permute.xlu0 %2545
      %2549 = vrot.lane.b32.xlu0 %v2517, 32
      %v2550 = vpop.permute.xlu0 %2549
      %2553 = vrot.lane.b32.xlu0 %v2523, 64
      %v2554 = vpop.permute.xlu0 %2553
      %2557 = vrot.lane.b32.xlu0 %v2529, 96
      %v2558 = vpop.permute.xlu0 %2557
      %v2560 = vsel %vm2308, %v2477, %v2538
      %v2561 = vsel %vm2318, %v2560, %v2542
      %v2562 = vsel %vm2328, %v2561, %v2546
      %v2563 = vsel %vm2308, %v2509, %v2550
      %v2564 = vsel %vm2318, %v2563, %v2554
      %v2565 = vsel %vm2328, %v2564, %v2558
      %v2566 = vpack.c.bf16 %v2562, %v2562
      %v2567 = vpack.c.bf16 %v2565, %v2565
      %v2568 = vpack.c.bf16 %v2535, %v2535
      %v2569 = vld [vmem:[%s5] sm:$0xf]
      %v2570 = vld [vmem:[%s5 + $0x4] sm:$0xf]
      %v2571 = vld [vmem:[%s5 + $0x8] sm:$0xf]
      %v2572 = vld [vmem:[%s5 + $0xc] sm:$0xf]
      %v2573 = vld [vmem:[%s5 + $0x10] sm:$0xf]
      %v2574 = vld [vmem:[%s5 + $0x14] sm:$0xf]
      %v2575 = vld [vmem:[%s5 + $0x18] sm:$0xf]
      %v2576 = vld [vmem:[%s5 + $0x1c] sm:$0xf]
      %v2577 = vld [vmem:[%s5 + $0x20] sm:$0xf]
      %v2578 = vld [vmem:[%s5 + $0x24] sm:$0xf]
      %v2579 = vld [vmem:[%s5 + $0x28] sm:$0xf]
      %v2580 = vld [vmem:[%s5 + $0x2c] sm:$0xf]
      %v2581 = vld [vmem:[%s5 + $0x30] sm:$0xf]
      %v2582 = vld [vmem:[%s5 + $0x34] sm:$0xf]
      %v2583 = vld [vmem:[%s5 + $0x38] sm:$0xf]
      %v2584 = vld [vmem:[%s5 + $0x3c] sm:$0xf]
      %v2585 = vld [vmem:[%s5 + $0x40] sm:$0xf]
      %v2586 = vld [vmem:[%s5 + $0x44] sm:$0xf]
      %v2587 = vld [vmem:[%s5 + $0x48] sm:$0xf]
      %v2588 = vld [vmem:[%s5 + $0x4c] sm:$0xf]
      %v2589 = vld [vmem:[%s5 + $0x50] sm:$0xf]
      %v2590 = vld [vmem:[%s5 + $0x54] sm:$0xf]
      %v2591 = vld [vmem:[%s5 + $0x58] sm:$0xf]
      %v2592 = vld [vmem:[%s5 + $0x5c] sm:$0xf]
      %v2593 = vld [vmem:[%s5 + $0x60] sm:$0xf]
      %v2594 = vld [vmem:[%s5 + $0x64] sm:$0xf]
      %v2595 = vld [vmem:[%s5 + $0x68] sm:$0xf]
      %v2596 = vld [vmem:[%s5 + $0x6c] sm:$0xf]
      %v2597 = vld [vmem:[%s5 + $0x70] sm:$0xf]
      %v2598 = vld [vmem:[%s5 + $0x74] sm:$0xf]
      %v2599 = vld [vmem:[%s5 + $0x78] sm:$0xf]
      %v2600 = vld [vmem:[%s5 + $0x7c] sm:$0xf]
      %v2601 = vld [vmem:[%s5 + $0x80] sm:$0xf]
      %v2602 = vld [vmem:[%s5 + $0x84] sm:$0xf]
      %v2603 = vld [vmem:[%s5 + $0x88] sm:$0xf]
      %v2604 = vld [vmem:[%s5 + $0x8c] sm:$0xf]
      %v2605 = vld [vmem:[%s6] sm:$0x1]
      %v2607 = vperm.slane %v2605, 0
      %v2645 = vunpack.c.l.b16 %v2569
      %v2646 = vunpack.c.l.b16 %v2570
      %v2647 = vunpack.c.l.b16 %v2571
      %v2648 = vunpack.c.l.b16 %v2572
      %v2649 = vunpack.c.l.b16 %v2573
      %v2650 = vunpack.c.l.b16 %v2574
      %v2651 = vunpack.c.l.b16 %v2575
      %v2652 = vunpack.c.l.b16 %v2576
      %v2653 = vunpack.c.l.b16 %v2577
      %v2654 = vunpack.c.l.b16 %v2578
      %v2655 = vunpack.c.l.b16 %v2579
      %v2656 = vunpack.c.l.b16 %v2580
      %v2657 = vunpack.c.l.b16 %v2581
      %v2658 = vunpack.c.l.b16 %v2582
      %v2659 = vunpack.c.l.b16 %v2583
      %v2660 = vunpack.c.l.b16 %v2584
      %v2661 = vunpack.c.l.b16 %v2585
      %v2662 = vunpack.c.l.b16 %v2586
      %v2663 = vunpack.c.l.b16 %v2587
      %v2664 = vunpack.c.l.b16 %v2588
      %v2665 = vunpack.c.l.b16 %v2589
      %v2666 = vunpack.c.l.b16 %v2590
      %v2667 = vunpack.c.l.b16 %v2591
      %v2668 = vunpack.c.l.b16 %v2592
      %v2669 = vunpack.c.l.b16 %v2593
      %v2670 = vunpack.c.l.b16 %v2594
      %v2671 = vunpack.c.l.b16 %v2595
      %v2672 = vunpack.c.l.b16 %v2596
      %v2673 = vunpack.c.l.b16 %v2597
      %v2674 = vunpack.c.l.b16 %v2598
      %v2675 = vunpack.c.l.b16 %v2599
      %v2676 = vunpack.c.l.b16 %v2600
      %v2677 = vunpack.c.l.b16 %v2601
      %v2678 = vunpack.c.l.b16 %v2602
      %v2679 = vunpack.c.l.b16 %v2603
      %v2680 = vunpack.c.l.b16 %v2604
      %v2681 = vpack.c.b16 %v2646, %v2645
      %v2682 = vpack.c.b16 %v2648, %v2647
      %v2683 = vpack.c.b16 %v2650, %v2649
      %v2684 = vpack.c.b16 %v2652, %v2651
      %v2685 = vpack.c.b16 %v2654, %v2653
      %v2686 = vpack.c.b16 %v2656, %v2655
      %v2687 = vpack.c.b16 %v2658, %v2657
      %v2688 = vpack.c.b16 %v2660, %v2659
      %v2689 = vpack.c.b16 %v2662, %v2661
      %v2690 = vpack.c.b16 %v2664, %v2663
      %v2691 = vpack.c.b16 %v2666, %v2665
      %v2692 = vpack.c.b16 %v2668, %v2667
      %v2693 = vpack.c.b16 %v2670, %v2669
      %v2694 = vpack.c.b16 %v2672, %v2671
      %v2695 = vpack.c.b16 %v2674, %v2673
      %v2696 = vpack.c.b16 %v2676, %v2675
      %v2697 = vpack.c.b16 %v2678, %v2677
      %v2698 = vpack.c.b16 %v2680, %v2679
      %v2718 = vsel %vm2308, %v2568, 0
      %2720 = vmatpush.bf16.msra.mxu0 %v2688
      %2721 = vmatpush.bf16.msra.mxu0 %v2687
      %2722 = vmatpush.bf16.msra.mxu0 %v2686
      %2723 = vmatpush.bf16.msra.mxu0 %v2685
      %2724 = vmatpush.bf16.msra.mxu0 %v2684
      %2725 = vmatpush.bf16.msra.mxu0 %v2683
      %2726 = vmatpush.bf16.msra.mxu0 %v2682
      %2727 = vmatpush.bf16.msra.mxu0 %v2681
      %2728 = vmatmul.bf16.gmra.mxu0 %v2566
      %v2729 = vpop.f32.mrf.mxu0
      %v2730 = vadd.f32 %v2607, %v2729
      %v2731 = vpop.f32.mrf.mxu0
      %2732 = vdwg.mxu0
      %2733 = vmatpush.bf16.msra.mxu0 %v2696
      %2734 = vmatpush.bf16.msra.mxu0 %v2695
      %2735 = vmatpush.bf16.msra.mxu0 %v2694
      %2736 = vmatpush.bf16.msra.mxu0 %v2693
      %2737 = vmatpush.bf16.msra.mxu0 %v2692
      %2738 = vmatpush.bf16.msra.mxu0 %v2691
      %2739 = vmatpush.bf16.msra.mxu0 %v2690
      %2740 = vmatpush.bf16.msra.mxu0 %v2689
      %2741 = vmatmul.bf16.gmra.mxu0 %v2567
      %v2742 = vpop.f32.mrf.mxu0
      %v2743 = vadd.f32 %v2730, %v2742
      %v2744 = vpop.f32.mrf.mxu0
      %2745 = vdwg.mxu0
      %2746 = vmatpush.bf16.msra.mxu0 0
      %2747 = vmatpush.bf16.msra.mxu0 0
      %2748 = vmatpush.bf16.msra.mxu0 0
      %2749 = vmatpush.bf16.msra.mxu0 0
      %2750 = vmatpush.bf16.msra.mxu0 0
      %2751 = vmatpush.bf16.msra.mxu0 0
      %2752 = vmatpush.bf16.msra.mxu0 %v2698
      %2753 = vmatpush.bf16.msra.mxu0 %v2697
      %2754 = vmatmul.bf16.gmra.mxu0 %v2718
      %v2755 = vpop.f32.mrf.mxu0
      %v2756 = vadd.f32 %v2743, %v2755
      %v2757 = vpop.f32.mrf.mxu0
      %2758 = vdwg.mxu0
      %v2759 = vmax.f32 %v2756, 0.0
      %vm2760 = vcmask 519168
      %2761 = vst.msk [vmem:[#allocation4] sm:$0xf] %vm2760, %v2759
      %v2762 = vld [vmem:[#allocation4] sm:$0x1]
      %v2763 = vld [vmem:[#allocation4 + $0x1] sm:$0x1]
      %v2764 = vld [vmem:[#allocation4 + $0x2] sm:$0x1]
      %v2765 = vld [vmem:[#allocation4 + $0x3] sm:$0x1]
      %2767 = vrot.lane.b32.xlu0 %v2763, 64
      %v2768 = vpop.permute.xlu0 %2767
      %2771 = vrot.lane.b32.xlu0 %v2765, 64
      %v2772 = vpop.permute.xlu0 %2771
      %v2774 = vsel %vm2318, %v2762, %v2768
      %v2775 = vsel %vm2318, %v2764, %v2772
      %v2776 = vpack.c.bf16 %v2774, %v2774
      %v2777 = vpack.c.bf16 %v2775, %v2775
      %v2778 = vld [vmem:[%s7] sm:$0xf]
      %v2779 = vld [vmem:[%s7 + $0x4] sm:$0xf]
      %v2780 = vld [vmem:[%s7 + $0x8] sm:$0xf]
      %v2781 = vld [vmem:[%s7 + $0xc] sm:$0xf]
      %v2782 = vld [vmem:[%s7 + $0x10] sm:$0xf]
      %v2783 = vld [vmem:[%s7 + $0x14] sm:$0xf]
      %v2784 = vld [vmem:[%s7 + $0x18] sm:$0xf]
      %v2785 = vld [vmem:[%s7 + $0x1c] sm:$0xf]
      %v2786 = vld [vmem:[%s7 + $0x20] sm:$0xf]
      %v2787 = vld [vmem:[%s7 + $0x24] sm:$0xf]
      %v2788 = vld [vmem:[%s7 + $0x28] sm:$0xf]
      %v2789 = vld [vmem:[%s7 + $0x2c] sm:$0xf]
      %v2790 = vld [vmem:[%s7 + $0x30] sm:$0xf]
      %v2791 = vld [vmem:[%s7 + $0x34] sm:$0xf]
      %v2792 = vld [vmem:[%s7 + $0x38] sm:$0xf]
      %v2793 = vld [vmem:[%s7 + $0x3c] sm:$0xf]
      %v2794 = vld [vmem:[%s7 + $0x40] sm:$0xf]
      %v2795 = vld [vmem:[%s7 + $0x44] sm:$0xf]
      %v2796 = vld [vmem:[%s7 + $0x48] sm:$0xf]
      %v2797 = vld [vmem:[%s7 + $0x4c] sm:$0xf]
      %v2798 = vld [vmem:[%s7 + $0x50] sm:$0xf]
      %v2799 = vld [vmem:[%s7 + $0x54] sm:$0xf]
      %v2800 = vld [vmem:[%s7 + $0x58] sm:$0xf]
      %v2801 = vld [vmem:[%s7 + $0x5c] sm:$0xf]
      %v2802 = vld [vmem:[%s7 + $0x60] sm:$0xf]
      %v2803 = vld [vmem:[%s7 + $0x64] sm:$0xf]
      %v2804 = vld [vmem:[%s7 + $0x68] sm:$0xf]
      %v2805 = vld [vmem:[%s7 + $0x6c] sm:$0xf]
      %v2806 = vld [vmem:[%s7 + $0x70] sm:$0xf]
      %v2807 = vld [vmem:[%s7 + $0x74] sm:$0xf]
      %v2808 = vld [vmem:[%s7 + $0x78] sm:$0xf]
      %v2809 = vld [vmem:[%s7 + $0x7c] sm:$0xf]
      %v2810 = vld [vmem:[%s8] sm:$0x1]
      %v2843 = vunpack.c.l.b16 %v2778
      %v2844 = vunpack.c.l.b16 %v2779
      %v2845 = vunpack.c.l.b16 %v2780
      %v2846 = vunpack.c.l.b16 %v2781
      %v2847 = vunpack.c.l.b16 %v2782
      %v2848 = vunpack.c.l.b16 %v2783
      %v2849 = vunpack.c.l.b16 %v2784
      %v2850 = vunpack.c.l.b16 %v2785
      %v2851 = vunpack.c.l.b16 %v2786
      %v2852 = vunpack.c.l.b16 %v2787
      %v2853 = vunpack.c.l.b16 %v2788
      %v2854 = vunpack.c.l.b16 %v2789
      %v2855 = vunpack.c.l.b16 %v2790
      %v2856 = vunpack.c.l.b16 %v2791
      %v2857 = vunpack.c.l.b16 %v2792
      %v2858 = vunpack.c.l.b16 %v2793
      %v2859 = vunpack.c.l.b16 %v2794
      %v2860 = vunpack.c.l.b16 %v2795
      %v2861 = vunpack.c.l.b16 %v2796
      %v2862 = vunpack.c.l.b16 %v2797
      %v2863 = vunpack.c.l.b16 %v2798
      %v2864 = vunpack.c.l.b16 %v2799
      %v2865 = vunpack.c.l.b16 %v2800
      %v2866 = vunpack.c.l.b16 %v2801
      %v2867 = vunpack.c.l.b16 %v2802
      %v2868 = vunpack.c.l.b16 %v2803
      %v2869 = vunpack.c.l.b16 %v2804
      %v2870 = vunpack.c.l.b16 %v2805
      %v2871 = vunpack.c.l.b16 %v2806
      %v2872 = vunpack.c.l.b16 %v2807
      %v2873 = vunpack.c.l.b16 %v2808
      %v2874 = vunpack.c.l.b16 %v2809
      %v2875 = vpack.c.b16 %v2844, %v2843
      %v2876 = vpack.c.b16 %v2846, %v2845
      %v2877 = vpack.c.b16 %v2848, %v2847
      %v2878 = vpack.c.b16 %v2850, %v2849
      %v2879 = vpack.c.b16 %v2852, %v2851
      %v2880 = vpack.c.b16 %v2854, %v2853
      %v2881 = vpack.c.b16 %v2856, %v2855
      %v2882 = vpack.c.b16 %v2858, %v2857
      %v2883 = vpack.c.b16 %v2860, %v2859
      %v2884 = vpack.c.b16 %v2862, %v2861
      %v2885 = vpack.c.b16 %v2864, %v2863
      %v2886 = vpack.c.b16 %v2866, %v2865
      %v2887 = vpack.c.b16 %v2868, %v2867
      %v2888 = vpack.c.b16 %v2870, %v2869
      %v2889 = vpack.c.b16 %v2872, %v2871
      %v2890 = vpack.c.b16 %v2874, %v2873
      %2907 = vmatpush.bf16.msra.mxu0 %v2882
      %2908 = vmatpush.bf16.msra.mxu0 %v2881
      %2909 = vmatpush.bf16.msra.mxu0 %v2880
      %2910 = vmatpush.bf16.msra.mxu0 %v2879
      %2911 = vmatpush.bf16.msra.mxu0 %v2878
      %2912 = vmatpush.bf16.msra.mxu0 %v2877
      %2913 = vmatpush.bf16.msra.mxu0 %v2876
      %2914 = vmatpush.bf16.msra.mxu0 %v2875
      %2915 = vmatmul.bf16.gmra.mxu0 %v2776
      %v2916 = vpop.f32.mrf.mxu0
      %v2917 = vadd.f32 %v2810, %v2916
      %v2918 = vpop.f32.mrf.mxu0
      %2919 = vdwg.mxu0
      %2920 = vmatpush.bf16.msra.mxu0 %v2890
      %2921 = vmatpush.bf16.msra.mxu0 %v2889
      %2922 = vmatpush.bf16.msra.mxu0 %v2888
      %2923 = vmatpush.bf16.msra.mxu0 %v2887
      %2924 = vmatpush.bf16.msra.mxu0 %v2886
      %2925 = vmatpush.bf16.msra.mxu0 %v2885
      %2926 = vmatpush.bf16.msra.mxu0 %v2884
      %2927 = vmatpush.bf16.msra.mxu0 %v2883
      %2928 = vmatmul.bf16.gmra.mxu0 %v2777
      %v2929 = vpop.f32.mrf.mxu0
      %v2930 = vadd.f32 %v2917, %v2929
      %v2931 = vpop.f32.mrf.mxu0
      %2932 = vdwg.mxu0
      %v2933 = vmax.f32 %v2930, 0.0
      %v2934 = vpack.c.bf16 %v2933, %v2933
      %v2935 = vld [vmem:[%s9] sm:$0xf]
      %v2936 = vld [vmem:[%s9 + $0x4] sm:$0xf]
      %v2937 = vld [vmem:[%s9 + $0x8] sm:$0xf]
      %v2938 = vld [vmem:[%s9 + $0xc] sm:$0xf]
      %v2939 = vld [vmem:[%s9 + $0x10] sm:$0xf]
      %v2940 = vld [vmem:[%s9 + $0x14] sm:$0xf]
      %v2941 = vld [vmem:[%s9 + $0x18] sm:$0xf]
      %v2942 = vld [vmem:[%s9 + $0x1c] sm:$0xf]
      %v2943 = vld [vmem:[%s9 + $0x20] sm:$0xf]
      %v2944 = vld [vmem:[%s9 + $0x24] sm:$0xf]
      %v2945 = vld [vmem:[%s9 + $0x28] sm:$0xf]
      %v2946 = vld [vmem:[%s9 + $0x2c] sm:$0xf]
      %v2947 = vld [vmem:[%s9 + $0x30] sm:$0xf]
      %v2948 = vld [vmem:[%s9 + $0x34] sm:$0xf]
      %v2949 = vld [vmem:[%s9 + $0x38] sm:$0xf]
      %v2950 = vld [vmem:[%s9 + $0x3c] sm:$0xf]
      %v2951 = vld [vmem:[%s10] sm:$0x1]
      %v2968 = vunpack.c.l.b16 %v2935
      %v2969 = vunpack.c.l.b16 %v2936
      %v2970 = vunpack.c.l.b16 %v2937
      %v2971 = vunpack.c.l.b16 %v2938
      %v2972 = vunpack.c.l.b16 %v2939
      %v2973 = vunpack.c.l.b16 %v2940
      %v2974 = vunpack.c.l.b16 %v2941
      %v2975 = vunpack.c.l.b16 %v2942
      %v2976 = vunpack.c.l.b16 %v2943
      %v2977 = vunpack.c.l.b16 %v2944
      %v2978 = vunpack.c.l.b16 %v2945
      %v2979 = vunpack.c.l.b16 %v2946
      %v2980 = vunpack.c.l.b16 %v2947
      %v2981 = vunpack.c.l.b16 %v2948
      %v2982 = vunpack.c.l.b16 %v2949
      %v2983 = vunpack.c.l.b16 %v2950
      %v2984 = vpack.c.b16 %v2969, %v2968
      %v2985 = vpack.c.b16 %v2971, %v2970
      %v2986 = vpack.c.b16 %v2973, %v2972
      %v2987 = vpack.c.b16 %v2975, %v2974
      %v2988 = vpack.c.b16 %v2977, %v2976
      %v2989 = vpack.c.b16 %v2979, %v2978
      %v2990 = vpack.c.b16 %v2981, %v2980
      %v2991 = vpack.c.b16 %v2983, %v2982
      %3000 = vmatpush.bf16.msra.mxu0 %v2991
      %3001 = vmatpush.bf16.msra.mxu0 %v2990
      %3002 = vmatpush.bf16.msra.mxu0 %v2989
      %3003 = vmatpush.bf16.msra.mxu0 %v2988
      %3004 = vmatpush.bf16.msra.mxu0 %v2987
      %3005 = vmatpush.bf16.msra.mxu0 %v2986
      %3006 = vmatpush.bf16.msra.mxu0 %v2985
      %3007 = vmatpush.bf16.msra.mxu0 %v2984
      %3008 = vmatmul.bf16.gmra.mxu0 %v2934
      %v3009 = vpop.f32.mrf.mxu0
      %v3010 = vadd.f32 %v2951, %v3009
      %v3011 = vpop.f32.mrf.mxu0
      %3012 = vdwg.mxu0
      %v3013 = vlaneseq
      %v3014 = vand.u32 %v3013, 127
      %v3015 = vsub.f32 0.0, %v3010
      %v3016 = vmul.f32 %v3015, 1.442695
      %v3017 = vpow.pop %v3016
      %v3018 = vadd.f32 %v3017, 1.0
      %v3019 = vrcp.pop %v3018
      %v3020 = vmul.f32 %v3018, %v3019
      %v3021 = vsub.f32 1.0, %v3020
      %v3022 = vmul.f32 %v3019, %v3021
      %v3023 = vadd.f32 %v3019, %v3022
      %vm3024 = vweird.f32 %v3018
      %vm3025 = vweird.f32 %v3019
      %vm3026 = vmor %vm3024, %vm3025
      %v3027 = vsel %vm3026, %v3019, %v3023
      %v3028 = vand.u32 2147483647, %v3018
      %vm3029 = vcmp.eq.f32.partialorder %v3028, 8.507059e+37
      %v3030 = vand.u32 %v3018, 2147483648
      %v3031 = vor.u32 1.1754944e-38, %v3030
      %v3032 = vsel %vm3029, %v3031, %v3027
      %v3033 = vmul.f32 1.0, %v3032
      %vm3034 = vcmp.lt.s32.totalorder %v3014, 2
      %v3035 = vsel %vm3034, %v3033, %v3010
      %vm3036 = vcmask 40960
      %3037 = vst.msk [vmem:[%s382] sm:$0x1] %vm3036, %v3035
      %p3038 = scmp.lt.s32.totalorder %s22, 1
      %s3039 = scalar_select %p3038, %s22, 1
      %s3040 = scalar_lea.vmem %s11, %s3039
      // Predicated region
      $region65: #{pnet_pallas.1} parent=63 // pred_check
        %p3041 = pneg %p276
      $region66: #{pnet_pallas.1} parent=63 // pred_check_branch
        %3043 = sbr.rel (%p3041) target = $region68
      $region67: #{pnet_pallas.1} parent=63 // pred_region
        _
      $region68: #{pnet_pallas.1} parent=63 // pred_fallthru
        _
    $region64: #{pnet_pallas.1} parent=5 // pred_fallthru
      _
    %p3044 = scmp.le.s32.totalorder 2, %s17
    // Predicated region
    $region69: #{pnet_pallas.1} parent=5 // pred_check
      %p3045 = pneg %p3044
    $region70: #{pnet_pallas.1} parent=5 // pred_check_branch
      %3047 = sbr.rel (%p3045) target = $region72
    $region71: #{pnet_pallas.1} parent=5 // pred_region
      %s3048 = ssub.s32 %s17, 2
      // Predicated region
      $region73: #{pnet_pallas.1} parent=71 // pred_check
        %p3049 = pneg %p282
      $region74: #{pnet_pallas.1} parent=71 // pred_check_branch
        %3051 = sbr.rel (%p3049) target = $region76
      $region75: #{pnet_pallas.1} parent=71 // pred_region
        %p3052 = scmp.lt.s32.totalorder %s23, 1
        %s3053 = scalar_select %p3052, %s23, 1
        %s3054 = scalar_lea.vmem %s11, %s3053
      $region76: #{pnet_pallas.1} parent=71 // pred_fallthru
        _
    $region72: #{pnet_pallas.1} parent=5 // pred_fallthru
      _
  $region6: #{pnet_pallas.1} parent=0 // loop_footer
    %s21 = sadd.s32 1, %s17
  $region7: #{pnet_pallas.1} parent=0 // loop_footer_branch
    %16 = sbr.rel target = $region3
  $region8: #{pnet_pallas.1} parent=0 // loop_exit
    _

</llo_original>
